<compile_context>
chip_gen: v7x
topology: tpu7x:2x2x1
jax: 0.10.0
libtpu: 0.0.40
codegen_flags: <defaults>
</compile_context>

<pallas_src>
import jax
import jax.numpy as jnp
from jax.experimental import pallas as pl
from jax.experimental.pallas import tpu as pltpu


# ---------------------------------------------------------------------------
# In-kernel helpers (all shapes / offsets are static Python ints)
# ---------------------------------------------------------------------------

def _write_reflect_zero_pad(dst_ref, get_row, hs, ws):
    """Fill dst_ref (C, (hs+4)*(ws+4)) with the flattened ReflectionPad2d(1)
    followed by zero-pad(1) of a (C, hs, ws) source whose rows get_row(r)
    returns as (C, ws) values."""
    wp = ws + 4
    dst_ref[...] = jnp.zeros_like(dst_ref)            # zero ring (rows/cols 0 & last)
    for r in range(1, hs + 3):                         # rows 0 and hs+3 stay zero
        k = r - 2
        sr = 1 if k < 0 else (hs - 2 if k >= hs else k)   # ReflectionPad2d(1) row map
        row = get_row(sr)                                  # (C, ws)
        base = r * wp
        dst_ref[:, base + 2: base + 2 + ws] = row                        # interior
        dst_ref[:, base + 1: base + 2] = row[:, 1:2]                     # left reflect
        dst_ref[:, base + ws + 2: base + ws + 3] = row[:, ws - 2: ws - 1]  # right reflect


def _conv3x3_shifted_matmuls(w_ref, pad_ref, wp, span):
    """3x3 'valid' conv over the flattened padded image in pad_ref.

    w_ref:   (9, Cout, Cin) f32, tap-major (t = di*3 + dj).
    pad_ref: (Cin, hp*wp) f32 VMEM scratch.
    Returns  (Cout, span) f32; 2 garbage lanes per row seam, masked out later.
    """
    acc = None
    for di in range(3):
        for dj in range(3):
            slab = pad_ref[:, di * wp + dj: di * wp + dj + span]
            part = jnp.dot(w_ref[di * 3 + dj], slab,
                           preferred_element_type=jnp.float32)
            acc = part if acc is None else acc + part
    return acc


def _instance_norm_relu(y, mask, count):
    """InstanceNorm2d(affine=False, eps=1e-5) + ReLU over the valid lanes."""
    inv_n = 1.0 / float(count)
    s = jnp.sum(y * mask, axis=-1, keepdims=True) * inv_n          # mean
    q = jnp.sum(y * y * mask, axis=-1, keepdims=True) * inv_n      # E[y^2]
    var = jnp.maximum(q - s * s, 0.0)                              # one-pass, clamped
    return jnp.maximum((y - s) * jax.lax.rsqrt(var + 1e-5), 0.0)


# ---------------------------------------------------------------------------
# Forward pass
# ---------------------------------------------------------------------------

def down_conv_forward(x, params):
    """DownConv.forward: MaxPool2d(2) -> (ReflectionPad(1) -> Conv3x3(pad=1)
    -> InstanceNorm2d -> ReLU) x 2.   x is NCHW float32."""
    n, cin, h, w = x.shape
    cout = params["w1"].shape[0]
    assert h % 2 == 0 and w % 2 == 0 and h >= 8 and w >= 8

    # --- MaxPool2d(2): one fused XLA pass (the reshape is free) ---
    hpool, wpool = h // 2, w // 2
    xp = x.reshape(n, cin, hpool, 2, wpool, 2).max(axis=(3, 5))
    xp_flat = xp.reshape(n, cin, hpool * wpool).astype(jnp.float32)

    # --- static geometry of the two fused conv blocks ---
    hp1, wp1 = hpool + 4, wpool + 4          # reflect(1)+zero(1) padded grid 1
    ho1, wo1 = hpool + 2, wpool + 2          # block-1 output spatial
    span1 = (ho1 - 1) * wp1 + wo1
    hp2, wp2 = ho1 + 4, wo1 + 4              # padded grid 2
    ho2, wo2 = ho1 + 2, wo1 + 2              # block-2 output spatial
    span2 = (ho2 - 1) * wp2 + wo2
    out_w = ho2 * wp2                        # lane-dense kernel output width

    # tap-major f32 weights: (Cout, Cin, 3, 3) -> (9, Cout, Cin)
    w1 = params["w1"].transpose(2, 3, 0, 1).reshape(9, cout, cin).astype(jnp.float32)
    w2 = params["w2"].transpose(2, 3, 0, 1).reshape(9, cout, cout).astype(jnp.float32)
    # conv biases (params["b1"], params["b2"]) cancel exactly under
    # InstanceNorm(affine=False), so the kernel never loads them.

    # validity masks over the flattened spans (1.0 on real output lanes)
    mask1 = (jnp.arange(span1) % wp1 < wo1).astype(jnp.float32).reshape(1, span1)
    mask2 = (jnp.arange(span2) % wp2 < wo2).astype(jnp.float32).reshape(1, span2)

    def kernel(x_ref, w1_ref, w2_ref, m1_ref, m2_ref, o_ref, p1_ref, p2_ref):
        # ---- block 1: pad pooled sample -> conv -> IN -> ReLU (all in VMEM) ----
        _write_reflect_zero_pad(
            p1_ref, lambda sr: x_ref[0, :, sr * wpool:(sr + 1) * wpool],
            hpool, wpool)
        y1 = _conv3x3_shifted_matmuls(w1_ref, p1_ref, wp1, span1)
        y1 = _instance_norm_relu(y1, m1_ref[...], ho1 * wo1)

        # ---- block 2: re-pad block-1 output (never leaves VMEM) ----
        _write_reflect_zero_pad(
            p2_ref, lambda sr: y1[:, sr * wp1: sr * wp1 + wo1],
            ho1, wo1)
        y2 = _conv3x3_shifted_matmuls(w2_ref, p2_ref, wp2, span2)
        y2 = _instance_norm_relu(y2, m2_ref[...], ho2 * wo2)

        # ---- lane-dense store: flattened spatial on the minor axis ----
        o_ref[0, :, 0:span2] = y2.astype(o_ref.dtype)
        if span2 < out_w:
            o_ref[0, :, span2:out_w] = jnp.zeros((cout, out_w - span2), o_ref.dtype)

    out = pl.pallas_call(
        kernel,
        out_shape=jax.ShapeDtypeStruct((n, cout, out_w), jnp.float32),
        grid_spec=pltpu.PrefetchScalarGridSpec(
            num_scalar_prefetch=0,
            grid=(n,),
            in_specs=[
                pl.BlockSpec((1, cin, hpool * wpool), lambda b: (b, 0, 0)),
                pl.BlockSpec((9, cout, cin), lambda b: (0, 0, 0)),
                pl.BlockSpec((9, cout, cout), lambda b: (0, 0, 0)),
                pl.BlockSpec((1, span1), lambda b: (0, 0)),
                pl.BlockSpec((1, span2), lambda b: (0, 0)),
            ],
            out_specs=pl.BlockSpec((1, cout, out_w), lambda b: (b, 0, 0)),
            scratch_shapes=[
                pltpu.VMEM((cin, hp1 * wp1), jnp.float32),
                pltpu.VMEM((cout, hp2 * wp2), jnp.float32),
            ],
        ),
        compiler_params=pltpu.CompilerParams(
            dimension_semantics=("parallel",)),
    )(xp_flat, w1, w2, mask1, mask2)

    # free reshape + cheap column slice drops the 2 seam lanes per row -> NCHW
    return out.reshape(n, cout, ho2, wp2)[:, :, :, :wo2]


# ---------------------------------------------------------------------------
# Pure-JAX reference (numerical self-check only) and deterministic init
# ---------------------------------------------------------------------------

def _ref_forward(x, params):
    xp = jax.lax.reduce_window(x, -jnp.inf, jax.lax.max,
                               (1, 1, 2, 2), (1, 1, 2, 2), "VALID")

    def block(h, wgt, b):
        h = jnp.pad(h, ((0, 0), (0, 0), (1, 1), (1, 1)), mode="reflect")
        h = jax.lax.conv_general_dilated(
            h, wgt, (1, 1), ((1, 1), (1, 1)),
            dimension_numbers=("NCHW", "OIHW", "NCHW"))
        h = h + b.reshape(1, -1, 1, 1)
        mu = jnp.mean(h, axis=(2, 3), keepdims=True)
        var = jnp.mean((h - mu) ** 2, axis=(2, 3), keepdims=True)
        return jnp.maximum((h - mu) * jax.lax.rsqrt(var + 1e-5), 0.0)

    xp = block(xp, params["w1"], params["b1"])
    return block(xp, params["w2"], params["b2"])


def init_params(key, in_ch, out_ch):
    k1, k2, k3, k4 = jax.random.split(key, 4)
    s1 = 1.0 / (in_ch * 9) ** 0.5
    s2 = 1.0 / (out_ch * 9) ** 0.5
    return {
        "w1": jax.random.uniform(k1, (out_ch, in_ch, 3, 3), jnp.float32, -s1, s1),
        "b1": jax.random.uniform(k2, (out_ch,), jnp.float32, -s1, s1),
        "w2": jax.random.uniform(k3, (out_ch, out_ch, 3, 3), jnp.float32, -s2, s2),
        "b2": jax.random.uniform(k4, (out_ch,), jnp.float32, -s2, s2),
    }


if __name__ == "__main__":
    key = jax.random.PRNGKey(0)
    kx, kp = jax.random.split(key)

    batch, in_ch, out_ch, hw = 2, 4, 8, 16
    x = jax.random.normal(kx, (batch, in_ch, hw, hw), jnp.float32)   # NCHW
    params = init_params(kp, in_ch, out_ch)

    y = jax.jit(down_conv_forward)(x, params)
    y = jax.block_until_ready(y)

    # MaxPool 16->8 ; each conv block grows spatial by 2 -> 12x12, out_ch channels
    assert y.shape == (batch, out_ch, hw // 2 + 4, hw // 2 + 4), y.shape
    assert bool(jnp.all(jnp.isfinite(y)))

    # numerical self-check vs pure-JAX reference (f32 everywhere -> tight tol)
    y_ref = _ref_forward(x, params)
    err = float(jnp.max(jnp.abs(y - y_ref)))
    assert err < 1e-2, f"max abs err vs reference: {err}"

    print("KERNEL_OK")
</pallas_src>

<mosaic_0001>
module attributes {stable_mosaic.version = 11 : i64} {
  func.func @kernel(%arg0: i32, %arg1: memref<1x4x64xf32, #tpu.memory_space<vmem>>, %arg2: memref<9x8x4xf32, #tpu.memory_space<vmem>>, %arg3: memref<9x8x8xf32, #tpu.memory_space<vmem>>, %arg4: memref<1x118xf32, #tpu.memory_space<vmem>>, %arg5: memref<1x166xf32, #tpu.memory_space<vmem>>, %arg6: memref<1x8x168xf32, #tpu.memory_space<vmem>>, %arg7: memref<4x144xf32, #tpu.memory_space<vmem>>, %arg8: memref<8x196xf32, #tpu.memory_space<vmem>>) attributes {dimension_semantics = [#tpu.dimension_semantics<parallel>], iteration_bounds = array<i64: 2>, scalar_prefetch = 0 : i64, scratch_operands = 2 : i64, tpu.core_type = #tpu.core_type<tc>, window_params = [{transform_indices = @transform_0, window_bounds = array<i64: 1, 4, 64>}, {pipeline_mode = #tpu.pipeline_mode<synchronous>, transform_indices = @transform_1, window_bounds = array<i64: 9, 8, 4>}, {pipeline_mode = #tpu.pipeline_mode<synchronous>, transform_indices = @transform_2, window_bounds = array<i64: 9, 8, 8>}, {pipeline_mode = #tpu.pipeline_mode<synchronous>, transform_indices = @transform_3, window_bounds = array<i64: 1, 118>}, {pipeline_mode = #tpu.pipeline_mode<synchronous>, transform_indices = @transform_4, window_bounds = array<i64: 1, 166>}, {transform_indices = @transform_5, window_bounds = array<i64: 1, 8, 168>}]} {
    %cst = arith.constant 0.000000e+00 : f32
    %0 = vector.broadcast %cst : f32 to vector<4x144xf32>
    %c0 = arith.constant 0 : index
    %c0_0 = arith.constant 0 : index
    %1 = vector.load %arg7[%c0, %c0_0] : memref<4x144xf32, #tpu.memory_space<vmem>>, vector<4x144xf32>
    tpu.vector_store %arg7[%c0, %c0_0], %0 {strides = array<i32>} : memref<4x144xf32, #tpu.memory_space<vmem>>, vector<4x144xf32>,
    %c0_1 = arith.constant 0 : index
    %c0_2 = arith.constant 0 : index
    %c8 = arith.constant 8 : index
    %2 = vector.load %arg1[%c0_1, %c0_2, %c8] : memref<1x4x64xf32, #tpu.memory_space<vmem>>, vector<1x4x8xf32>
    %3 = vector.shape_cast %2 : vector<1x4x8xf32> to vector<4x8xf32>
    %c0_3 = arith.constant 0 : index
    %c14 = arith.constant 14 : index
    %4 = vector.load %arg7[%c0_3, %c14] : memref<4x144xf32, #tpu.memory_space<vmem>>, vector<4x8xf32>
    tpu.vector_store %arg7[%c0_3, %c14], %3 {strides = array<i32>} : memref<4x144xf32, #tpu.memory_space<vmem>>, vector<4x8xf32>,
    %5 = vector.extract_strided_slice %3 {offsets = [0, 1], sizes = [4, 1], strides = [1, 1]} : vector<4x8xf32> to vector<4x1xf32>
    %c0_4 = arith.constant 0 : index
    %c13 = arith.constant 13 : index
    %6 = vector.load %arg7[%c0_4, %c13] : memref<4x144xf32, #tpu.memory_space<vmem>>, vector<4x1xf32>
    tpu.vector_store %arg7[%c0_4, %c13], %5 {strides = array<i32>} : memref<4x144xf32, #tpu.memory_space<vmem>>, vector<4x1xf32>,
    %7 = vector.extract_strided_slice %3 {offsets = [0, 6], sizes = [4, 1], strides = [1, 1]} : vector<4x8xf32> to vector<4x1xf32>
    %c0_5 = arith.constant 0 : index
    %c22 = arith.constant 22 : index
    %8 = vector.load %arg7[%c0_5, %c22] : memref<4x144xf32, #tpu.memory_space<vmem>>, vector<4x1xf32>
    tpu.vector_store %arg7[%c0_5, %c22], %7 {strides = array<i32>} : memref<4x144xf32, #tpu.memory_space<vmem>>, vector<4x1xf32>,
    %c0_6 = arith.constant 0 : index
    %c0_7 = arith.constant 0 : index
    %c0_8 = arith.constant 0 : index
    %9 = vector.load %arg1[%c0_6, %c0_7, %c0_8] : memref<1x4x64xf32, #tpu.memory_space<vmem>>, vector<1x4x8xf32>
    %10 = vector.shape_cast %9 : vector<1x4x8xf32> to vector<4x8xf32>
    %c0_9 = arith.constant 0 : index
    %c26 = arith.constant 26 : index
    %11 = vector.load %arg7[%c0_9, %c26] : memref<4x144xf32, #tpu.memory_space<vmem>>, vector<4x8xf32>
    tpu.vector_store %arg7[%c0_9, %c26], %10 {strides = array<i32>} : memref<4x144xf32, #tpu.memory_space<vmem>>, vector<4x8xf32>,
    %12 = vector.extract_strided_slice %10 {offsets = [0, 1], sizes = [4, 1], strides = [1, 1]} : vector<4x8xf32> to vector<4x1xf32>
    %c0_10 = arith.constant 0 : index
    %c25 = arith.constant 25 : index
    %13 = vector.load %arg7[%c0_10, %c25] : memref<4x144xf32, #tpu.memory_space<vmem>>, vector<4x1xf32>
    tpu.vector_store %arg7[%c0_10, %c25], %12 {strides = array<i32>} : memref<4x144xf32, #tpu.memory_space<vmem>>, vector<4x1xf32>,
    %14 = vector.extract_strided_slice %10 {offsets = [0, 6], sizes = [4, 1], strides = [1, 1]} : vector<4x8xf32> to vector<4x1xf32>
    %c0_11 = arith.constant 0 : index
    %c34 = arith.constant 34 : index
    %15 = vector.load %arg7[%c0_11, %c34] : memref<4x144xf32, #tpu.memory_space<vmem>>, vector<4x1xf32>
    tpu.vector_store %arg7[%c0_11, %c34], %14 {strides = array<i32>} : memref<4x144xf32, #tpu.memory_space<vmem>>, vector<4x1xf32>,
    %c0_12 = arith.constant 0 : index
    %c0_13 = arith.constant 0 : index
    %c8_14 = arith.constant 8 : index
    %16 = vector.load %arg1[%c0_12, %c0_13, %c8_14] : memref<1x4x64xf32, #tpu.memory_space<vmem>>, vector<1x4x8xf32>
    %17 = vector.shape_cast %16 : vector<1x4x8xf32> to vector<4x8xf32>
    %c0_15 = arith.constant 0 : index
    %c38 = arith.constant 38 : index
    %18 = vector.load %arg7[%c0_15, %c38] : memref<4x144xf32, #tpu.memory_space<vmem>>, vector<4x8xf32>
    tpu.vector_store %arg7[%c0_15, %c38], %17 {strides = array<i32>} : memref<4x144xf32, #tpu.memory_space<vmem>>, vector<4x8xf32>,
    %19 = vector.extract_strided_slice %17 {offsets = [0, 1], sizes = [4, 1], strides = [1, 1]} : vector<4x8xf32> to vector<4x1xf32>
    %c0_16 = arith.constant 0 : index
    %c37 = arith.constant 37 : index
    %20 = vector.load %arg7[%c0_16, %c37] : memref<4x144xf32, #tpu.memory_space<vmem>>, vector<4x1xf32>
    tpu.vector_store %arg7[%c0_16, %c37], %19 {strides = array<i32>} : memref<4x144xf32, #tpu.memory_space<vmem>>, vector<4x1xf32>,
    %21 = vector.extract_strided_slice %17 {offsets = [0, 6], sizes = [4, 1], strides = [1, 1]} : vector<4x8xf32> to vector<4x1xf32>
    %c0_17 = arith.constant 0 : index
    %c46 = arith.constant 46 : index
    %22 = vector.load %arg7[%c0_17, %c46] : memref<4x144xf32, #tpu.memory_space<vmem>>, vector<4x1xf32>
    tpu.vector_store %arg7[%c0_17, %c46], %21 {strides = array<i32>} : memref<4x144xf32, #tpu.memory_space<vmem>>, vector<4x1xf32>,
    %c0_18 = arith.constant 0 : index
    %c0_19 = arith.constant 0 : index
    %c16 = arith.constant 16 : index
    %23 = vector.load %arg1[%c0_18, %c0_19, %c16] : memref<1x4x64xf32, #tpu.memory_space<vmem>>, vector<1x4x8xf32>
    %24 = vector.shape_cast %23 : vector<1x4x8xf32> to vector<4x8xf32>
    %c0_20 = arith.constant 0 : index
    %c50 = arith.constant 50 : index
    %25 = vector.load %arg7[%c0_20, %c50] : memref<4x144xf32, #tpu.memory_space<vmem>>, vector<4x8xf32>
    tpu.vector_store %arg7[%c0_20, %c50], %24 {strides = array<i32>} : memref<4x144xf32, #tpu.memory_space<vmem>>, vector<4x8xf32>,
    %26 = vector.extract_strided_slice %24 {offsets = [0, 1], sizes = [4, 1], strides = [1, 1]} : vector<4x8xf32> to vector<4x1xf32>
    %c0_21 = arith.constant 0 : index
    %c49 = arith.constant 49 : index
    %27 = vector.load %arg7[%c0_21, %c49] : memref<4x144xf32, #tpu.memory_space<vmem>>, vector<4x1xf32>
    tpu.vector_store %arg7[%c0_21, %c49], %26 {strides = array<i32>} : memref<4x144xf32, #tpu.memory_space<vmem>>, vector<4x1xf32>,
    %28 = vector.extract_strided_slice %24 {offsets = [0, 6], sizes = [4, 1], strides = [1, 1]} : vector<4x8xf32> to vector<4x1xf32>
    %c0_22 = arith.constant 0 : index
    %c58 = arith.constant 58 : index
    %29 = vector.load %arg7[%c0_22, %c58] : memref<4x144xf32, #tpu.memory_space<vmem>>, vector<4x1xf32>
    tpu.vector_store %arg7[%c0_22, %c58], %28 {strides = array<i32>} : memref<4x144xf32, #tpu.memory_space<vmem>>, vector<4x1xf32>,
    %c0_23 = arith.constant 0 : index
    %c0_24 = arith.constant 0 : index
    %c24 = arith.constant 24 : index
    %30 = vector.load %arg1[%c0_23, %c0_24, %c24] : memref<1x4x64xf32, #tpu.memory_space<vmem>>, vector<1x4x8xf32>
    %31 = vector.shape_cast %30 : vector<1x4x8xf32> to vector<4x8xf32>
    %c0_25 = arith.constant 0 : index
    %c62 = arith.constant 62 : index
    %32 = vector.load %arg7[%c0_25, %c62] : memref<4x144xf32, #tpu.memory_space<vmem>>, vector<4x8xf32>
    tpu.vector_store %arg7[%c0_25, %c62], %31 {strides = array<i32>} : memref<4x144xf32, #tpu.memory_space<vmem>>, vector<4x8xf32>,
    %33 = vector.extract_strided_slice %31 {offsets = [0, 1], sizes = [4, 1], strides = [1, 1]} : vector<4x8xf32> to vector<4x1xf32>
    %c0_26 = arith.constant 0 : index
    %c61 = arith.constant 61 : index
    %34 = vector.load %arg7[%c0_26, %c61] : memref<4x144xf32, #tpu.memory_space<vmem>>, vector<4x1xf32>
    tpu.vector_store %arg7[%c0_26, %c61], %33 {strides = array<i32>} : memref<4x144xf32, #tpu.memory_space<vmem>>, vector<4x1xf32>,
    %35 = vector.extract_strided_slice %31 {offsets = [0, 6], sizes = [4, 1], strides = [1, 1]} : vector<4x8xf32> to vector<4x1xf32>
    %c0_27 = arith.constant 0 : index
    %c70 = arith.constant 70 : index
    %36 = vector.load %arg7[%c0_27, %c70] : memref<4x144xf32, #tpu.memory_space<vmem>>, vector<4x1xf32>
    tpu.vector_store %arg7[%c0_27, %c70], %35 {strides = array<i32>} : memref<4x144xf32, #tpu.memory_space<vmem>>, vector<4x1xf32>,
    %c0_28 = arith.constant 0 : index
    %c0_29 = arith.constant 0 : index
    %c32 = arith.constant 32 : index
    %37 = vector.load %arg1[%c0_28, %c0_29, %c32] : memref<1x4x64xf32, #tpu.memory_space<vmem>>, vector<1x4x8xf32>
    %38 = vector.shape_cast %37 : vector<1x4x8xf32> to vector<4x8xf32>
    %c0_30 = arith.constant 0 : index
    %c74 = arith.constant 74 : index
    %39 = vector.load %arg7[%c0_30, %c74] : memref<4x144xf32, #tpu.memory_space<vmem>>, vector<4x8xf32>
    tpu.vector_store %arg7[%c0_30, %c74], %38 {strides = array<i32>} : memref<4x144xf32, #tpu.memory_space<vmem>>, vector<4x8xf32>,
    %40 = vector.extract_strided_slice %38 {offsets = [0, 1], sizes = [4, 1], strides = [1, 1]} : vector<4x8xf32> to vector<4x1xf32>
    %c0_31 = arith.constant 0 : index
    %c73 = arith.constant 73 : index
    %41 = vector.load %arg7[%c0_31, %c73] : memref<4x144xf32, #tpu.memory_space<vmem>>, vector<4x1xf32>
    tpu.vector_store %arg7[%c0_31, %c73], %40 {strides = array<i32>} : memref<4x144xf32, #tpu.memory_space<vmem>>, vector<4x1xf32>,
    %42 = vector.extract_strided_slice %38 {offsets = [0, 6], sizes = [4, 1], strides = [1, 1]} : vector<4x8xf32> to vector<4x1xf32>
    %c0_32 = arith.constant 0 : index
    %c82 = arith.constant 82 : index
    %43 = vector.load %arg7[%c0_32, %c82] : memref<4x144xf32, #tpu.memory_space<vmem>>, vector<4x1xf32>
    tpu.vector_store %arg7[%c0_32, %c82], %42 {strides = array<i32>} : memref<4x144xf32, #tpu.memory_space<vmem>>, vector<4x1xf32>,
    %c0_33 = arith.constant 0 : index
    %c0_34 = arith.constant 0 : index
    %c40 = arith.constant 40 : index
    %44 = vector.load %arg1[%c0_33, %c0_34, %c40] : memref<1x4x64xf32, #tpu.memory_space<vmem>>, vector<1x4x8xf32>
    %45 = vector.shape_cast %44 : vector<1x4x8xf32> to vector<4x8xf32>
    %c0_35 = arith.constant 0 : index
    %c86 = arith.constant 86 : index
    %46 = vector.load %arg7[%c0_35, %c86] : memref<4x144xf32, #tpu.memory_space<vmem>>, vector<4x8xf32>
    tpu.vector_store %arg7[%c0_35, %c86], %45 {strides = array<i32>} : memref<4x144xf32, #tpu.memory_space<vmem>>, vector<4x8xf32>,
    %47 = vector.extract_strided_slice %45 {offsets = [0, 1], sizes = [4, 1], strides = [1, 1]} : vector<4x8xf32> to vector<4x1xf32>
    %c0_36 = arith.constant 0 : index
    %c85 = arith.constant 85 : index
    %48 = vector.load %arg7[%c0_36, %c85] : memref<4x144xf32, #tpu.memory_space<vmem>>, vector<4x1xf32>
    tpu.vector_store %arg7[%c0_36, %c85], %47 {strides = array<i32>} : memref<4x144xf32, #tpu.memory_space<vmem>>, vector<4x1xf32>,
    %49 = vector.extract_strided_slice %45 {offsets = [0, 6], sizes = [4, 1], strides = [1, 1]} : vector<4x8xf32> to vector<4x1xf32>
    %c0_37 = arith.constant 0 : index
    %c94 = arith.constant 94 : index
    %50 = vector.load %arg7[%c0_37, %c94] : memref<4x144xf32, #tpu.memory_space<vmem>>, vector<4x1xf32>
    tpu.vector_store %arg7[%c0_37, %c94], %49 {strides = array<i32>} : memref<4x144xf32, #tpu.memory_space<vmem>>, vector<4x1xf32>,
    %c0_38 = arith.constant 0 : index
    %c0_39 = arith.constant 0 : index
    %c48 = arith.constant 48 : index
    %51 = vector.load %arg1[%c0_38, %c0_39, %c48] : memref<1x4x64xf32, #tpu.memory_space<vmem>>, vector<1x4x8xf32>
    %52 = vector.shape_cast %51 : vector<1x4x8xf32> to vector<4x8xf32>
    %c0_40 = arith.constant 0 : index
    %c98 = arith.constant 98 : index
    %53 = vector.load %arg7[%c0_40, %c98] : memref<4x144xf32, #tpu.memory_space<vmem>>, vector<4x8xf32>
    tpu.vector_store %arg7[%c0_40, %c98], %52 {strides = array<i32>} : memref<4x144xf32, #tpu.memory_space<vmem>>, vector<4x8xf32>,
    %54 = vector.extract_strided_slice %52 {offsets = [0, 1], sizes = [4, 1], strides = [1, 1]} : vector<4x8xf32> to vector<4x1xf32>
    %c0_41 = arith.constant 0 : index
    %c97 = arith.constant 97 : index
    %55 = vector.load %arg7[%c0_41, %c97] : memref<4x144xf32, #tpu.memory_space<vmem>>, vector<4x1xf32>
    tpu.vector_store %arg7[%c0_41, %c97], %54 {strides = array<i32>} : memref<4x144xf32, #tpu.memory_space<vmem>>, vector<4x1xf32>,
    %56 = vector.extract_strided_slice %52 {offsets = [0, 6], sizes = [4, 1], strides = [1, 1]} : vector<4x8xf32> to vector<4x1xf32>
    %c0_42 = arith.constant 0 : index
    %c106 = arith.constant 106 : index
    %57 = vector.load %arg7[%c0_42, %c106] : memref<4x144xf32, #tpu.memory_space<vmem>>, vector<4x1xf32>
    tpu.vector_store %arg7[%c0_42, %c106], %56 {strides = array<i32>} : memref<4x144xf32, #tpu.memory_space<vmem>>, vector<4x1xf32>,
    %c0_43 = arith.constant 0 : index
    %c0_44 = arith.constant 0 : index
    %c56 = arith.constant 56 : index
    %58 = vector.load %arg1[%c0_43, %c0_44, %c56] : memref<1x4x64xf32, #tpu.memory_space<vmem>>, vector<1x4x8xf32>
    %59 = vector.shape_cast %58 : vector<1x4x8xf32> to vector<4x8xf32>
    %c0_45 = arith.constant 0 : index
    %c110 = arith.constant 110 : index
    %60 = vector.load %arg7[%c0_45, %c110] : memref<4x144xf32, #tpu.memory_space<vmem>>, vector<4x8xf32>
    tpu.vector_store %arg7[%c0_45, %c110], %59 {strides = array<i32>} : memref<4x144xf32, #tpu.memory_space<vmem>>, vector<4x8xf32>,
    %61 = vector.extract_strided_slice %59 {offsets = [0, 1], sizes = [4, 1], strides = [1, 1]} : vector<4x8xf32> to vector<4x1xf32>
    %c0_46 = arith.constant 0 : index
    %c109 = arith.constant 109 : index
    %62 = vector.load %arg7[%c0_46, %c109] : memref<4x144xf32, #tpu.memory_space<vmem>>, vector<4x1xf32>
    tpu.vector_store %arg7[%c0_46, %c109], %61 {strides = array<i32>} : memref<4x144xf32, #tpu.memory_space<vmem>>, vector<4x1xf32>,
    %63 = vector.extract_strided_slice %59 {offsets = [0, 6], sizes = [4, 1], strides = [1, 1]} : vector<4x8xf32> to vector<4x1xf32>
    %c0_47 = arith.constant 0 : index
    %c118 = arith.constant 118 : index
    %64 = vector.load %arg7[%c0_47, %c118] : memref<4x144xf32, #tpu.memory_space<vmem>>, vector<4x1xf32>
    tpu.vector_store %arg7[%c0_47, %c118], %63 {strides = array<i32>} : memref<4x144xf32, #tpu.memory_space<vmem>>, vector<4x1xf32>,
    %c0_48 = arith.constant 0 : index
    %c0_49 = arith.constant 0 : index
    %c48_50 = arith.constant 48 : index
    %65 = vector.load %arg1[%c0_48, %c0_49, %c48_50] : memref<1x4x64xf32, #tpu.memory_space<vmem>>, vector<1x4x8xf32>
    %66 = vector.shape_cast %65 : vector<1x4x8xf32> to vector<4x8xf32>
    %c0_51 = arith.constant 0 : index
    %c122 = arith.constant 122 : index
    %67 = vector.load %arg7[%c0_51, %c122] : memref<4x144xf32, #tpu.memory_space<vmem>>, vector<4x8xf32>
    tpu.vector_store %arg7[%c0_51, %c122], %66 {strides = array<i32>} : memref<4x144xf32, #tpu.memory_space<vmem>>, vector<4x8xf32>,
    %68 = vector.extract_strided_slice %66 {offsets = [0, 1], sizes = [4, 1], strides = [1, 1]} : vector<4x8xf32> to vector<4x1xf32>
    %c0_52 = arith.constant 0 : index
    %c121 = arith.constant 121 : index
    %69 = vector.load %arg7[%c0_52, %c121] : memref<4x144xf32, #tpu.memory_space<vmem>>, vector<4x1xf32>
    tpu.vector_store %arg7[%c0_52, %c121], %68 {strides = array<i32>} : memref<4x144xf32, #tpu.memory_space<vmem>>, vector<4x1xf32>,
    %70 = vector.extract_strided_slice %66 {offsets = [0, 6], sizes = [4, 1], strides = [1, 1]} : vector<4x8xf32> to vector<4x1xf32>
    %c0_53 = arith.constant 0 : index
    %c130 = arith.constant 130 : index
    %71 = vector.load %arg7[%c0_53, %c130] : memref<4x144xf32, #tpu.memory_space<vmem>>, vector<4x1xf32>
    tpu.vector_store %arg7[%c0_53, %c130], %70 {strides = array<i32>} : memref<4x144xf32, #tpu.memory_space<vmem>>, vector<4x1xf32>,
    %c0_54 = arith.constant 0 : index
    %c0_55 = arith.constant 0 : index
    %72 = vector.load %arg7[%c0_54, %c0_55] : memref<4x144xf32, #tpu.memory_space<vmem>>, vector<4x118xf32>
    %c0_56 = arith.constant 0 : index
    %c0_57 = arith.constant 0 : index
    %c0_58 = arith.constant 0 : index
    %73 = vector.load %arg2[%c0_56, %c0_57, %c0_58] : memref<9x8x4xf32, #tpu.memory_space<vmem>>, vector<1x8x4xf32>
    %74 = vector.shape_cast %73 : vector<1x8x4xf32> to vector<8x4xf32>
    %cst_59 = arith.constant dense<0.000000e+00> : vector<8x118xf32>
    %75 = tpu.matmul %74, %72, %cst_59 {dimension_numbers = #tpu.dot_dimension_numbers<[1], [0], [0], [1], [0, 0, 1, 1], [], []>} : vector<8x4xf32>, vector<4x118xf32>, vector<8x118xf32> -> vector<8x118xf32>
    %c0_60 = arith.constant 0 : index
    %c1 = arith.constant 1 : index
    %76 = vector.load %arg7[%c0_60, %c1] : memref<4x144xf32, #tpu.memory_space<vmem>>, vector<4x118xf32>
    %c1_61 = arith.constant 1 : index
    %c0_62 = arith.constant 0 : index
    %c0_63 = arith.constant 0 : index
    %77 = vector.load %arg2[%c1_61, %c0_62, %c0_63] : memref<9x8x4xf32, #tpu.memory_space<vmem>>, vector<1x8x4xf32>
    %78 = vector.shape_cast %77 : vector<1x8x4xf32> to vector<8x4xf32>
    %cst_64 = arith.constant dense<0.000000e+00> : vector<8x118xf32>
    %79 = tpu.matmul %78, %76, %cst_64 {dimension_numbers = #tpu.dot_dimension_numbers<[1], [0], [0], [1], [0, 0, 1, 1], [], []>} : vector<8x4xf32>, vector<4x118xf32>, vector<8x118xf32> -> vector<8x118xf32>
    %80 = arith.addf %75, %79 : vector<8x118xf32>
    %c0_65 = arith.constant 0 : index
    %c2 = arith.constant 2 : index
    %81 = vector.load %arg7[%c0_65, %c2] : memref<4x144xf32, #tpu.memory_space<vmem>>, vector<4x118xf32>
    %c2_66 = arith.constant 2 : index
    %c0_67 = arith.constant 0 : index
    %c0_68 = arith.constant 0 : index
    %82 = vector.load %arg2[%c2_66, %c0_67, %c0_68] : memref<9x8x4xf32, #tpu.memory_space<vmem>>, vector<1x8x4xf32>
    %83 = vector.shape_cast %82 : vector<1x8x4xf32> to vector<8x4xf32>
    %cst_69 = arith.constant dense<0.000000e+00> : vector<8x118xf32>
    %84 = tpu.matmul %83, %81, %cst_69 {dimension_numbers = #tpu.dot_dimension_numbers<[1], [0], [0], [1], [0, 0, 1, 1], [], []>} : vector<8x4xf32>, vector<4x118xf32>, vector<8x118xf32> -> vector<8x118xf32>
    %85 = arith.addf %80, %84 : vector<8x118xf32>
    %c0_70 = arith.constant 0 : index
    %c12 = arith.constant 12 : index
    %86 = vector.load %arg7[%c0_70, %c12] : memref<4x144xf32, #tpu.memory_space<vmem>>, vector<4x118xf32>
    %c3 = arith.constant 3 : index
    %c0_71 = arith.constant 0 : index
    %c0_72 = arith.constant 0 : index
    %87 = vector.load %arg2[%c3, %c0_71, %c0_72] : memref<9x8x4xf32, #tpu.memory_space<vmem>>, vector<1x8x4xf32>
    %88 = vector.shape_cast %87 : vector<1x8x4xf32> to vector<8x4xf32>
    %cst_73 = arith.constant dense<0.000000e+00> : vector<8x118xf32>
    %89 = tpu.matmul %88, %86, %cst_73 {dimension_numbers = #tpu.dot_dimension_numbers<[1], [0], [0], [1], [0, 0, 1, 1], [], []>} : vector<8x4xf32>, vector<4x118xf32>, vector<8x118xf32> -> vector<8x118xf32>
    %90 = arith.addf %85, %89 : vector<8x118xf32>
    %c0_74 = arith.constant 0 : index
    %c13_75 = arith.constant 13 : index
    %91 = vector.load %arg7[%c0_74, %c13_75] : memref<4x144xf32, #tpu.memory_space<vmem>>, vector<4x118xf32>
    %c4 = arith.constant 4 : index
    %c0_76 = arith.constant 0 : index
    %c0_77 = arith.constant 0 : index
    %92 = vector.load %arg2[%c4, %c0_76, %c0_77] : memref<9x8x4xf32, #tpu.memory_space<vmem>>, vector<1x8x4xf32>
    %93 = vector.shape_cast %92 : vector<1x8x4xf32> to vector<8x4xf32>
    %cst_78 = arith.constant dense<0.000000e+00> : vector<8x118xf32>
    %94 = tpu.matmul %93, %91, %cst_78 {dimension_numbers = #tpu.dot_dimension_numbers<[1], [0], [0], [1], [0, 0, 1, 1], [], []>} : vector<8x4xf32>, vector<4x118xf32>, vector<8x118xf32> -> vector<8x118xf32>
    %95 = arith.addf %90, %94 : vector<8x118xf32>
    %c0_79 = arith.constant 0 : index
    %c14_80 = arith.constant 14 : index
    %96 = vector.load %arg7[%c0_79, %c14_80] : memref<4x144xf32, #tpu.memory_space<vmem>>, vector<4x118xf32>
    %c5 = arith.constant 5 : index
    %c0_81 = arith.constant 0 : index
    %c0_82 = arith.constant 0 : index
    %97 = vector.load %arg2[%c5, %c0_81, %c0_82] : memref<9x8x4xf32, #tpu.memory_space<vmem>>, vector<1x8x4xf32>
    %98 = vector.shape_cast %97 : vector<1x8x4xf32> to vector<8x4xf32>
    %cst_83 = arith.constant dense<0.000000e+00> : vector<8x118xf32>
    %99 = tpu.matmul %98, %96, %cst_83 {dimension_numbers = #tpu.dot_dimension_numbers<[1], [0], [0], [1], [0, 0, 1, 1], [], []>} : vector<8x4xf32>, vector<4x118xf32>, vector<8x118xf32> -> vector<8x118xf32>
    %100 = arith.addf %95, %99 : vector<8x118xf32>
    %c0_84 = arith.constant 0 : index
    %c24_85 = arith.constant 24 : index
    %101 = vector.load %arg7[%c0_84, %c24_85] : memref<4x144xf32, #tpu.memory_space<vmem>>, vector<4x118xf32>
    %c6 = arith.constant 6 : index
    %c0_86 = arith.constant 0 : index
    %c0_87 = arith.constant 0 : index
    %102 = vector.load %arg2[%c6, %c0_86, %c0_87] : memref<9x8x4xf32, #tpu.memory_space<vmem>>, vector<1x8x4xf32>
    %103 = vector.shape_cast %102 : vector<1x8x4xf32> to vector<8x4xf32>
    %cst_88 = arith.constant dense<0.000000e+00> : vector<8x118xf32>
    %104 = tpu.matmul %103, %101, %cst_88 {dimension_numbers = #tpu.dot_dimension_numbers<[1], [0], [0], [1], [0, 0, 1, 1], [], []>} : vector<8x4xf32>, vector<4x118xf32>, vector<8x118xf32> -> vector<8x118xf32>
    %105 = arith.addf %100, %104 : vector<8x118xf32>
    %c0_89 = arith.constant 0 : index
    %c25_90 = arith.constant 25 : index
    %106 = vector.load %arg7[%c0_89, %c25_90] : memref<4x144xf32, #tpu.memory_space<vmem>>, vector<4x118xf32>
    %c7 = arith.constant 7 : index
    %c0_91 = arith.constant 0 : index
    %c0_92 = arith.constant 0 : index
    %107 = vector.load %arg2[%c7, %c0_91, %c0_92] : memref<9x8x4xf32, #tpu.memory_space<vmem>>, vector<1x8x4xf32>
    %108 = vector.shape_cast %107 : vector<1x8x4xf32> to vector<8x4xf32>
    %cst_93 = arith.constant dense<0.000000e+00> : vector<8x118xf32>
    %109 = tpu.matmul %108, %106, %cst_93 {dimension_numbers = #tpu.dot_dimension_numbers<[1], [0], [0], [1], [0, 0, 1, 1], [], []>} : vector<8x4xf32>, vector<4x118xf32>, vector<8x118xf32> -> vector<8x118xf32>
    %110 = arith.addf %105, %109 : vector<8x118xf32>
    %c0_94 = arith.constant 0 : index
    %c26_95 = arith.constant 26 : index
    %111 = vector.load %arg7[%c0_94, %c26_95] : memref<4x144xf32, #tpu.memory_space<vmem>>, vector<4x118xf32>
    %c8_96 = arith.constant 8 : index
    %c0_97 = arith.constant 0 : index
    %c0_98 = arith.constant 0 : index
    %112 = vector.load %arg2[%c8_96, %c0_97, %c0_98] : memref<9x8x4xf32, #tpu.memory_space<vmem>>, vector<1x8x4xf32>
    %113 = vector.shape_cast %112 : vector<1x8x4xf32> to vector<8x4xf32>
    %cst_99 = arith.constant dense<0.000000e+00> : vector<8x118xf32>
    %114 = tpu.matmul %113, %111, %cst_99 {dimension_numbers = #tpu.dot_dimension_numbers<[1], [0], [0], [1], [0, 0, 1, 1], [], []>} : vector<8x4xf32>, vector<4x118xf32>, vector<8x118xf32> -> vector<8x118xf32>
    %115 = arith.addf %110, %114 : vector<8x118xf32>
    %c0_100 = arith.constant 0 : index
    %c0_101 = arith.constant 0 : index
    %116 = vector.load %arg4[%c0_100, %c0_101] : memref<1x118xf32, #tpu.memory_space<vmem>>, vector<1x118xf32>
    %117 = vector.broadcast %116 : vector<1x118xf32> to vector<8x118xf32>
    %118 = arith.mulf %115, %117 : vector<8x118xf32>
    %cst_102 = arith.constant dense<0.000000e+00> : vector<8xf32>
    %119 = vector.multi_reduction <add>, %118, %cst_102 [1] : vector<8x118xf32> to vector<8xf32>
    %120 = vector.shape_cast %119 : vector<8xf32> to vector<8x1xf32>
    %cst_103 = arith.constant 0.00999999977 : f32
    %121 = vector.broadcast %cst_103 : f32 to vector<8x1xf32>
    %122 = arith.mulf %120, %121 : vector<8x1xf32>
    %123 = arith.mulf %115, %115 : vector<8x118xf32>
    %124 = vector.broadcast %116 : vector<1x118xf32> to vector<8x118xf32>
    %125 = arith.mulf %123, %124 : vector<8x118xf32>
    %cst_104 = arith.constant dense<0.000000e+00> : vector<8xf32>
    %126 = vector.multi_reduction <add>, %125, %cst_104 [1] : vector<8x118xf32> to vector<8xf32>
    %127 = vector.shape_cast %126 : vector<8xf32> to vector<8x1xf32>
    %cst_105 = arith.constant 0.00999999977 : f32
    %128 = vector.broadcast %cst_105 : f32 to vector<8x1xf32>
    %129 = arith.mulf %127, %128 : vector<8x1xf32>
    %130 = arith.mulf %122, %122 : vector<8x1xf32>
    %131 = arith.subf %129, %130 : vector<8x1xf32>
    %cst_106 = arith.constant 0.000000e+00 : f32
    %132 = vector.broadcast %cst_106 : f32 to vector<8x1xf32>
    %133 = arith.maximumf %131, %132 : vector<8x1xf32>
    %134 = vector.broadcast %122 : vector<8x1xf32> to vector<8x118xf32>
    %135 = arith.subf %115, %134 : vector<8x118xf32>
    %cst_107 = arith.constant 9.99999974E-6 : f32
    %136 = vector.broadcast %cst_107 : f32 to vector<8x1xf32>
    %137 = arith.addf %133, %136 : vector<8x1xf32>
    %138 = math.rsqrt %137 : vector<8x1xf32>
    %139 = vector.broadcast %138 : vector<8x1xf32> to vector<8x118xf32>
    %140 = arith.mulf %135, %139 : vector<8x118xf32>
    %cst_108 = arith.constant 0.000000e+00 : f32
    %141 = vector.broadcast %cst_108 : f32 to vector<8x118xf32>
    %142 = arith.maximumf %140, %141 : vector<8x118xf32>
    %cst_109 = arith.constant 0.000000e+00 : f32
    %143 = vector.broadcast %cst_109 : f32 to vector<8x196xf32>
    %c0_110 = arith.constant 0 : index
    %c0_111 = arith.constant 0 : index
    %144 = vector.load %arg8[%c0_110, %c0_111] : memref<8x196xf32, #tpu.memory_space<vmem>>, vector<8x196xf32>
    tpu.vector_store %arg8[%c0_110, %c0_111], %143 {strides = array<i32>} : memref<8x196xf32, #tpu.memory_space<vmem>>, vector<8x196xf32>,
    %145 = vector.extract_strided_slice %142 {offsets = [0, 12], sizes = [8, 10], strides = [1, 1]} : vector<8x118xf32> to vector<8x10xf32>
    %c0_112 = arith.constant 0 : index
    %c16_113 = arith.constant 16 : index
    %146 = vector.load %arg8[%c0_112, %c16_113] : memref<8x196xf32, #tpu.memory_space<vmem>>, vector<8x10xf32>
    tpu.vector_store %arg8[%c0_112, %c16_113], %145 {strides = array<i32>} : memref<8x196xf32, #tpu.memory_space<vmem>>, vector<8x10xf32>,
    %147 = vector.extract_strided_slice %145 {offsets = [0, 1], sizes = [8, 1], strides = [1, 1]} : vector<8x10xf32> to vector<8x1xf32>
    %c0_114 = arith.constant 0 : index
    %c15 = arith.constant 15 : index
    %148 = vector.load %arg8[%c0_114, %c15] : memref<8x196xf32, #tpu.memory_space<vmem>>, vector<8x1xf32>
    tpu.vector_store %arg8[%c0_114, %c15], %147 {strides = array<i32>} : memref<8x196xf32, #tpu.memory_space<vmem>>, vector<8x1xf32>,
    %149 = vector.extract_strided_slice %145 {offsets = [0, 8], sizes = [8, 1], strides = [1, 1]} : vector<8x10xf32> to vector<8x1xf32>
    %c0_115 = arith.constant 0 : index
    %c26_116 = arith.constant 26 : index
    %150 = vector.load %arg8[%c0_115, %c26_116] : memref<8x196xf32, #tpu.memory_space<vmem>>, vector<8x1xf32>
    tpu.vector_store %arg8[%c0_115, %c26_116], %149 {strides = array<i32>} : memref<8x196xf32, #tpu.memory_space<vmem>>, vector<8x1xf32>,
    %151 = vector.extract_strided_slice %142 {offsets = [0, 0], sizes = [8, 10], strides = [1, 1]} : vector<8x118xf32> to vector<8x10xf32>
    %c0_117 = arith.constant 0 : index
    %c30 = arith.constant 30 : index
    %152 = vector.load %arg8[%c0_117, %c30] : memref<8x196xf32, #tpu.memory_space<vmem>>, vector<8x10xf32>
    tpu.vector_store %arg8[%c0_117, %c30], %151 {strides = array<i32>} : memref<8x196xf32, #tpu.memory_space<vmem>>, vector<8x10xf32>,
    %153 = vector.extract_strided_slice %151 {offsets = [0, 1], sizes = [8, 1], strides = [1, 1]} : vector<8x10xf32> to vector<8x1xf32>
    %c0_118 = arith.constant 0 : index
    %c29 = arith.constant 29 : index
    %154 = vector.load %arg8[%c0_118, %c29] : memref<8x196xf32, #tpu.memory_space<vmem>>, vector<8x1xf32>
    tpu.vector_store %arg8[%c0_118, %c29], %153 {strides = array<i32>} : memref<8x196xf32, #tpu.memory_space<vmem>>, vector<8x1xf32>,
    %155 = vector.extract_strided_slice %151 {offsets = [0, 8], sizes = [8, 1], strides = [1, 1]} : vector<8x10xf32> to vector<8x1xf32>
    %c0_119 = arith.constant 0 : index
    %c40_120 = arith.constant 40 : index
    %156 = vector.load %arg8[%c0_119, %c40_120] : memref<8x196xf32, #tpu.memory_space<vmem>>, vector<8x1xf32>
    tpu.vector_store %arg8[%c0_119, %c40_120], %155 {strides = array<i32>} : memref<8x196xf32, #tpu.memory_space<vmem>>, vector<8x1xf32>,
    %157 = vector.extract_strided_slice %142 {offsets = [0, 12], sizes = [8, 10], strides = [1, 1]} : vector<8x118xf32> to vector<8x10xf32>
    %c0_121 = arith.constant 0 : index
    %c44 = arith.constant 44 : index
    %158 = vector.load %arg8[%c0_121, %c44] : memref<8x196xf32, #tpu.memory_space<vmem>>, vector<8x10xf32>
    tpu.vector_store %arg8[%c0_121, %c44], %157 {strides = array<i32>} : memref<8x196xf32, #tpu.memory_space<vmem>>, vector<8x10xf32>,
    %159 = vector.extract_strided_slice %157 {offsets = [0, 1], sizes = [8, 1], strides = [1, 1]} : vector<8x10xf32> to vector<8x1xf32>
    %c0_122 = arith.constant 0 : index
    %c43 = arith.constant 43 : index
    %160 = vector.load %arg8[%c0_122, %c43] : memref<8x196xf32, #tpu.memory_space<vmem>>, vector<8x1xf32>
    tpu.vector_store %arg8[%c0_122, %c43], %159 {strides = array<i32>} : memref<8x196xf32, #tpu.memory_space<vmem>>, vector<8x1xf32>,
    %161 = vector.extract_strided_slice %157 {offsets = [0, 8], sizes = [8, 1], strides = [1, 1]} : vector<8x10xf32> to vector<8x1xf32>
    %c0_123 = arith.constant 0 : index
    %c54 = arith.constant 54 : index
    %162 = vector.load %arg8[%c0_123, %c54] : memref<8x196xf32, #tpu.memory_space<vmem>>, vector<8x1xf32>
    tpu.vector_store %arg8[%c0_123, %c54], %161 {strides = array<i32>} : memref<8x196xf32, #tpu.memory_space<vmem>>, vector<8x1xf32>,
    %163 = vector.extract_strided_slice %142 {offsets = [0, 24], sizes = [8, 10], strides = [1, 1]} : vector<8x118xf32> to vector<8x10xf32>
    %c0_124 = arith.constant 0 : index
    %c58_125 = arith.constant 58 : index
    %164 = vector.load %arg8[%c0_124, %c58_125] : memref<8x196xf32, #tpu.memory_space<vmem>>, vector<8x10xf32>
    tpu.vector_store %arg8[%c0_124, %c58_125], %163 {strides = array<i32>} : memref<8x196xf32, #tpu.memory_space<vmem>>, vector<8x10xf32>,
    %165 = vector.extract_strided_slice %163 {offsets = [0, 1], sizes = [8, 1], strides = [1, 1]} : vector<8x10xf32> to vector<8x1xf32>
    %c0_126 = arith.constant 0 : index
    %c57 = arith.constant 57 : index
    %166 = vector.load %arg8[%c0_126, %c57] : memref<8x196xf32, #tpu.memory_space<vmem>>, vector<8x1xf32>
    tpu.vector_store %arg8[%c0_126, %c57], %165 {strides = array<i32>} : memref<8x196xf32, #tpu.memory_space<vmem>>, vector<8x1xf32>,
    %167 = vector.extract_strided_slice %163 {offsets = [0, 8], sizes = [8, 1], strides = [1, 1]} : vector<8x10xf32> to vector<8x1xf32>
    %c0_127 = arith.constant 0 : index
    %c68 = arith.constant 68 : index
    %168 = vector.load %arg8[%c0_127, %c68] : memref<8x196xf32, #tpu.memory_space<vmem>>, vector<8x1xf32>
    tpu.vector_store %arg8[%c0_127, %c68], %167 {strides = array<i32>} : memref<8x196xf32, #tpu.memory_space<vmem>>, vector<8x1xf32>,
    %169 = vector.extract_strided_slice %142 {offsets = [0, 36], sizes = [8, 10], strides = [1, 1]} : vector<8x118xf32> to vector<8x10xf32>
    %c0_128 = arith.constant 0 : index
    %c72 = arith.constant 72 : index
    %170 = vector.load %arg8[%c0_128, %c72] : memref<8x196xf32, #tpu.memory_space<vmem>>, vector<8x10xf32>
    tpu.vector_store %arg8[%c0_128, %c72], %169 {strides = array<i32>} : memref<8x196xf32, #tpu.memory_space<vmem>>, vector<8x10xf32>,
    %171 = vector.extract_strided_slice %169 {offsets = [0, 1], sizes = [8, 1], strides = [1, 1]} : vector<8x10xf32> to vector<8x1xf32>
    %c0_129 = arith.constant 0 : index
    %c71 = arith.constant 71 : index
    %172 = vector.load %arg8[%c0_129, %c71] : memref<8x196xf32, #tpu.memory_space<vmem>>, vector<8x1xf32>
    tpu.vector_store %arg8[%c0_129, %c71], %171 {strides = array<i32>} : memref<8x196xf32, #tpu.memory_space<vmem>>, vector<8x1xf32>,
    %173 = vector.extract_strided_slice %169 {offsets = [0, 8], sizes = [8, 1], strides = [1, 1]} : vector<8x10xf32> to vector<8x1xf32>
    %c0_130 = arith.constant 0 : index
    %c82_131 = arith.constant 82 : index
    %174 = vector.load %arg8[%c0_130, %c82_131] : memref<8x196xf32, #tpu.memory_space<vmem>>, vector<8x1xf32>
    tpu.vector_store %arg8[%c0_130, %c82_131], %173 {strides = array<i32>} : memref<8x196xf32, #tpu.memory_space<vmem>>, vector<8x1xf32>,
    %175 = vector.extract_strided_slice %142 {offsets = [0, 48], sizes = [8, 10], strides = [1, 1]} : vector<8x118xf32> to vector<8x10xf32>
    %c0_132 = arith.constant 0 : index
    %c86_133 = arith.constant 86 : index
    %176 = vector.load %arg8[%c0_132, %c86_133] : memref<8x196xf32, #tpu.memory_space<vmem>>, vector<8x10xf32>
    tpu.vector_store %arg8[%c0_132, %c86_133], %175 {strides = array<i32>} : memref<8x196xf32, #tpu.memory_space<vmem>>, vector<8x10xf32>,
    %177 = vector.extract_strided_slice %175 {offsets = [0, 1], sizes = [8, 1], strides = [1, 1]} : vector<8x10xf32> to vector<8x1xf32>
    %c0_134 = arith.constant 0 : index
    %c85_135 = arith.constant 85 : index
    %178 = vector.load %arg8[%c0_134, %c85_135] : memref<8x196xf32, #tpu.memory_space<vmem>>, vector<8x1xf32>
    tpu.vector_store %arg8[%c0_134, %c85_135], %177 {strides = array<i32>} : memref<8x196xf32, #tpu.memory_space<vmem>>, vector<8x1xf32>,
    %179 = vector.extract_strided_slice %175 {offsets = [0, 8], sizes = [8, 1], strides = [1, 1]} : vector<8x10xf32> to vector<8x1xf32>
    %c0_136 = arith.constant 0 : index
    %c96 = arith.constant 96 : index
    %180 = vector.load %arg8[%c0_136, %c96] : memref<8x196xf32, #tpu.memory_space<vmem>>, vector<8x1xf32>
    tpu.vector_store %arg8[%c0_136, %c96], %179 {strides = array<i32>} : memref<8x196xf32, #tpu.memory_space<vmem>>, vector<8x1xf32>,
    %181 = vector.extract_strided_slice %142 {offsets = [0, 60], sizes = [8, 10], strides = [1, 1]} : vector<8x118xf32> to vector<8x10xf32>
    %c0_137 = arith.constant 0 : index
    %c100 = arith.constant 100 : index
    %182 = vector.load %arg8[%c0_137, %c100] : memref<8x196xf32, #tpu.memory_space<vmem>>, vector<8x10xf32>
    tpu.vector_store %arg8[%c0_137, %c100], %181 {strides = array<i32>} : memref<8x196xf32, #tpu.memory_space<vmem>>, vector<8x10xf32>,
    %183 = vector.extract_strided_slice %181 {offsets = [0, 1], sizes = [8, 1], strides = [1, 1]} : vector<8x10xf32> to vector<8x1xf32>
    %c0_138 = arith.constant 0 : index
    %c99 = arith.constant 99 : index
    %184 = vector.load %arg8[%c0_138, %c99] : memref<8x196xf32, #tpu.memory_space<vmem>>, vector<8x1xf32>
    tpu.vector_store %arg8[%c0_138, %c99], %183 {strides = array<i32>} : memref<8x196xf32, #tpu.memory_space<vmem>>, vector<8x1xf32>,
    %185 = vector.extract_strided_slice %181 {offsets = [0, 8], sizes = [8, 1], strides = [1, 1]} : vector<8x10xf32> to vector<8x1xf32>
    %c0_139 = arith.constant 0 : index
    %c110_140 = arith.constant 110 : index
    %186 = vector.load %arg8[%c0_139, %c110_140] : memref<8x196xf32, #tpu.memory_space<vmem>>, vector<8x1xf32>
    tpu.vector_store %arg8[%c0_139, %c110_140], %185 {strides = array<i32>} : memref<8x196xf32, #tpu.memory_space<vmem>>, vector<8x1xf32>,
    %187 = vector.extract_strided_slice %142 {offsets = [0, 72], sizes = [8, 10], strides = [1, 1]} : vector<8x118xf32> to vector<8x10xf32>
    %c0_141 = arith.constant 0 : index
    %c114 = arith.constant 114 : index
    %188 = vector.load %arg8[%c0_141, %c114] : memref<8x196xf32, #tpu.memory_space<vmem>>, vector<8x10xf32>
    tpu.vector_store %arg8[%c0_141, %c114], %187 {strides = array<i32>} : memref<8x196xf32, #tpu.memory_space<vmem>>, vector<8x10xf32>,
    %189 = vector.extract_strided_slice %187 {offsets = [0, 1], sizes = [8, 1], strides = [1, 1]} : vector<8x10xf32> to vector<8x1xf32>
    %c0_142 = arith.constant 0 : index
    %c113 = arith.constant 113 : index
    %190 = vector.load %arg8[%c0_142, %c113] : memref<8x196xf32, #tpu.memory_space<vmem>>, vector<8x1xf32>
    tpu.vector_store %arg8[%c0_142, %c113], %189 {strides = array<i32>} : memref<8x196xf32, #tpu.memory_space<vmem>>, vector<8x1xf32>,
    %191 = vector.extract_strided_slice %187 {offsets = [0, 8], sizes = [8, 1], strides = [1, 1]} : vector<8x10xf32> to vector<8x1xf32>
    %c0_143 = arith.constant 0 : index
    %c124 = arith.constant 124 : index
    %192 = vector.load %arg8[%c0_143, %c124] : memref<8x196xf32, #tpu.memory_space<vmem>>, vector<8x1xf32>
    tpu.vector_store %arg8[%c0_143, %c124], %191 {strides = array<i32>} : memref<8x196xf32, #tpu.memory_space<vmem>>, vector<8x1xf32>,
    %193 = vector.extract_strided_slice %142 {offsets = [0, 84], sizes = [8, 10], strides = [1, 1]} : vector<8x118xf32> to vector<8x10xf32>
    %c0_144 = arith.constant 0 : index
    %c128 = arith.constant 128 : index
    %194 = vector.load %arg8[%c0_144, %c128] : memref<8x196xf32, #tpu.memory_space<vmem>>, vector<8x10xf32>
    tpu.vector_store %arg8[%c0_144, %c128], %193 {strides = array<i32>} : memref<8x196xf32, #tpu.memory_space<vmem>>, vector<8x10xf32>,
    %195 = vector.extract_strided_slice %193 {offsets = [0, 1], sizes = [8, 1], strides = [1, 1]} : vector<8x10xf32> to vector<8x1xf32>
    %c0_145 = arith.constant 0 : index
    %c127 = arith.constant 127 : index
    %196 = vector.load %arg8[%c0_145, %c127] : memref<8x196xf32, #tpu.memory_space<vmem>>, vector<8x1xf32>
    tpu.vector_store %arg8[%c0_145, %c127], %195 {strides = array<i32>} : memref<8x196xf32, #tpu.memory_space<vmem>>, vector<8x1xf32>,
    %197 = vector.extract_strided_slice %193 {offsets = [0, 8], sizes = [8, 1], strides = [1, 1]} : vector<8x10xf32> to vector<8x1xf32>
    %c0_146 = arith.constant 0 : index
    %c138 = arith.constant 138 : index
    %198 = vector.load %arg8[%c0_146, %c138] : memref<8x196xf32, #tpu.memory_space<vmem>>, vector<8x1xf32>
    tpu.vector_store %arg8[%c0_146, %c138], %197 {strides = array<i32>} : memref<8x196xf32, #tpu.memory_space<vmem>>, vector<8x1xf32>,
    %199 = vector.extract_strided_slice %142 {offsets = [0, 96], sizes = [8, 10], strides = [1, 1]} : vector<8x118xf32> to vector<8x10xf32>
    %c0_147 = arith.constant 0 : index
    %c142 = arith.constant 142 : index
    %200 = vector.load %arg8[%c0_147, %c142] : memref<8x196xf32, #tpu.memory_space<vmem>>, vector<8x10xf32>
    tpu.vector_store %arg8[%c0_147, %c142], %199 {strides = array<i32>} : memref<8x196xf32, #tpu.memory_space<vmem>>, vector<8x10xf32>,
    %201 = vector.extract_strided_slice %199 {offsets = [0, 1], sizes = [8, 1], strides = [1, 1]} : vector<8x10xf32> to vector<8x1xf32>
    %c0_148 = arith.constant 0 : index
    %c141 = arith.constant 141 : index
    %202 = vector.load %arg8[%c0_148, %c141] : memref<8x196xf32, #tpu.memory_space<vmem>>, vector<8x1xf32>
    tpu.vector_store %arg8[%c0_148, %c141], %201 {strides = array<i32>} : memref<8x196xf32, #tpu.memory_space<vmem>>, vector<8x1xf32>,
    %203 = vector.extract_strided_slice %199 {offsets = [0, 8], sizes = [8, 1], strides = [1, 1]} : vector<8x10xf32> to vector<8x1xf32>
    %c0_149 = arith.constant 0 : index
    %c152 = arith.constant 152 : index
    %204 = vector.load %arg8[%c0_149, %c152] : memref<8x196xf32, #tpu.memory_space<vmem>>, vector<8x1xf32>
    tpu.vector_store %arg8[%c0_149, %c152], %203 {strides = array<i32>} : memref<8x196xf32, #tpu.memory_space<vmem>>, vector<8x1xf32>,
    %205 = vector.extract_strided_slice %142 {offsets = [0, 108], sizes = [8, 10], strides = [1, 1]} : vector<8x118xf32> to vector<8x10xf32>
    %c0_150 = arith.constant 0 : index
    %c156 = arith.constant 156 : index
    %206 = vector.load %arg8[%c0_150, %c156] : memref<8x196xf32, #tpu.memory_space<vmem>>, vector<8x10xf32>
    tpu.vector_store %arg8[%c0_150, %c156], %205 {strides = array<i32>} : memref<8x196xf32, #tpu.memory_space<vmem>>, vector<8x10xf32>,
    %207 = vector.extract_strided_slice %205 {offsets = [0, 1], sizes = [8, 1], strides = [1, 1]} : vector<8x10xf32> to vector<8x1xf32>
    %c0_151 = arith.constant 0 : index
    %c155 = arith.constant 155 : index
    %208 = vector.load %arg8[%c0_151, %c155] : memref<8x196xf32, #tpu.memory_space<vmem>>, vector<8x1xf32>
    tpu.vector_store %arg8[%c0_151, %c155], %207 {strides = array<i32>} : memref<8x196xf32, #tpu.memory_space<vmem>>, vector<8x1xf32>,
    %209 = vector.extract_strided_slice %205 {offsets = [0, 8], sizes = [8, 1], strides = [1, 1]} : vector<8x10xf32> to vector<8x1xf32>
    %c0_152 = arith.constant 0 : index
    %c166 = arith.constant 166 : index
    %210 = vector.load %arg8[%c0_152, %c166] : memref<8x196xf32, #tpu.memory_space<vmem>>, vector<8x1xf32>
    tpu.vector_store %arg8[%c0_152, %c166], %209 {strides = array<i32>} : memref<8x196xf32, #tpu.memory_space<vmem>>, vector<8x1xf32>,
    %211 = vector.extract_strided_slice %142 {offsets = [0, 96], sizes = [8, 10], strides = [1, 1]} : vector<8x118xf32> to vector<8x10xf32>
    %c0_153 = arith.constant 0 : index
    %c170 = arith.constant 170 : index
    %212 = vector.load %arg8[%c0_153, %c170] : memref<8x196xf32, #tpu.memory_space<vmem>>, vector<8x10xf32>
    tpu.vector_store %arg8[%c0_153, %c170], %211 {strides = array<i32>} : memref<8x196xf32, #tpu.memory_space<vmem>>, vector<8x10xf32>,
    %213 = vector.extract_strided_slice %211 {offsets = [0, 1], sizes = [8, 1], strides = [1, 1]} : vector<8x10xf32> to vector<8x1xf32>
    %c0_154 = arith.constant 0 : index
    %c169 = arith.constant 169 : index
    %214 = vector.load %arg8[%c0_154, %c169] : memref<8x196xf32, #tpu.memory_space<vmem>>, vector<8x1xf32>
    tpu.vector_store %arg8[%c0_154, %c169], %213 {strides = array<i32>} : memref<8x196xf32, #tpu.memory_space<vmem>>, vector<8x1xf32>,
    %215 = vector.extract_strided_slice %211 {offsets = [0, 8], sizes = [8, 1], strides = [1, 1]} : vector<8x10xf32> to vector<8x1xf32>
    %c0_155 = arith.constant 0 : index
    %c180 = arith.constant 180 : index
    %216 = vector.load %arg8[%c0_155, %c180] : memref<8x196xf32, #tpu.memory_space<vmem>>, vector<8x1xf32>
    tpu.vector_store %arg8[%c0_155, %c180], %215 {strides = array<i32>} : memref<8x196xf32, #tpu.memory_space<vmem>>, vector<8x1xf32>,
    %c0_156 = arith.constant 0 : index
    %c0_157 = arith.constant 0 : index
    %217 = vector.load %arg8[%c0_156, %c0_157] : memref<8x196xf32, #tpu.memory_space<vmem>>, vector<8x166xf32>
    %c0_158 = arith.constant 0 : index
    %c0_159 = arith.constant 0 : index
    %c0_160 = arith.constant 0 : index
    %218 = vector.load %arg3[%c0_158, %c0_159, %c0_160] : memref<9x8x8xf32, #tpu.memory_space<vmem>>, vector<1x8x8xf32>
    %219 = vector.shape_cast %218 : vector<1x8x8xf32> to vector<8x8xf32>
    %cst_161 = arith.constant dense<0.000000e+00> : vector<8x166xf32>
    %220 = tpu.matmul %219, %217, %cst_161 {dimension_numbers = #tpu.dot_dimension_numbers<[1], [0], [0], [1], [0, 0, 1, 1], [], []>} : vector<8x8xf32>, vector<8x166xf32>, vector<8x166xf32> -> vector<8x166xf32>
    %c0_162 = arith.constant 0 : index
    %c1_163 = arith.constant 1 : index
    %221 = vector.load %arg8[%c0_162, %c1_163] : memref<8x196xf32, #tpu.memory_space<vmem>>, vector<8x166xf32>
    %c1_164 = arith.constant 1 : index
    %c0_165 = arith.constant 0 : index
    %c0_166 = arith.constant 0 : index
    %222 = vector.load %arg3[%c1_164, %c0_165, %c0_166] : memref<9x8x8xf32, #tpu.memory_space<vmem>>, vector<1x8x8xf32>
    %223 = vector.shape_cast %222 : vector<1x8x8xf32> to vector<8x8xf32>
    %cst_167 = arith.constant dense<0.000000e+00> : vector<8x166xf32>
    %224 = tpu.matmul %223, %221, %cst_167 {dimension_numbers = #tpu.dot_dimension_numbers<[1], [0], [0], [1], [0, 0, 1, 1], [], []>} : vector<8x8xf32>, vector<8x166xf32>, vector<8x166xf32> -> vector<8x166xf32>
    %225 = arith.addf %220, %224 : vector<8x166xf32>
    %c0_168 = arith.constant 0 : index
    %c2_169 = arith.constant 2 : index
    %226 = vector.load %arg8[%c0_168, %c2_169] : memref<8x196xf32, #tpu.memory_space<vmem>>, vector<8x166xf32>
    %c2_170 = arith.constant 2 : index
    %c0_171 = arith.constant 0 : index
    %c0_172 = arith.constant 0 : index
    %227 = vector.load %arg3[%c2_170, %c0_171, %c0_172] : memref<9x8x8xf32, #tpu.memory_space<vmem>>, vector<1x8x8xf32>
    %228 = vector.shape_cast %227 : vector<1x8x8xf32> to vector<8x8xf32>
    %cst_173 = arith.constant dense<0.000000e+00> : vector<8x166xf32>
    %229 = tpu.matmul %228, %226, %cst_173 {dimension_numbers = #tpu.dot_dimension_numbers<[1], [0], [0], [1], [0, 0, 1, 1], [], []>} : vector<8x8xf32>, vector<8x166xf32>, vector<8x166xf32> -> vector<8x166xf32>
    %230 = arith.addf %225, %229 : vector<8x166xf32>
    %c0_174 = arith.constant 0 : index
    %c14_175 = arith.constant 14 : index
    %231 = vector.load %arg8[%c0_174, %c14_175] : memref<8x196xf32, #tpu.memory_space<vmem>>, vector<8x166xf32>
    %c3_176 = arith.constant 3 : index
    %c0_177 = arith.constant 0 : index
    %c0_178 = arith.constant 0 : index
    %232 = vector.load %arg3[%c3_176, %c0_177, %c0_178] : memref<9x8x8xf32, #tpu.memory_space<vmem>>, vector<1x8x8xf32>
    %233 = vector.shape_cast %232 : vector<1x8x8xf32> to vector<8x8xf32>
    %cst_179 = arith.constant dense<0.000000e+00> : vector<8x166xf32>
    %234 = tpu.matmul %233, %231, %cst_179 {dimension_numbers = #tpu.dot_dimension_numbers<[1], [0], [0], [1], [0, 0, 1, 1], [], []>} : vector<8x8xf32>, vector<8x166xf32>, vector<8x166xf32> -> vector<8x166xf32>
    %235 = arith.addf %230, %234 : vector<8x166xf32>
    %c0_180 = arith.constant 0 : index
    %c15_181 = arith.constant 15 : index
    %236 = vector.load %arg8[%c0_180, %c15_181] : memref<8x196xf32, #tpu.memory_space<vmem>>, vector<8x166xf32>
    %c4_182 = arith.constant 4 : index
    %c0_183 = arith.constant 0 : index
    %c0_184 = arith.constant 0 : index
    %237 = vector.load %arg3[%c4_182, %c0_183, %c0_184] : memref<9x8x8xf32, #tpu.memory_space<vmem>>, vector<1x8x8xf32>
    %238 = vector.shape_cast %237 : vector<1x8x8xf32> to vector<8x8xf32>
    %cst_185 = arith.constant dense<0.000000e+00> : vector<8x166xf32>
    %239 = tpu.matmul %238, %236, %cst_185 {dimension_numbers = #tpu.dot_dimension_numbers<[1], [0], [0], [1], [0, 0, 1, 1], [], []>} : vector<8x8xf32>, vector<8x166xf32>, vector<8x166xf32> -> vector<8x166xf32>
    %240 = arith.addf %235, %239 : vector<8x166xf32>
    %c0_186 = arith.constant 0 : index
    %c16_187 = arith.constant 16 : index
    %241 = vector.load %arg8[%c0_186, %c16_187] : memref<8x196xf32, #tpu.memory_space<vmem>>, vector<8x166xf32>
    %c5_188 = arith.constant 5 : index
    %c0_189 = arith.constant 0 : index
    %c0_190 = arith.constant 0 : index
    %242 = vector.load %arg3[%c5_188, %c0_189, %c0_190] : memref<9x8x8xf32, #tpu.memory_space<vmem>>, vector<1x8x8xf32>
    %243 = vector.shape_cast %242 : vector<1x8x8xf32> to vector<8x8xf32>
    %cst_191 = arith.constant dense<0.000000e+00> : vector<8x166xf32>
    %244 = tpu.matmul %243, %241, %cst_191 {dimension_numbers = #tpu.dot_dimension_numbers<[1], [0], [0], [1], [0, 0, 1, 1], [], []>} : vector<8x8xf32>, vector<8x166xf32>, vector<8x166xf32> -> vector<8x166xf32>
    %245 = arith.addf %240, %244 : vector<8x166xf32>
    %c0_192 = arith.constant 0 : index
    %c28 = arith.constant 28 : index
    %246 = vector.load %arg8[%c0_192, %c28] : memref<8x196xf32, #tpu.memory_space<vmem>>, vector<8x166xf32>
    %c6_193 = arith.constant 6 : index
    %c0_194 = arith.constant 0 : index
    %c0_195 = arith.constant 0 : index
    %247 = vector.load %arg3[%c6_193, %c0_194, %c0_195] : memref<9x8x8xf32, #tpu.memory_space<vmem>>, vector<1x8x8xf32>
    %248 = vector.shape_cast %247 : vector<1x8x8xf32> to vector<8x8xf32>
    %cst_196 = arith.constant dense<0.000000e+00> : vector<8x166xf32>
    %249 = tpu.matmul %248, %246, %cst_196 {dimension_numbers = #tpu.dot_dimension_numbers<[1], [0], [0], [1], [0, 0, 1, 1], [], []>} : vector<8x8xf32>, vector<8x166xf32>, vector<8x166xf32> -> vector<8x166xf32>
    %250 = arith.addf %245, %249 : vector<8x166xf32>
    %c0_197 = arith.constant 0 : index
    %c29_198 = arith.constant 29 : index
    %251 = vector.load %arg8[%c0_197, %c29_198] : memref<8x196xf32, #tpu.memory_space<vmem>>, vector<8x166xf32>
    %c7_199 = arith.constant 7 : index
    %c0_200 = arith.constant 0 : index
    %c0_201 = arith.constant 0 : index
    %252 = vector.load %arg3[%c7_199, %c0_200, %c0_201] : memref<9x8x8xf32, #tpu.memory_space<vmem>>, vector<1x8x8xf32>
    %253 = vector.shape_cast %252 : vector<1x8x8xf32> to vector<8x8xf32>
    %cst_202 = arith.constant dense<0.000000e+00> : vector<8x166xf32>
    %254 = tpu.matmul %253, %251, %cst_202 {dimension_numbers = #tpu.dot_dimension_numbers<[1], [0], [0], [1], [0, 0, 1, 1], [], []>} : vector<8x8xf32>, vector<8x166xf32>, vector<8x166xf32> -> vector<8x166xf32>
    %255 = arith.addf %250, %254 : vector<8x166xf32>
    %c0_203 = arith.constant 0 : index
    %c30_204 = arith.constant 30 : index
    %256 = vector.load %arg8[%c0_203, %c30_204] : memref<8x196xf32, #tpu.memory_space<vmem>>, vector<8x166xf32>
    %c8_205 = arith.constant 8 : index
    %c0_206 = arith.constant 0 : index
    %c0_207 = arith.constant 0 : index
    %257 = vector.load %arg3[%c8_205, %c0_206, %c0_207] : memref<9x8x8xf32, #tpu.memory_space<vmem>>, vector<1x8x8xf32>
    %258 = vector.shape_cast %257 : vector<1x8x8xf32> to vector<8x8xf32>
    %cst_208 = arith.constant dense<0.000000e+00> : vector<8x166xf32>
    %259 = tpu.matmul %258, %256, %cst_208 {dimension_numbers = #tpu.dot_dimension_numbers<[1], [0], [0], [1], [0, 0, 1, 1], [], []>} : vector<8x8xf32>, vector<8x166xf32>, vector<8x166xf32> -> vector<8x166xf32>
    %260 = arith.addf %255, %259 : vector<8x166xf32>
    %c0_209 = arith.constant 0 : index
    %c0_210 = arith.constant 0 : index
    %261 = vector.load %arg5[%c0_209, %c0_210] : memref<1x166xf32, #tpu.memory_space<vmem>>, vector<1x166xf32>
    %262 = vector.broadcast %261 : vector<1x166xf32> to vector<8x166xf32>
    %263 = arith.mulf %260, %262 : vector<8x166xf32>
    %cst_211 = arith.constant dense<0.000000e+00> : vector<8xf32>
    %264 = vector.multi_reduction <add>, %263, %cst_211 [1] : vector<8x166xf32> to vector<8xf32>
    %265 = vector.shape_cast %264 : vector<8xf32> to vector<8x1xf32>
    %cst_212 = arith.constant 0.0069444445 : f32
    %266 = vector.broadcast %cst_212 : f32 to vector<8x1xf32>
    %267 = arith.mulf %265, %266 : vector<8x1xf32>
    %268 = arith.mulf %260, %260 : vector<8x166xf32>
    %269 = vector.broadcast %261 : vector<1x166xf32> to vector<8x166xf32>
    %270 = arith.mulf %268, %269 : vector<8x166xf32>
    %cst_213 = arith.constant dense<0.000000e+00> : vector<8xf32>
    %271 = vector.multi_reduction <add>, %270, %cst_213 [1] : vector<8x166xf32> to vector<8xf32>
    %272 = vector.shape_cast %271 : vector<8xf32> to vector<8x1xf32>
    %cst_214 = arith.constant 0.0069444445 : f32
    %273 = vector.broadcast %cst_214 : f32 to vector<8x1xf32>
    %274 = arith.mulf %272, %273 : vector<8x1xf32>
    %275 = arith.mulf %267, %267 : vector<8x1xf32>
    %276 = arith.subf %274, %275 : vector<8x1xf32>
    %cst_215 = arith.constant 0.000000e+00 : f32
    %277 = vector.broadcast %cst_215 : f32 to vector<8x1xf32>
    %278 = arith.maximumf %276, %277 : vector<8x1xf32>
    %279 = vector.broadcast %267 : vector<8x1xf32> to vector<8x166xf32>
    %280 = arith.subf %260, %279 : vector<8x166xf32>
    %cst_216 = arith.constant 9.99999974E-6 : f32
    %281 = vector.broadcast %cst_216 : f32 to vector<8x1xf32>
    %282 = arith.addf %278, %281 : vector<8x1xf32>
    %283 = math.rsqrt %282 : vector<8x1xf32>
    %284 = vector.broadcast %283 : vector<8x1xf32> to vector<8x166xf32>
    %285 = arith.mulf %280, %284 : vector<8x166xf32>
    %cst_217 = arith.constant 0.000000e+00 : f32
    %286 = vector.broadcast %cst_217 : f32 to vector<8x166xf32>
    %287 = arith.maximumf %285, %286 : vector<8x166xf32>
    %c0_218 = arith.constant 0 : index
    %c0_219 = arith.constant 0 : index
    %c0_220 = arith.constant 0 : index
    %288 = vector.load %arg6[%c0_218, %c0_219, %c0_220] : memref<1x8x168xf32, #tpu.memory_space<vmem>>, vector<1x8x166xf32>
    %289 = vector.shape_cast %288 : vector<1x8x166xf32> to vector<8x166xf32>
    %290 = vector.shape_cast %287 : vector<8x166xf32> to vector<1x8x166xf32>
    tpu.vector_store %arg6[%c0_218, %c0_219, %c0_220], %290 {strides = array<i32>} : memref<1x8x168xf32, #tpu.memory_space<vmem>>, vector<1x8x166xf32>,
    %cst_221 = arith.constant 0.000000e+00 : f32
    %291 = vector.broadcast %cst_221 : f32 to vector<8x2xf32>
    %c0_222 = arith.constant 0 : index
    %c0_223 = arith.constant 0 : index
    %c166_224 = arith.constant 166 : index
    %292 = vector.load %arg6[%c0_222, %c0_223, %c166_224] : memref<1x8x168xf32, #tpu.memory_space<vmem>>, vector<1x8x2xf32>
    %293 = vector.shape_cast %292 : vector<1x8x2xf32> to vector<8x2xf32>
    %294 = vector.shape_cast %291 : vector<8x2xf32> to vector<1x8x2xf32>
    tpu.vector_store %arg6[%c0_222, %c0_223, %c166_224], %294 {strides = array<i32>} : memref<1x8x168xf32, #tpu.memory_space<vmem>>, vector<1x8x2xf32>,
    return
  }
  func.func @transform_0(%arg0: i32) -> (i32, i32, i32) {
    %c0_i32 = arith.constant 0 : i32
    %c0_i32_0 = arith.constant 0 : i32
    %c0_i32_1 = arith.constant 0 : i32
    return %arg0, %c0_i32, %c0_i32_0 : i32, i32, i32
  }
  func.func @transform_1(%arg0: i32) -> (i32, i32, i32) {
    %c0_i32 = arith.constant 0 : i32
    %c0_i32_0 = arith.constant 0 : i32
    %c0_i32_1 = arith.constant 0 : i32
    %c0_i32_2 = arith.constant 0 : i32
    return %c0_i32, %c0_i32_0, %c0_i32_1 : i32, i32, i32
  }
  func.func @transform_2(%arg0: i32) -> (i32, i32, i32) {
    %c0_i32 = arith.constant 0 : i32
    %c0_i32_0 = arith.constant 0 : i32
    %c0_i32_1 = arith.constant 0 : i32
    %c0_i32_2 = arith.constant 0 : i32
    return %c0_i32, %c0_i32_0, %c0_i32_1 : i32, i32, i32
  }
  func.func @transform_3(%arg0: i32) -> (i32, i32) {
    %c0_i32 = arith.constant 0 : i32
    %c0_i32_0 = arith.constant 0 : i32
    %c0_i32_1 = arith.constant 0 : i32
    return %c0_i32, %c0_i32_0 : i32, i32
  }
  func.func @transform_4(%arg0: i32) -> (i32, i32) {
    %c0_i32 = arith.constant 0 : i32
    %c0_i32_0 = arith.constant 0 : i32
    %c0_i32_1 = arith.constant 0 : i32
    return %c0_i32, %c0_i32_0 : i32, i32
  }
  func.func @transform_5(%arg0: i32) -> (i32, i32, i32) {
    %c0_i32 = arith.constant 0 : i32
    %c0_i32_0 = arith.constant 0 : i32
    %c0_i32_1 = arith.constant 0 : i32
    return %arg0, %c0_i32, %c0_i32_0 : i32, i32, i32
  }
}

</mosaic_0001>

<llo_original>
// kernel: down_conv_forward.1
$region0: #{down_conv_forward.1}
  #allocation0 [shape = 'u32[]', space=smem, size = 0x4, offset = 0x4, fixed_abs, tag = 'smem constant byte address 0x4 - core index']
  #allocation1 [shape = 'u32[144,128]{1,0:T(1,128)}', space=vmem, size = 0x12000, scoped, tag = 'internal scratch']
  #allocation2 [shape = 'f32[4,144]{1,0:T(4,128)}', space=vmem, size = 0x1000, scoped, tag = 'scratch operand']
  #allocation3 [shape = 'f32[8,196]{1,0:T(8,128)}', space=vmem, size = 0x2000, scoped, tag = 'scratch operand']
  %s0 = inlined_call_operand.vmem [shape: f32[2,4,64], index: 0, kind: input, shape index: {}]
  %s1 = inlined_call_operand.vmem [shape: f32[9,8,4], index: 1, kind: input, shape index: {}]
  %s2 = inlined_call_operand.vmem [shape: f32[9,8,8], index: 2, kind: input, shape index: {}]
  %s3 = inlined_call_operand.vmem [shape: f32[1,118], index: 3, kind: input, shape index: {}]
  %s4 = inlined_call_operand.vmem [shape: f32[1,166], index: 4, kind: input, shape index: {}]
  %s5 = inlined_call_operand.vmem [shape: f32[2,8,168], index: 5, kind: output, shape index: {}]
  %s6 = sld [smem:[#allocation0]]
  $region53: #{down_conv_forward.1} parent=0
    _
  %s8 = ssub.s32 1, %s6
  %s9 = scalar_select 0, %s8, %s6
  loop: start=0, step=1, limit=4
  $region2: #{down_conv_forward.1} parent=0 // loop_pre_header
    _
  $region3: #{down_conv_forward.1} parent=0 // loop_header
    %s11 = sphi 0, %s15
    %p12 = scmp.ge.s32.totalorder %s11, 4
    %s21 = sphi 0, %s23
    %s24 = sphi 0, %s21
    %s25 = sphi 0, %s24
    %s41 = sphi 0, %s25
    %s45 = sphi 0, %s45
    %s47 = sphi 0, %s45
    %s48 = sphi 0, %s47
    %s62 = sphi 0, %s48
    %s66 = sphi 0, %s66
    %s68 = sphi 0, %s66
    %s69 = sphi 0, %s68
    %s83 = sphi 0, %s69
    %s87 = sphi 0, %s87
    %s89 = sphi 0, %s87
    %s90 = sphi 0, %s89
    %s104 = sphi 0, %s90
    %s108 = sphi 0, %s108
    %s110 = sphi 0, %s108
    %s111 = sphi 0, %s110
    %s125 = sphi 0, %s111
    %s131 = sphi 0, %s133
    %s134 = sphi 0, %s131
    %s135 = sphi 0, %s134
    %s151 = sphi 0, %s135
  $region4: #{down_conv_forward.1} parent=0 // loop_header_branch
    %14 = sbr.rel (%p12) target = $region8
  $region5: #{down_conv_forward.1} parent=0 // loop_body
    %s16 = ssub.s32 %s11, 1
    %s17 = ssub.s32 %s11, 2
    %s18 = sadd.s32 %s11, 1
    %s19 = ssub.s32 %s11, %s18
    %p20 = scmp.eq.s32.totalorder %s19, 0
    %s22 = sadd.s32 %s21, 1
    %s23 = scalar_select %p20, %s21, %s22
    %p26 = pneg %p20
    %p27 = scmp.eq.s32.totalorder %s11, 1
    %p28 = por %p26, %p27
    %p29 = scmp.ne.s32.totalorder %s21, %s24
    %p30 = scmp.eq.s32.totalorder %s11, 0
    %p31 = por %p29, %p30
    %p32 = scmp.ne.s32.totalorder %s21, %s24
    %p33 = scmp.eq.s32.totalorder %s16, 1
    %p34 = por %p32, %p33
    %p35 = scmp.ne.s32.totalorder %s24, %s25
    %p36 = scmp.eq.s32.totalorder %s16, 0
    %p37 = por %p35, %p36
    %p38 = scmp.ne.s32.totalorder %s24, %s25
    %p39 = scmp.eq.s32.totalorder %s17, 1
    %p40 = por %p38, %p39
    %p42 = scmp.ne.s32.totalorder %s25, %s41
    %p43 = scmp.eq.s32.totalorder %s17, 0
    %p44 = por %p42, %p43
    %s46 = sadd.s32 %s45, 1
    %p49 = scmp.eq.s32.totalorder %s11, 1
    %p50 = scmp.ne.s32.totalorder %s45, %s47
    %p51 = scmp.eq.s32.totalorder %s11, 0
    %p52 = por %p50, %p51
    %p53 = scmp.ne.s32.totalorder %s45, %s47
    %p54 = scmp.eq.s32.totalorder %s16, 1
    %p55 = por %p53, %p54
    %p56 = scmp.ne.s32.totalorder %s47, %s48
    %p57 = scmp.eq.s32.totalorder %s16, 0
    %p58 = por %p56, %p57
    %p59 = scmp.ne.s32.totalorder %s47, %s48
    %p60 = scmp.eq.s32.totalorder %s17, 1
    %p61 = por %p59, %p60
    %p63 = scmp.ne.s32.totalorder %s48, %s62
    %p64 = scmp.eq.s32.totalorder %s17, 0
    %p65 = por %p63, %p64
    %s67 = sadd.s32 %s66, 1
    %p70 = scmp.eq.s32.totalorder %s11, 1
    %p71 = scmp.ne.s32.totalorder %s66, %s68
    %p72 = scmp.eq.s32.totalorder %s11, 0
    %p73 = por %p71, %p72
    %p74 = scmp.ne.s32.totalorder %s66, %s68
    %p75 = scmp.eq.s32.totalorder %s16, 1
    %p76 = por %p74, %p75
    %p77 = scmp.ne.s32.totalorder %s68, %s69
    %p78 = scmp.eq.s32.totalorder %s16, 0
    %p79 = por %p77, %p78
    %p80 = scmp.ne.s32.totalorder %s68, %s69
    %p81 = scmp.eq.s32.totalorder %s17, 1
    %p82 = por %p80, %p81
    %p84 = scmp.ne.s32.totalorder %s69, %s83
    %p85 = scmp.eq.s32.totalorder %s17, 0
    %p86 = por %p84, %p85
    %s88 = sadd.s32 %s87, 1
    %p91 = scmp.eq.s32.totalorder %s11, 1
    %p92 = scmp.ne.s32.totalorder %s87, %s89
    %p93 = scmp.eq.s32.totalorder %s11, 0
    %p94 = por %p92, %p93
    %p95 = scmp.ne.s32.totalorder %s87, %s89
    %p96 = scmp.eq.s32.totalorder %s16, 1
    %p97 = por %p95, %p96
    %p98 = scmp.ne.s32.totalorder %s89, %s90
    %p99 = scmp.eq.s32.totalorder %s16, 0
    %p100 = por %p98, %p99
    %p101 = scmp.ne.s32.totalorder %s89, %s90
    %p102 = scmp.eq.s32.totalorder %s17, 1
    %p103 = por %p101, %p102
    %p105 = scmp.ne.s32.totalorder %s90, %s104
    %p106 = scmp.eq.s32.totalorder %s17, 0
    %p107 = por %p105, %p106
    %s109 = sadd.s32 %s108, 1
    %p112 = scmp.eq.s32.totalorder %s11, 1
    %p113 = scmp.ne.s32.totalorder %s108, %s110
    %p114 = scmp.eq.s32.totalorder %s11, 0
    %p115 = por %p113, %p114
    %p116 = scmp.ne.s32.totalorder %s108, %s110
    %p117 = scmp.eq.s32.totalorder %s16, 1
    %p118 = por %p116, %p117
    %p119 = scmp.ne.s32.totalorder %s110, %s111
    %p120 = scmp.eq.s32.totalorder %s16, 0
    %p121 = por %p119, %p120
    %p122 = scmp.ne.s32.totalorder %s110, %s111
    %p123 = scmp.eq.s32.totalorder %s17, 1
    %p124 = por %p122, %p123
    %p126 = scmp.ne.s32.totalorder %s111, %s125
    %p127 = scmp.eq.s32.totalorder %s17, 0
    %p128 = por %p126, %p127
    %s129 = ssub.s32 %s11, %s18
    %p130 = scmp.eq.s32.totalorder %s129, 0
    %s132 = sadd.s32 %s131, 1
    %s133 = scalar_select %p130, %s131, %s132
    %p136 = pneg %p130
    %p137 = scmp.eq.s32.totalorder %s11, 1
    %p138 = por %p136, %p137
    %p139 = scmp.ne.s32.totalorder %s131, %s134
    %p140 = scmp.eq.s32.totalorder %s11, 0
    %p141 = por %p139, %p140
    %p142 = scmp.ne.s32.totalorder %s131, %s134
    %p143 = scmp.eq.s32.totalorder %s16, 1
    %p144 = por %p142, %p143
    %p145 = scmp.ne.s32.totalorder %s134, %s135
    %p146 = scmp.eq.s32.totalorder %s16, 0
    %p147 = por %p145, %p146
    %p148 = scmp.ne.s32.totalorder %s134, %s135
    %p149 = scmp.eq.s32.totalorder %s17, 1
    %p150 = por %p148, %p149
    %p152 = scmp.ne.s32.totalorder %s135, %s151
    %p153 = scmp.eq.s32.totalorder %s17, 0
    %p154 = por %p152, %p153
    %p155 = scmp.le.s32.totalorder 1, %s11
    %p156 = scmp.lt.s32.totalorder %s11, 3
    %p157 = pnand %p155, %p156
    %p158 = pneg %p157
    // Predicated region
    $region9: #{down_conv_forward.1} parent=5 // pred_check
      _
    $region10: #{down_conv_forward.1} parent=5 // pred_check_branch
      %160 = sbr.rel (%p157) target = $region12
    $region11: #{down_conv_forward.1} parent=5 // pred_region
      %s161 = ssub.s32 %s11, 1
      // Predicated region
      $region13: #{down_conv_forward.1} parent=11 // pred_check
        %p162 = pneg %p58
      $region14: #{down_conv_forward.1} parent=11 // pred_check_branch
        %164 = sbr.rel (%p162) target = $region16
      $region15: #{down_conv_forward.1} parent=11 // pred_region
        _
      $region16: #{down_conv_forward.1} parent=11 // pred_fallthru
        _
      // Predicated region
      $region17: #{down_conv_forward.1} parent=11 // pred_check
        %p165 = pneg %p79
      $region18: #{down_conv_forward.1} parent=11 // pred_check_branch
        %167 = sbr.rel (%p165) target = $region20
      $region19: #{down_conv_forward.1} parent=11 // pred_region
        _
      $region20: #{down_conv_forward.1} parent=11 // pred_fallthru
        _
      // Predicated region
      $region21: #{down_conv_forward.1} parent=11 // pred_check
        %p168 = pneg %p100
      $region22: #{down_conv_forward.1} parent=11 // pred_check_branch
        %170 = sbr.rel (%p168) target = $region24
      $region23: #{down_conv_forward.1} parent=11 // pred_region
        _
      $region24: #{down_conv_forward.1} parent=11 // pred_fallthru
        _
      // Predicated region
      $region25: #{down_conv_forward.1} parent=11 // pred_check
        %p171 = pneg %p121
      $region26: #{down_conv_forward.1} parent=11 // pred_check_branch
        %173 = sbr.rel (%p171) target = $region28
      $region27: #{down_conv_forward.1} parent=11 // pred_region
        _
      $region28: #{down_conv_forward.1} parent=11 // pred_fallthru
        _
    $region12: #{down_conv_forward.1} parent=5 // pred_fallthru
      _
    %p174 = scmp.lt.s32.totalorder %s11, 2
    // Predicated region
    $region29: #{down_conv_forward.1} parent=5 // pred_check
      %p175 = pneg %p174
    $region30: #{down_conv_forward.1} parent=5 // pred_check_branch
      %177 = sbr.rel (%p175) target = $region32
    $region31: #{down_conv_forward.1} parent=5 // pred_region
      // Predicated region
      $region33: #{down_conv_forward.1} parent=31 // pred_check
        %p178 = pneg %p31
      $region34: #{down_conv_forward.1} parent=31 // pred_check_branch
        %180 = sbr.rel (%p178) target = $region36
      $region35: #{down_conv_forward.1} parent=31 // pred_region
        %p181 = scmp.lt.s32.totalorder %s11, 1
        %s182 = scalar_select %p181, %s11, 1
        %s183 = smul.addr %s182, 4
        %s184 = scalar_lea.vmem %s0, %s183
      $region36: #{down_conv_forward.1} parent=31 // pred_fallthru
        _
    $region32: #{down_conv_forward.1} parent=5 // pred_fallthru
      _
    %p185 = scmp.le.s32.totalorder 1, %s11
    %p186 = scmp.lt.s32.totalorder %s11, 3
    %p187 = pnand %p185, %p186
    %p188 = pneg %p187
    // Predicated region
    $region37: #{down_conv_forward.1} parent=5 // pred_check
      _
    $region38: #{down_conv_forward.1} parent=5 // pred_check_branch
      %190 = sbr.rel (%p187) target = $region40
    $region39: #{down_conv_forward.1} parent=5 // pred_region
      %s191 = ssub.s32 %s11, 1
      %p192 = scmp.lt.s32.totalorder %s16, 1
      %s193 = scalar_select %p192, %s16, 1
      %s194 = smul.addr %s193, 4
      %s195 = scalar_lea.vmem %s0, %s194
      %p196 = pneg %p37
      %p197 = pneg %p34
      %p198 = pneg %p58
      %p199 = pneg %p55
      %p200 = pneg %p79
      %p201 = pneg %p76
      %p202 = pneg %p100
      %p203 = pneg %p97
      %p204 = pneg %p121
      %p205 = pneg %p118
      %p206 = pneg %p147
      %p207 = pneg %p144
      %p208 = scmp.lt.s32.totalorder %s16, 1
      %s209 = scalar_select %p208, %s16, 1
      %s210 = smul.addr %s209, 2
      %s211 = smul.addr %s210, 8
      %s212 = scalar_lea.vmem %s5, %s211
      %p213 = scmp.lt.s32.totalorder %s16, 1
      %s214 = scalar_select %p213, %s16, 1
      %s215 = smul.addr %s214, 4
      %s216 = scalar_lea.vmem %s0, %s215
      %p217 = scmp.lt.s32.totalorder %s16, 1
      %s218 = scalar_select %p217, %s16, 1
      %s219 = smul.addr %s218, 2
      %s220 = smul.addr %s219, 8
      %s221 = scalar_lea.vmem %s5, %s220
      %vm222 = vcmask 1043456
      %vm223 = vcmask 130052
      %vm224 = vmor %vm223, %vm222
      %225 = vst.msk [vmem:[#allocation2] sm:$0xff] %vm224, 0.0
      %v226 = vld [vmem:[%s216] sm:$0xf]
      %228 = vrot.lane.b32.xlu0 %v226, 6
      %v229 = vpop.permute.xlu0 %228
      %vm231 = vcmask 175216
      %232 = vst.msk [vmem:[#allocation2] sm:$0xf] %vm231, %v229
      %233 = vrot.lane.b32.xlu0 %v226, 4
      %v234 = vpop.permute.xlu0 %233
      %vm236 = vcmask 109672
      %237 = vst.msk [vmem:[#allocation2] sm:$0xf] %vm236, %v234
      %238 = vrot.lane.b32.xlu0 %v226, 8
      %v239 = vpop.permute.xlu0 %238
      %vm241 = vcmask 183472
      %242 = vst.msk [vmem:[#allocation2] sm:$0xf] %vm241, %v239
      %v243 = vld [vmem:[%s216] sm:$0xf]
      %245 = vrot.lane.b32.xlu0 %v243, 26
      %v246 = vpop.permute.xlu0 %245
      %vm248 = vcmask 273616
      %249 = vst.msk [vmem:[#allocation2] sm:$0xf] %vm248, %v246
      %250 = vrot.lane.b32.xlu0 %v243, 24
      %v251 = vpop.permute.xlu0 %250
      %vm253 = vcmask 208072
      %254 = vst.msk [vmem:[#allocation2] sm:$0xf] %vm253, %v251
      %255 = vrot.lane.b32.xlu0 %v243, 28
      %v256 = vpop.permute.xlu0 %255
      %vm258 = vcmask 281872
      %259 = vst.msk [vmem:[#allocation2] sm:$0xf] %vm258, %v256
      %v260 = vld [vmem:[%s216] sm:$0xf]
      %262 = vrot.lane.b32.xlu0 %v260, 30
      %v263 = vpop.permute.xlu0 %262
      %vm265 = vcmask 372016
      %266 = vst.msk [vmem:[#allocation2] sm:$0xf] %vm265, %v263
      %267 = vrot.lane.b32.xlu0 %v260, 28
      %v268 = vpop.permute.xlu0 %267
      %vm270 = vcmask 306472
      %271 = vst.msk [vmem:[#allocation2] sm:$0xf] %vm270, %v268
      %272 = vrot.lane.b32.xlu0 %v260, 32
      %v273 = vpop.permute.xlu0 %272
      %vm275 = vcmask 380272
      %276 = vst.msk [vmem:[#allocation2] sm:$0xf] %vm275, %v273
      %v277 = vld [vmem:[%s216] sm:$0xf]
      %279 = vrot.lane.b32.xlu0 %v277, 34
      %v280 = vpop.permute.xlu0 %279
      %vm282 = vcmask 470416
      %283 = vst.msk [vmem:[#allocation2] sm:$0xf] %vm282, %v280
      %284 = vrot.lane.b32.xlu0 %v277, 32
      %v285 = vpop.permute.xlu0 %284
      %vm287 = vcmask 404872
      %288 = vst.msk [vmem:[#allocation2] sm:$0xf] %vm287, %v285
      %289 = vrot.lane.b32.xlu0 %v277, 36
      %v290 = vpop.permute.xlu0 %289
      %vm292 = vcmask 478672
      %293 = vst.msk [vmem:[#allocation2] sm:$0xf] %vm292, %v290
      %v294 = vld [vmem:[%s216] sm:$0xf]
      %296 = vrot.lane.b32.xlu0 %v294, 38
      %v297 = vpop.permute.xlu0 %296
      %vm299 = vcmask 568816
      %300 = vst.msk [vmem:[#allocation2] sm:$0xf] %vm299, %v297
      %301 = vrot.lane.b32.xlu0 %v294, 36
      %v302 = vpop.permute.xlu0 %301
      %vm304 = vcmask 503272
      %305 = vst.msk [vmem:[#allocation2] sm:$0xf] %vm304, %v302
      %306 = vrot.lane.b32.xlu0 %v294, 40
      %v307 = vpop.permute.xlu0 %306
      %vm309 = vcmask 577072
      %310 = vst.msk [vmem:[#allocation2] sm:$0xf] %vm309, %v307
      %v311 = vld [vmem:[%s216] sm:$0xf]
      %313 = vrot.lane.b32.xlu0 %v311, 42
      %v314 = vpop.permute.xlu0 %313
      %vm316 = vcmask 667216
      %317 = vst.msk [vmem:[#allocation2] sm:$0xf] %vm316, %v314
      %318 = vrot.lane.b32.xlu0 %v311, 40
      %v319 = vpop.permute.xlu0 %318
      %vm321 = vcmask 601672
      %322 = vst.msk [vmem:[#allocation2] sm:$0xf] %vm321, %v319
      %323 = vrot.lane.b32.xlu0 %v311, 44
      %v324 = vpop.permute.xlu0 %323
      %vm326 = vcmask 675472
      %327 = vst.msk [vmem:[#allocation2] sm:$0xf] %vm326, %v324
      %v328 = vld [vmem:[%s216] sm:$0xf]
      %330 = vrot.lane.b32.xlu0 %v328, 46
      %v331 = vpop.permute.xlu0 %330
      %vm333 = vcmask 765616
      %334 = vst.msk [vmem:[#allocation2] sm:$0xf] %vm333, %v331
      %335 = vrot.lane.b32.xlu0 %v328, 44
      %v336 = vpop.permute.xlu0 %335
      %vm338 = vcmask 700072
      %339 = vst.msk [vmem:[#allocation2] sm:$0xf] %vm338, %v336
      %340 = vrot.lane.b32.xlu0 %v328, 48
      %v341 = vpop.permute.xlu0 %340
      %vm343 = vcmask 773872
      %344 = vst.msk [vmem:[#allocation2] sm:$0xf] %vm343, %v341
      %v345 = vld [vmem:[%s216] sm:$0xf]
      %347 = vrot.lane.b32.xlu0 %v345, 50
      %v348 = vpop.permute.xlu0 %347
      %vm350 = vcmask 864016
      %351 = vst.msk [vmem:[#allocation2] sm:$0xf] %vm350, %v348
      %352 = vrot.lane.b32.xlu0 %v345, 48
      %v353 = vpop.permute.xlu0 %352
      %vm355 = vcmask 798472
      %356 = vst.msk [vmem:[#allocation2] sm:$0xf] %vm355, %v353
      %357 = vrot.lane.b32.xlu0 %v345, 52
      %v358 = vpop.permute.xlu0 %357
      %vm360 = vcmask 872272
      %361 = vst.msk [vmem:[#allocation2] sm:$0xf] %vm360, %v358
      %v362 = vld [vmem:[%s216] sm:$0xf]
      %364 = vrot.lane.b32.xlu0 %v362, 54
      %v365 = vpop.permute.xlu0 %364
      %vm367 = vcmask 962416
      %368 = vst.msk [vmem:[#allocation2] sm:$0xf] %vm367, %v365
      %369 = vrot.lane.b32.xlu0 %v362, 52
      %v370 = vpop.permute.xlu0 %369
      %vm372 = vcmask 896872
      %373 = vst.msk [vmem:[#allocation2] sm:$0xf] %vm372, %v370
      %374 = vrot.lane.b32.xlu0 %v362, 56
      %v375 = vpop.permute.xlu0 %374
      %vm377 = vcmask 970672
      %378 = vst.msk [vmem:[#allocation2] sm:$0xf] %vm377, %v375
      %v379 = vld [vmem:[%s216] sm:$0xf]
      %381 = vrot.lane.b32.xlu0 %v379, 74
      %v382 = vpop.permute.xlu0 %381
      %v383 = vrot.slane %v382, 4
      %vm384 = vcmask 605184
      %v385 = vsel %vm384, %v383, %v382
      %vm387 = vcmask 1044432
      %vm388 = vcmask 15364
      %vm389 = vmor %vm388, %vm387
      %390 = vst.msk [vmem:[#allocation2] sm:$0xff] %vm389, %v385
      %391 = vrot.lane.b32.xlu0 %v379, 72
      %v392 = vpop.permute.xlu0 %391
      %vm394 = vcmask 995272
      %395 = vst.msk [vmem:[#allocation2] sm:$0xf] %vm394, %v392
      %396 = vrot.lane.b32.xlu0 %v379, 76
      %v397 = vpop.permute.xlu0 %396
      %vm399 = vcmask 19472
      %400 = vst.msk [vmem:[#allocation2 + $0x4] sm:$0xf] %vm399, %v397
      %v401 = vld [vmem:[#allocation2] sm:$0xf]
      %v402 = vld [vmem:[%s1] sm:$0xff]
      %s403 = scalar_lea.vmem %s1, 8
      %v404 = vld [vmem:[%s403] sm:$0xff]
      %406 = vrot.lane.b32.xlu0 %v401, 127
      %v407 = vpop.permute.xlu0 %406
      %vm408 = vcmask 31744
      %v410 = vsel %vm408, %v404, 0
      %v412 = vsel %vm222, %v407, 0
      %414 = vmatprep.subr.mxu0 0.0
      %415 = vmatpush1.msra.mxu0 %v412
      %416 = vmatprep.subr.mxu0 0.0
      %417 = vmatpush1.msra.mxu0 0.0
      %418 = vmatprep.subr.mxu0 0.0
      %419 = vmatpush1.msra.mxu0 0.0
      %420 = vmatprep.subr.mxu0 0.0
      %421 = vmatpush1.msra.mxu0 0.0
      %422 = vmatprep.subr.mxu0 0.0
      %423 = vmatpush1.msra.mxu0 0.0
      %424 = vmatprep.subr.mxu0 0.0
      %425 = vmatpush1.msra.mxu0 0.0
      %426 = vmatprep.subr.mxu0 0.0
      %427 = vmatpush1.msra.mxu0 0.0
      %428 = vmatprep.subr.mxu0 0.0
      %429 = vmatpush1.msra.mxu0 0.0
      %430 = vmatprep.subr.mxu0 0.0
      %431 = vmatpush1.msra.mxu0 0.0
      %432 = vmatprep.subr.mxu0 0.0
      %433 = vmatpush1.msra.mxu0 0.0
      %434 = vmatprep.subr.mxu0 0.0
      %435 = vmatpush1.msra.mxu0 0.0
      %436 = vmatprep.subr.mxu0 0.0
      %437 = vmatpush1.msra.mxu0 0.0
      %438 = vmatprep.subr.mxu0 0.0
      %439 = vmatpush1.msra.mxu0 0.0
      %440 = vmatprep.subr.mxu0 0.0
      %441 = vmatpush1.msra.mxu0 0.0
      %442 = vmatprep.subr.mxu0 0.0
      %443 = vmatpush1.msra.mxu0 0.0
      %444 = vmatprep.subr.mxu0 0.0
      %445 = vmatpush1.msra.mxu0 0.0
      %446 = vmatprep.subr.mxu0 0.0
      %447 = vmatpush1.msra.mxu0 0.0
      %448 = vmatprep.subr.mxu0 0.0
      %449 = vmatpush1.msra.mxu0 0.0
      %450 = vmatprep.subr.mxu0 0.0
      %451 = vmatpush1.msra.mxu0 0.0
      %452 = vmatprep.subr.mxu0 0.0
      %453 = vmatpush1.msra.mxu0 0.0
      %454 = vmatprep.subr.mxu0 0.0
      %455 = vmatpush1.msra.mxu0 0.0
      %456 = vmatprep.subr.mxu0 0.0
      %457 = vmatpush1.msra.mxu0 0.0
      %458 = vmatprep.subr.mxu0 0.0
      %459 = vmatpush1.msra.mxu0 0.0
      %460 = vmatprep.subr.mxu0 0.0
      %461 = vmatpush1.msra.mxu0 0.0
      %462 = vmatprep.subr.mxu0 0.0
      %463 = vmatpush1.msra.mxu0 0.0
      %464 = vmatprep.subr.mxu0 0.0
      %465 = vmatpush1.msra.mxu0 0.0
      %466 = vmatprep.subr.mxu0 0.0
      %467 = vmatpush1.msra.mxu0 0.0
      %468 = vmatprep.subr.mxu0 0.0
      %469 = vmatpush1.msra.mxu0 0.0
      %470 = vmatprep.subr.mxu0 0.0
      %471 = vmatpush1.msra.mxu0 0.0
      %472 = vmatprep.subr.mxu0 0.0
      %473 = vmatpush1.msra.mxu0 0.0
      %474 = vmatprep.subr.mxu0 0.0
      %475 = vmatpush1.msra.mxu0 0.0
      %476 = vmatprep.subr.mxu0 0.0
      %477 = vmatpush1.msra.mxu0 0.0
      %478 = vmatprep.mubr.f32.mxu0 0.0
      %479 = vmatmul.mubr.f32.gmra.mrb[0].mxu0 %v410
      %v480 = vpop.f32.mrb[0].mxu0
      %v481 = vadd.f32 0.0, %v480
      %v482 = vpop.f32.mrb[0].mxu0
      %483 = vdwg.mxu0
      %v485 = vsel %vm408, %v402, 0
      %v487 = vsel %vm222, %v401, 0
      %489 = vmatprep.subr.mxu0 0.0
      %490 = vmatpush1.msra.mxu0 %v487
      %491 = vmatprep.subr.mxu0 0.0
      %492 = vmatpush1.msra.mxu0 0.0
      %493 = vmatprep.subr.mxu0 0.0
      %494 = vmatpush1.msra.mxu0 0.0
      %495 = vmatprep.subr.mxu0 0.0
      %496 = vmatpush1.msra.mxu0 0.0
      %497 = vmatprep.subr.mxu0 0.0
      %498 = vmatpush1.msra.mxu0 0.0
      %499 = vmatprep.subr.mxu0 0.0
      %500 = vmatpush1.msra.mxu0 0.0
      %501 = vmatprep.subr.mxu0 0.0
      %502 = vmatpush1.msra.mxu0 0.0
      %503 = vmatprep.subr.mxu0 0.0
      %504 = vmatpush1.msra.mxu0 0.0
      %505 = vmatprep.subr.mxu0 0.0
      %506 = vmatpush1.msra.mxu0 0.0
      %507 = vmatprep.subr.mxu0 0.0
      %508 = vmatpush1.msra.mxu0 0.0
      %509 = vmatprep.subr.mxu0 0.0
      %510 = vmatpush1.msra.mxu0 0.0
      %511 = vmatprep.subr.mxu0 0.0
      %512 = vmatpush1.msra.mxu0 0.0
      %513 = vmatprep.subr.mxu0 0.0
      %514 = vmatpush1.msra.mxu0 0.0
      %515 = vmatprep.subr.mxu0 0.0
      %516 = vmatpush1.msra.mxu0 0.0
      %517 = vmatprep.subr.mxu0 0.0
      %518 = vmatpush1.msra.mxu0 0.0
      %519 = vmatprep.subr.mxu0 0.0
      %520 = vmatpush1.msra.mxu0 0.0
      %521 = vmatprep.subr.mxu0 0.0
      %522 = vmatpush1.msra.mxu0 0.0
      %523 = vmatprep.subr.mxu0 0.0
      %524 = vmatpush1.msra.mxu0 0.0
      %525 = vmatprep.subr.mxu0 0.0
      %526 = vmatpush1.msra.mxu0 0.0
      %527 = vmatprep.subr.mxu0 0.0
      %528 = vmatpush1.msra.mxu0 0.0
      %529 = vmatprep.subr.mxu0 0.0
      %530 = vmatpush1.msra.mxu0 0.0
      %531 = vmatprep.subr.mxu0 0.0
      %532 = vmatpush1.msra.mxu0 0.0
      %533 = vmatprep.subr.mxu0 0.0
      %534 = vmatpush1.msra.mxu0 0.0
      %535 = vmatprep.subr.mxu0 0.0
      %536 = vmatpush1.msra.mxu0 0.0
      %537 = vmatprep.subr.mxu0 0.0
      %538 = vmatpush1.msra.mxu0 0.0
      %539 = vmatprep.subr.mxu0 0.0
      %540 = vmatpush1.msra.mxu0 0.0
      %541 = vmatprep.subr.mxu0 0.0
      %542 = vmatpush1.msra.mxu0 0.0
      %543 = vmatprep.subr.mxu0 0.0
      %544 = vmatpush1.msra.mxu0 0.0
      %545 = vmatprep.subr.mxu0 0.0
      %546 = vmatpush1.msra.mxu0 0.0
      %547 = vmatprep.subr.mxu0 0.0
      %548 = vmatpush1.msra.mxu0 0.0
      %549 = vmatprep.subr.mxu0 0.0
      %550 = vmatpush1.msra.mxu0 0.0
      %551 = vmatprep.subr.mxu0 0.0
      %552 = vmatpush1.msra.mxu0 0.0
      %553 = vmatprep.mubr.f32.mxu0 0.0
      %554 = vmatmul.mubr.f32.gmra.mrb[0].mxu0 %v485
      %v555 = vpop.f32.mrb[0].mxu0
      %v556 = vadd.f32 %v481, %v555
      %v557 = vpop.f32.mrb[0].mxu0
      %558 = vdwg.mxu0
      %v559 = vld [vmem:[#allocation2] sm:$0xf]
      %s560 = scalar_lea.vmem %s1, 16
      %v561 = vld [vmem:[%s560] sm:$0xff]
      %563 = vrot.lane.b32.xlu0 %v559, 126
      %v564 = vpop.permute.xlu0 %563
      %v566 = vsel %vm408, %v561, 0
      %v568 = vsel %vm222, %v564, 0
      %570 = vmatprep.subr.mxu0 0.0
      %571 = vmatpush1.msra.mxu0 %v568
      %572 = vmatprep.subr.mxu0 0.0
      %573 = vmatpush1.msra.mxu0 0.0
      %574 = vmatprep.subr.mxu0 0.0
      %575 = vmatpush1.msra.mxu0 0.0
      %576 = vmatprep.subr.mxu0 0.0
      %577 = vmatpush1.msra.mxu0 0.0
      %578 = vmatprep.subr.mxu0 0.0
      %579 = vmatpush1.msra.mxu0 0.0
      %580 = vmatprep.subr.mxu0 0.0
      %581 = vmatpush1.msra.mxu0 0.0
      %582 = vmatprep.subr.mxu0 0.0
      %583 = vmatpush1.msra.mxu0 0.0
      %584 = vmatprep.subr.mxu0 0.0
      %585 = vmatpush1.msra.mxu0 0.0
      %586 = vmatprep.subr.mxu0 0.0
      %587 = vmatpush1.msra.mxu0 0.0
      %588 = vmatprep.subr.mxu0 0.0
      %589 = vmatpush1.msra.mxu0 0.0
      %590 = vmatprep.subr.mxu0 0.0
      %591 = vmatpush1.msra.mxu0 0.0
      %592 = vmatprep.subr.mxu0 0.0
      %593 = vmatpush1.msra.mxu0 0.0
      %594 = vmatprep.subr.mxu0 0.0
      %595 = vmatpush1.msra.mxu0 0.0
      %596 = vmatprep.subr.mxu0 0.0
      %597 = vmatpush1.msra.mxu0 0.0
      %598 = vmatprep.subr.mxu0 0.0
      %599 = vmatpush1.msra.mxu0 0.0
      %600 = vmatprep.subr.mxu0 0.0
      %601 = vmatpush1.msra.mxu0 0.0
      %602 = vmatprep.subr.mxu0 0.0
      %603 = vmatpush1.msra.mxu0 0.0
      %604 = vmatprep.subr.mxu0 0.0
      %605 = vmatpush1.msra.mxu0 0.0
      %606 = vmatprep.subr.mxu0 0.0
      %607 = vmatpush1.msra.mxu0 0.0
      %608 = vmatprep.subr.mxu0 0.0
      %609 = vmatpush1.msra.mxu0 0.0
      %610 = vmatprep.subr.mxu0 0.0
      %611 = vmatpush1.msra.mxu0 0.0
      %612 = vmatprep.subr.mxu0 0.0
      %613 = vmatpush1.msra.mxu0 0.0
      %614 = vmatprep.subr.mxu0 0.0
      %615 = vmatpush1.msra.mxu0 0.0
      %616 = vmatprep.subr.mxu0 0.0
      %617 = vmatpush1.msra.mxu0 0.0
      %618 = vmatprep.subr.mxu0 0.0
      %619 = vmatpush1.msra.mxu0 0.0
      %620 = vmatprep.subr.mxu0 0.0
      %621 = vmatpush1.msra.mxu0 0.0
      %622 = vmatprep.subr.mxu0 0.0
      %623 = vmatpush1.msra.mxu0 0.0
      %624 = vmatprep.subr.mxu0 0.0
      %625 = vmatpush1.msra.mxu0 0.0
      %626 = vmatprep.subr.mxu0 0.0
      %627 = vmatpush1.msra.mxu0 0.0
      %628 = vmatprep.subr.mxu0 0.0
      %629 = vmatpush1.msra.mxu0 0.0
      %630 = vmatprep.subr.mxu0 0.0
      %631 = vmatpush1.msra.mxu0 0.0
      %632 = vmatprep.subr.mxu0 0.0
      %633 = vmatpush1.msra.mxu0 0.0
      %634 = vmatprep.mubr.f32.mxu0 0.0
      %635 = vmatmul.mubr.f32.gmra.mrb[0].mxu0 %v566
      %v636 = vpop.f32.mrb[0].mxu0
      %v637 = vadd.f32 0.0, %v636
      %v638 = vpop.f32.mrb[0].mxu0
      %639 = vdwg.mxu0
      %v640 = vadd.f32 %v556, %v637
      %v641 = vld [vmem:[#allocation2] sm:$0xff]
      %s642 = scalar_lea.vmem %s1, 24
      %v643 = vld [vmem:[%s642] sm:$0xff]
      %v645 = vcombine.high %v641, %v641
      %646 = vrot.lane.b32.xlu0 %v641, 116
      %v647 = vpop.permute.xlu0 %646
      %648 = vrot.lane.b32.xlu0 %v645, 116
      %v649 = vpop.permute.xlu0 %648
      %vm650 = vcmask 949248
      %v651 = vsel %vm650, %v647, %v649
      %v653 = vsel %vm408, %v643, 0
      %v655 = vsel %vm222, %v651, 0
      %657 = vmatprep.subr.mxu0 0.0
      %658 = vmatpush1.msra.mxu0 %v655
      %659 = vmatprep.subr.mxu0 0.0
      %660 = vmatpush1.msra.mxu0 0.0
      %661 = vmatprep.subr.mxu0 0.0
      %662 = vmatpush1.msra.mxu0 0.0
      %663 = vmatprep.subr.mxu0 0.0
      %664 = vmatpush1.msra.mxu0 0.0
      %665 = vmatprep.subr.mxu0 0.0
      %666 = vmatpush1.msra.mxu0 0.0
      %667 = vmatprep.subr.mxu0 0.0
      %668 = vmatpush1.msra.mxu0 0.0
      %669 = vmatprep.subr.mxu0 0.0
      %670 = vmatpush1.msra.mxu0 0.0
      %671 = vmatprep.subr.mxu0 0.0
      %672 = vmatpush1.msra.mxu0 0.0
      %673 = vmatprep.subr.mxu0 0.0
      %674 = vmatpush1.msra.mxu0 0.0
      %675 = vmatprep.subr.mxu0 0.0
      %676 = vmatpush1.msra.mxu0 0.0
      %677 = vmatprep.subr.mxu0 0.0
      %678 = vmatpush1.msra.mxu0 0.0
      %679 = vmatprep.subr.mxu0 0.0
      %680 = vmatpush1.msra.mxu0 0.0
      %681 = vmatprep.subr.mxu0 0.0
      %682 = vmatpush1.msra.mxu0 0.0
      %683 = vmatprep.subr.mxu0 0.0
      %684 = vmatpush1.msra.mxu0 0.0
      %685 = vmatprep.subr.mxu0 0.0
      %686 = vmatpush1.msra.mxu0 0.0
      %687 = vmatprep.subr.mxu0 0.0
      %688 = vmatpush1.msra.mxu0 0.0
      %689 = vmatprep.subr.mxu0 0.0
      %690 = vmatpush1.msra.mxu0 0.0
      %691 = vmatprep.subr.mxu0 0.0
      %692 = vmatpush1.msra.mxu0 0.0
      %693 = vmatprep.subr.mxu0 0.0
      %694 = vmatpush1.msra.mxu0 0.0
      %695 = vmatprep.subr.mxu0 0.0
      %696 = vmatpush1.msra.mxu0 0.0
      %697 = vmatprep.subr.mxu0 0.0
      %698 = vmatpush1.msra.mxu0 0.0
      %699 = vmatprep.subr.mxu0 0.0
      %700 = vmatpush1.msra.mxu0 0.0
      %701 = vmatprep.subr.mxu0 0.0
      %702 = vmatpush1.msra.mxu0 0.0
      %703 = vmatprep.subr.mxu0 0.0
      %704 = vmatpush1.msra.mxu0 0.0
      %705 = vmatprep.subr.mxu0 0.0
      %706 = vmatpush1.msra.mxu0 0.0
      %707 = vmatprep.subr.mxu0 0.0
      %708 = vmatpush1.msra.mxu0 0.0
      %709 = vmatprep.subr.mxu0 0.0
      %710 = vmatpush1.msra.mxu0 0.0
      %711 = vmatprep.subr.mxu0 0.0
      %712 = vmatpush1.msra.mxu0 0.0
      %713 = vmatprep.subr.mxu0 0.0
      %714 = vmatpush1.msra.mxu0 0.0
      %715 = vmatprep.subr.mxu0 0.0
      %716 = vmatpush1.msra.mxu0 0.0
      %717 = vmatprep.subr.mxu0 0.0
      %718 = vmatpush1.msra.mxu0 0.0
      %719 = vmatprep.subr.mxu0 0.0
      %720 = vmatpush1.msra.mxu0 0.0
      %721 = vmatprep.mubr.f32.mxu0 0.0
      %722 = vmatmul.mubr.f32.gmra.mrb[0].mxu0 %v653
      %v723 = vpop.f32.mrb[0].mxu0
      %v724 = vadd.f32 0.0, %v723
      %v725 = vpop.f32.mrb[0].mxu0
      %726 = vdwg.mxu0
      %v727 = vadd.f32 %v640, %v724
      %v728 = vld [vmem:[#allocation2] sm:$0xff]
      %s729 = scalar_lea.vmem %s1, 32
      %v730 = vld [vmem:[%s729] sm:$0xff]
      %v732 = vcombine.high %v728, %v728
      %733 = vrot.lane.b32.xlu0 %v728, 115
      %v734 = vpop.permute.xlu0 %733
      %735 = vrot.lane.b32.xlu0 %v732, 115
      %v736 = vpop.permute.xlu0 %735
      %vm737 = vcmask 941056
      %v738 = vsel %vm737, %v734, %v736
      %v740 = vsel %vm408, %v730, 0
      %v742 = vsel %vm222, %v738, 0
      %744 = vmatprep.subr.mxu0 0.0
      %745 = vmatpush1.msra.mxu0 %v742
      %746 = vmatprep.subr.mxu0 0.0
      %747 = vmatpush1.msra.mxu0 0.0
      %748 = vmatprep.subr.mxu0 0.0
      %749 = vmatpush1.msra.mxu0 0.0
      %750 = vmatprep.subr.mxu0 0.0
      %751 = vmatpush1.msra.mxu0 0.0
      %752 = vmatprep.subr.mxu0 0.0
      %753 = vmatpush1.msra.mxu0 0.0
      %754 = vmatprep.subr.mxu0 0.0
      %755 = vmatpush1.msra.mxu0 0.0
      %756 = vmatprep.subr.mxu0 0.0
      %757 = vmatpush1.msra.mxu0 0.0
      %758 = vmatprep.subr.mxu0 0.0
      %759 = vmatpush1.msra.mxu0 0.0
      %760 = vmatprep.subr.mxu0 0.0
      %761 = vmatpush1.msra.mxu0 0.0
      %762 = vmatprep.subr.mxu0 0.0
      %763 = vmatpush1.msra.mxu0 0.0
      %764 = vmatprep.subr.mxu0 0.0
      %765 = vmatpush1.msra.mxu0 0.0
      %766 = vmatprep.subr.mxu0 0.0
      %767 = vmatpush1.msra.mxu0 0.0
      %768 = vmatprep.subr.mxu0 0.0
      %769 = vmatpush1.msra.mxu0 0.0
      %770 = vmatprep.subr.mxu0 0.0
      %771 = vmatpush1.msra.mxu0 0.0
      %772 = vmatprep.subr.mxu0 0.0
      %773 = vmatpush1.msra.mxu0 0.0
      %774 = vmatprep.subr.mxu0 0.0
      %775 = vmatpush1.msra.mxu0 0.0
      %776 = vmatprep.subr.mxu0 0.0
      %777 = vmatpush1.msra.mxu0 0.0
      %778 = vmatprep.subr.mxu0 0.0
      %779 = vmatpush1.msra.mxu0 0.0
      %780 = vmatprep.subr.mxu0 0.0
      %781 = vmatpush1.msra.mxu0 0.0
      %782 = vmatprep.subr.mxu0 0.0
      %783 = vmatpush1.msra.mxu0 0.0
      %784 = vmatprep.subr.mxu0 0.0
      %785 = vmatpush1.msra.mxu0 0.0
      %786 = vmatprep.subr.mxu0 0.0
      %787 = vmatpush1.msra.mxu0 0.0
      %788 = vmatprep.subr.mxu0 0.0
      %789 = vmatpush1.msra.mxu0 0.0
      %790 = vmatprep.subr.mxu0 0.0
      %791 = vmatpush1.msra.mxu0 0.0
      %792 = vmatprep.subr.mxu0 0.0
      %793 = vmatpush1.msra.mxu0 0.0
      %794 = vmatprep.subr.mxu0 0.0
      %795 = vmatpush1.msra.mxu0 0.0
      %796 = vmatprep.subr.mxu0 0.0
      %797 = vmatpush1.msra.mxu0 0.0
      %798 = vmatprep.subr.mxu0 0.0
      %799 = vmatpush1.msra.mxu0 0.0
      %800 = vmatprep.subr.mxu0 0.0
      %801 = vmatpush1.msra.mxu0 0.0
      %802 = vmatprep.subr.mxu0 0.0
      %803 = vmatpush1.msra.mxu0 0.0
      %804 = vmatprep.subr.mxu0 0.0
      %805 = vmatpush1.msra.mxu0 0.0
      %806 = vmatprep.subr.mxu0 0.0
      %807 = vmatpush1.msra.mxu0 0.0
      %808 = vmatprep.mubr.f32.mxu0 0.0
      %809 = vmatmul.mubr.f32.gmra.mrb[0].mxu0 %v740
      %v810 = vpop.f32.mrb[0].mxu0
      %v811 = vadd.f32 0.0, %v810
      %v812 = vpop.f32.mrb[0].mxu0
      %813 = vdwg.mxu0
      %v814 = vadd.f32 %v727, %v811
      %v815 = vld [vmem:[#allocation2] sm:$0xff]
      %s816 = scalar_lea.vmem %s1, 40
      %v817 = vld [vmem:[%s816] sm:$0xff]
      %v819 = vcombine.high %v815, %v815
      %820 = vrot.lane.b32.xlu0 %v815, 114
      %v821 = vpop.permute.xlu0 %820
      %822 = vrot.lane.b32.xlu0 %v819, 114
      %v823 = vpop.permute.xlu0 %822
      %vm824 = vcmask 932864
      %v825 = vsel %vm824, %v821, %v823
      %v827 = vsel %vm408, %v817, 0
      %v829 = vsel %vm222, %v825, 0
      %831 = vmatprep.subr.mxu0 0.0
      %832 = vmatpush1.msra.mxu0 %v829
      %833 = vmatprep.subr.mxu0 0.0
      %834 = vmatpush1.msra.mxu0 0.0
      %835 = vmatprep.subr.mxu0 0.0
      %836 = vmatpush1.msra.mxu0 0.0
      %837 = vmatprep.subr.mxu0 0.0
      %838 = vmatpush1.msra.mxu0 0.0
      %839 = vmatprep.subr.mxu0 0.0
      %840 = vmatpush1.msra.mxu0 0.0
      %841 = vmatprep.subr.mxu0 0.0
      %842 = vmatpush1.msra.mxu0 0.0
      %843 = vmatprep.subr.mxu0 0.0
      %844 = vmatpush1.msra.mxu0 0.0
      %845 = vmatprep.subr.mxu0 0.0
      %846 = vmatpush1.msra.mxu0 0.0
      %847 = vmatprep.subr.mxu0 0.0
      %848 = vmatpush1.msra.mxu0 0.0
      %849 = vmatprep.subr.mxu0 0.0
      %850 = vmatpush1.msra.mxu0 0.0
      %851 = vmatprep.subr.mxu0 0.0
      %852 = vmatpush1.msra.mxu0 0.0
      %853 = vmatprep.subr.mxu0 0.0
      %854 = vmatpush1.msra.mxu0 0.0
      %855 = vmatprep.subr.mxu0 0.0
      %856 = vmatpush1.msra.mxu0 0.0
      %857 = vmatprep.subr.mxu0 0.0
      %858 = vmatpush1.msra.mxu0 0.0
      %859 = vmatprep.subr.mxu0 0.0
      %860 = vmatpush1.msra.mxu0 0.0
      %861 = vmatprep.subr.mxu0 0.0
      %862 = vmatpush1.msra.mxu0 0.0
      %863 = vmatprep.subr.mxu0 0.0
      %864 = vmatpush1.msra.mxu0 0.0
      %865 = vmatprep.subr.mxu0 0.0
      %866 = vmatpush1.msra.mxu0 0.0
      %867 = vmatprep.subr.mxu0 0.0
      %868 = vmatpush1.msra.mxu0 0.0
      %869 = vmatprep.subr.mxu0 0.0
      %870 = vmatpush1.msra.mxu0 0.0
      %871 = vmatprep.subr.mxu0 0.0
      %872 = vmatpush1.msra.mxu0 0.0
      %873 = vmatprep.subr.mxu0 0.0
      %874 = vmatpush1.msra.mxu0 0.0
      %875 = vmatprep.subr.mxu0 0.0
      %876 = vmatpush1.msra.mxu0 0.0
      %877 = vmatprep.subr.mxu0 0.0
      %878 = vmatpush1.msra.mxu0 0.0
      %879 = vmatprep.subr.mxu0 0.0
      %880 = vmatpush1.msra.mxu0 0.0
      %881 = vmatprep.subr.mxu0 0.0
      %882 = vmatpush1.msra.mxu0 0.0
      %883 = vmatprep.subr.mxu0 0.0
      %884 = vmatpush1.msra.mxu0 0.0
      %885 = vmatprep.subr.mxu0 0.0
      %886 = vmatpush1.msra.mxu0 0.0
      %887 = vmatprep.subr.mxu0 0.0
      %888 = vmatpush1.msra.mxu0 0.0
      %889 = vmatprep.subr.mxu0 0.0
      %890 = vmatpush1.msra.mxu0 0.0
      %891 = vmatprep.subr.mxu0 0.0
      %892 = vmatpush1.msra.mxu0 0.0
      %893 = vmatprep.subr.mxu0 0.0
      %894 = vmatpush1.msra.mxu0 0.0
      %895 = vmatprep.mubr.f32.mxu0 0.0
      %896 = vmatmul.mubr.f32.gmra.mrb[0].mxu0 %v827
      %v897 = vpop.f32.mrb[0].mxu0
      %v898 = vadd.f32 0.0, %v897
      %v899 = vpop.f32.mrb[0].mxu0
      %900 = vdwg.mxu0
      %v901 = vadd.f32 %v814, %v898
      %v902 = vld [vmem:[#allocation2] sm:$0xff]
      %s903 = scalar_lea.vmem %s1, 48
      %v904 = vld [vmem:[%s903] sm:$0xff]
      %v906 = vcombine.high %v902, %v902
      %907 = vrot.lane.b32.xlu0 %v902, 104
      %v908 = vpop.permute.xlu0 %907
      %909 = vrot.lane.b32.xlu0 %v906, 104
      %v910 = vpop.permute.xlu0 %909
      %vm911 = vcmask 850944
      %v912 = vsel %vm911, %v908, %v910
      %v914 = vsel %vm408, %v904, 0
      %v916 = vsel %vm222, %v912, 0
      %918 = vmatprep.subr.mxu0 0.0
      %919 = vmatpush1.msra.mxu0 %v916
      %920 = vmatprep.subr.mxu0 0.0
      %921 = vmatpush1.msra.mxu0 0.0
      %922 = vmatprep.subr.mxu0 0.0
      %923 = vmatpush1.msra.mxu0 0.0
      %924 = vmatprep.subr.mxu0 0.0
      %925 = vmatpush1.msra.mxu0 0.0
      %926 = vmatprep.subr.mxu0 0.0
      %927 = vmatpush1.msra.mxu0 0.0
      %928 = vmatprep.subr.mxu0 0.0
      %929 = vmatpush1.msra.mxu0 0.0
      %930 = vmatprep.subr.mxu0 0.0
      %931 = vmatpush1.msra.mxu0 0.0
      %932 = vmatprep.subr.mxu0 0.0
      %933 = vmatpush1.msra.mxu0 0.0
      %934 = vmatprep.subr.mxu0 0.0
      %935 = vmatpush1.msra.mxu0 0.0
      %936 = vmatprep.subr.mxu0 0.0
      %937 = vmatpush1.msra.mxu0 0.0
      %938 = vmatprep.subr.mxu0 0.0
      %939 = vmatpush1.msra.mxu0 0.0
      %940 = vmatprep.subr.mxu0 0.0
      %941 = vmatpush1.msra.mxu0 0.0
      %942 = vmatprep.subr.mxu0 0.0
      %943 = vmatpush1.msra.mxu0 0.0
      %944 = vmatprep.subr.mxu0 0.0
      %945 = vmatpush1.msra.mxu0 0.0
      %946 = vmatprep.subr.mxu0 0.0
      %947 = vmatpush1.msra.mxu0 0.0
      %948 = vmatprep.subr.mxu0 0.0
      %949 = vmatpush1.msra.mxu0 0.0
      %950 = vmatprep.subr.mxu0 0.0
      %951 = vmatpush1.msra.mxu0 0.0
      %952 = vmatprep.subr.mxu0 0.0
      %953 = vmatpush1.msra.mxu0 0.0
      %954 = vmatprep.subr.mxu0 0.0
      %955 = vmatpush1.msra.mxu0 0.0
      %956 = vmatprep.subr.mxu0 0.0
      %957 = vmatpush1.msra.mxu0 0.0
      %958 = vmatprep.subr.mxu0 0.0
      %959 = vmatpush1.msra.mxu0 0.0
      %960 = vmatprep.subr.mxu0 0.0
      %961 = vmatpush1.msra.mxu0 0.0
      %962 = vmatprep.subr.mxu0 0.0
      %963 = vmatpush1.msra.mxu0 0.0
      %964 = vmatprep.subr.mxu0 0.0
      %965 = vmatpush1.msra.mxu0 0.0
      %966 = vmatprep.subr.mxu0 0.0
      %967 = vmatpush1.msra.mxu0 0.0
      %968 = vmatprep.subr.mxu0 0.0
      %969 = vmatpush1.msra.mxu0 0.0
      %970 = vmatprep.subr.mxu0 0.0
      %971 = vmatpush1.msra.mxu0 0.0
      %972 = vmatprep.subr.mxu0 0.0
      %973 = vmatpush1.msra.mxu0 0.0
      %974 = vmatprep.subr.mxu0 0.0
      %975 = vmatpush1.msra.mxu0 0.0
      %976 = vmatprep.subr.mxu0 0.0
      %977 = vmatpush1.msra.mxu0 0.0
      %978 = vmatprep.subr.mxu0 0.0
      %979 = vmatpush1.msra.mxu0 0.0
      %980 = vmatprep.subr.mxu0 0.0
      %981 = vmatpush1.msra.mxu0 0.0
      %982 = vmatprep.mubr.f32.mxu0 0.0
      %983 = vmatmul.mubr.f32.gmra.mrb[0].mxu0 %v914
      %v984 = vpop.f32.mrb[0].mxu0
      %v985 = vadd.f32 0.0, %v984
      %v986 = vpop.f32.mrb[0].mxu0
      %987 = vdwg.mxu0
      %v988 = vadd.f32 %v901, %v985
      %v989 = vld [vmem:[#allocation2] sm:$0xff]
      %s990 = scalar_lea.vmem %s1, 56
      %v991 = vld [vmem:[%s990] sm:$0xff]
      %v993 = vcombine.high %v989, %v989
      %994 = vrot.lane.b32.xlu0 %v989, 103
      %v995 = vpop.permute.xlu0 %994
      %996 = vrot.lane.b32.xlu0 %v993, 103
      %v997 = vpop.permute.xlu0 %996
      %vm998 = vcmask 842752
      %v999 = vsel %vm998, %v995, %v997
      %v1001 = vsel %vm408, %v991, 0
      %v1003 = vsel %vm222, %v999, 0
      %1005 = vmatprep.subr.mxu0 0.0
      %1006 = vmatpush1.msra.mxu0 %v1003
      %1007 = vmatprep.subr.mxu0 0.0
      %1008 = vmatpush1.msra.mxu0 0.0
      %1009 = vmatprep.subr.mxu0 0.0
      %1010 = vmatpush1.msra.mxu0 0.0
      %1011 = vmatprep.subr.mxu0 0.0
      %1012 = vmatpush1.msra.mxu0 0.0
      %1013 = vmatprep.subr.mxu0 0.0
      %1014 = vmatpush1.msra.mxu0 0.0
      %1015 = vmatprep.subr.mxu0 0.0
      %1016 = vmatpush1.msra.mxu0 0.0
      %1017 = vmatprep.subr.mxu0 0.0
      %1018 = vmatpush1.msra.mxu0 0.0
      %1019 = vmatprep.subr.mxu0 0.0
      %1020 = vmatpush1.msra.mxu0 0.0
      %1021 = vmatprep.subr.mxu0 0.0
      %1022 = vmatpush1.msra.mxu0 0.0
      %1023 = vmatprep.subr.mxu0 0.0
      %1024 = vmatpush1.msra.mxu0 0.0
      %1025 = vmatprep.subr.mxu0 0.0
      %1026 = vmatpush1.msra.mxu0 0.0
      %1027 = vmatprep.subr.mxu0 0.0
      %1028 = vmatpush1.msra.mxu0 0.0
      %1029 = vmatprep.subr.mxu0 0.0
      %1030 = vmatpush1.msra.mxu0 0.0
      %1031 = vmatprep.subr.mxu0 0.0
      %1032 = vmatpush1.msra.mxu0 0.0
      %1033 = vmatprep.subr.mxu0 0.0
      %1034 = vmatpush1.msra.mxu0 0.0
      %1035 = vmatprep.subr.mxu0 0.0
      %1036 = vmatpush1.msra.mxu0 0.0
      %1037 = vmatprep.subr.mxu0 0.0
      %1038 = vmatpush1.msra.mxu0 0.0
      %1039 = vmatprep.subr.mxu0 0.0
      %1040 = vmatpush1.msra.mxu0 0.0
      %1041 = vmatprep.subr.mxu0 0.0
      %1042 = vmatpush1.msra.mxu0 0.0
      %1043 = vmatprep.subr.mxu0 0.0
      %1044 = vmatpush1.msra.mxu0 0.0
      %1045 = vmatprep.subr.mxu0 0.0
      %1046 = vmatpush1.msra.mxu0 0.0
      %1047 = vmatprep.subr.mxu0 0.0
      %1048 = vmatpush1.msra.mxu0 0.0
      %1049 = vmatprep.subr.mxu0 0.0
      %1050 = vmatpush1.msra.mxu0 0.0
      %1051 = vmatprep.subr.mxu0 0.0
      %1052 = vmatpush1.msra.mxu0 0.0
      %1053 = vmatprep.subr.mxu0 0.0
      %1054 = vmatpush1.msra.mxu0 0.0
      %1055 = vmatprep.subr.mxu0 0.0
      %1056 = vmatpush1.msra.mxu0 0.0
      %1057 = vmatprep.subr.mxu0 0.0
      %1058 = vmatpush1.msra.mxu0 0.0
      %1059 = vmatprep.subr.mxu0 0.0
      %1060 = vmatpush1.msra.mxu0 0.0
      %1061 = vmatprep.subr.mxu0 0.0
      %1062 = vmatpush1.msra.mxu0 0.0
      %1063 = vmatprep.subr.mxu0 0.0
      %1064 = vmatpush1.msra.mxu0 0.0
      %1065 = vmatprep.subr.mxu0 0.0
      %1066 = vmatpush1.msra.mxu0 0.0
      %1067 = vmatprep.subr.mxu0 0.0
      %1068 = vmatpush1.msra.mxu0 0.0
      %1069 = vmatprep.mubr.f32.mxu0 0.0
      %1070 = vmatmul.mubr.f32.gmra.mrb[0].mxu0 %v1001
      %v1071 = vpop.f32.mrb[0].mxu0
      %v1072 = vadd.f32 0.0, %v1071
      %v1073 = vpop.f32.mrb[0].mxu0
      %1074 = vdwg.mxu0
      %v1075 = vadd.f32 %v988, %v1072
      %v1076 = vld [vmem:[#allocation2] sm:$0xff]
      %s1077 = scalar_lea.vmem %s1, 64
      %v1078 = vld [vmem:[%s1077] sm:$0xff]
      %v1080 = vcombine.high %v1076, %v1076
      %1081 = vrot.lane.b32.xlu0 %v1076, 102
      %v1082 = vpop.permute.xlu0 %1081
      %1083 = vrot.lane.b32.xlu0 %v1080, 102
      %v1084 = vpop.permute.xlu0 %1083
      %vm1085 = vcmask 834560
      %v1086 = vsel %vm1085, %v1082, %v1084
      %v1088 = vsel %vm408, %v1078, 0
      %v1090 = vsel %vm222, %v1086, 0
      %1092 = vmatprep.subr.mxu0 0.0
      %1093 = vmatpush1.msra.mxu0 %v1090
      %1094 = vmatprep.subr.mxu0 0.0
      %1095 = vmatpush1.msra.mxu0 0.0
      %1096 = vmatprep.subr.mxu0 0.0
      %1097 = vmatpush1.msra.mxu0 0.0
      %1098 = vmatprep.subr.mxu0 0.0
      %1099 = vmatpush1.msra.mxu0 0.0
      %1100 = vmatprep.subr.mxu0 0.0
      %1101 = vmatpush1.msra.mxu0 0.0
      %1102 = vmatprep.subr.mxu0 0.0
      %1103 = vmatpush1.msra.mxu0 0.0
      %1104 = vmatprep.subr.mxu0 0.0
      %1105 = vmatpush1.msra.mxu0 0.0
      %1106 = vmatprep.subr.mxu0 0.0
      %1107 = vmatpush1.msra.mxu0 0.0
      %1108 = vmatprep.subr.mxu0 0.0
      %1109 = vmatpush1.msra.mxu0 0.0
      %1110 = vmatprep.subr.mxu0 0.0
      %1111 = vmatpush1.msra.mxu0 0.0
      %1112 = vmatprep.subr.mxu0 0.0
      %1113 = vmatpush1.msra.mxu0 0.0
      %1114 = vmatprep.subr.mxu0 0.0
      %1115 = vmatpush1.msra.mxu0 0.0
      %1116 = vmatprep.subr.mxu0 0.0
      %1117 = vmatpush1.msra.mxu0 0.0
      %1118 = vmatprep.subr.mxu0 0.0
      %1119 = vmatpush1.msra.mxu0 0.0
      %1120 = vmatprep.subr.mxu0 0.0
      %1121 = vmatpush1.msra.mxu0 0.0
      %1122 = vmatprep.subr.mxu0 0.0
      %1123 = vmatpush1.msra.mxu0 0.0
      %1124 = vmatprep.subr.mxu0 0.0
      %1125 = vmatpush1.msra.mxu0 0.0
      %1126 = vmatprep.subr.mxu0 0.0
      %1127 = vmatpush1.msra.mxu0 0.0
      %1128 = vmatprep.subr.mxu0 0.0
      %1129 = vmatpush1.msra.mxu0 0.0
      %1130 = vmatprep.subr.mxu0 0.0
      %1131 = vmatpush1.msra.mxu0 0.0
      %1132 = vmatprep.subr.mxu0 0.0
      %1133 = vmatpush1.msra.mxu0 0.0
      %1134 = vmatprep.subr.mxu0 0.0
      %1135 = vmatpush1.msra.mxu0 0.0
      %1136 = vmatprep.subr.mxu0 0.0
      %1137 = vmatpush1.msra.mxu0 0.0
      %1138 = vmatprep.subr.mxu0 0.0
      %1139 = vmatpush1.msra.mxu0 0.0
      %1140 = vmatprep.subr.mxu0 0.0
      %1141 = vmatpush1.msra.mxu0 0.0
      %1142 = vmatprep.subr.mxu0 0.0
      %1143 = vmatpush1.msra.mxu0 0.0
      %1144 = vmatprep.subr.mxu0 0.0
      %1145 = vmatpush1.msra.mxu0 0.0
      %1146 = vmatprep.subr.mxu0 0.0
      %1147 = vmatpush1.msra.mxu0 0.0
      %1148 = vmatprep.subr.mxu0 0.0
      %1149 = vmatpush1.msra.mxu0 0.0
      %1150 = vmatprep.subr.mxu0 0.0
      %1151 = vmatpush1.msra.mxu0 0.0
      %1152 = vmatprep.subr.mxu0 0.0
      %1153 = vmatpush1.msra.mxu0 0.0
      %1154 = vmatprep.subr.mxu0 0.0
      %1155 = vmatpush1.msra.mxu0 0.0
      %1156 = vmatprep.mubr.f32.mxu0 0.0
      %1157 = vmatmul.mubr.f32.gmra.mrb[0].mxu0 %v1088
      %v1158 = vpop.f32.mrb[0].mxu0
      %v1159 = vadd.f32 0.0, %v1158
      %v1160 = vpop.f32.mrb[0].mxu0
      %1161 = vdwg.mxu0
      %v1162 = vadd.f32 %v1075, %v1159
      %v1163 = vld [vmem:[%s3] sm:$0x1]
      %v1165 = vlaneseq
      %v1166 = vshrl.u32 %v1165, 7
      %v1167 = vsub.s32 0, %v1166
      %v1168 = vrot.slane %v1163, %v1167
      %v1170 = vmul.f32 %v1162, %v1168
      %vm1171 = vcmask 965632
      %v1172 = vsel %vm1171, %v1170, 0.0
      %1173 = vadd.xlane.f32.xlu0 %v1172
      %v1174 = vpop.xlane.xlu0 %1173
      %v1175 = vmul.f32 %v1174, 0.01
      %v1176 = vmul.f32 %v1162, %v1162
      %v1177 = vmul.f32 %v1176, %v1168
      %v1178 = vsel %vm1171, %v1177, 0.0
      %1179 = vadd.xlane.f32.xlu0 %v1178
      %v1180 = vpop.xlane.xlu0 %1179
      %v1181 = vmul.f32 %v1180, 0.01
      %v1182 = vmul.f32 %v1175, %v1175
      %v1183 = vsub.f32 %v1181, %v1182
      %v1184 = vmax.f32 %v1183, 0.0
      %v1185 = vsub.f32 %v1162, %v1175
      %v1186 = vadd.f32 %v1184, 1e-05
      %v1187 = vrsqrt.pop %v1186
      %v1188 = vmul.f32 %v1185, %v1187
      %v1189 = vmax.f32 %v1188, 0.0
      %1190 = vst [vmem:[#allocation3] sm:$0xff] 0.0
      %vm1191 = vcmask 556032
      %1192 = vst.msk [vmem:[#allocation3 + $0x8] sm:$0xff] %vm1191, 0.0
      %1194 = vrot.lane.b32.xlu0 %v1189, 4
      %v1195 = vpop.permute.xlu0 %1194
      %vm1197 = vcmask 212096
      %1198 = vst.msk [vmem:[#allocation3] sm:$0xff] %vm1197, %v1195
      %1199 = vrot.lane.b32.xlu0 %v1189, 2
      %v1200 = vpop.permute.xlu0 %1199
      %vm1202 = vcmask 130168
      %1203 = vst.msk [vmem:[#allocation3] sm:$0xff] %vm1202, %v1200
      %1204 = vrot.lane.b32.xlu0 %v1189, 6
      %v1205 = vpop.permute.xlu0 %1204
      %vm1207 = vcmask 220368
      %1208 = vst.msk [vmem:[#allocation3] sm:$0xff] %vm1207, %v1205
      %1209 = vrot.lane.b32.xlu0 %v1189, 30
      %v1210 = vpop.permute.xlu0 %1209
      %vm1212 = vcmask 326896
      %1213 = vst.msk [vmem:[#allocation3] sm:$0xff] %vm1212, %v1210
      %1214 = vrot.lane.b32.xlu0 %v1189, 28
      %v1215 = vpop.permute.xlu0 %1214
      %vm1217 = vcmask 244968
      %1218 = vst.msk [vmem:[#allocation3] sm:$0xff] %vm1217, %v1215
      %1219 = vrot.lane.b32.xlu0 %v1189, 32
      %v1220 = vpop.permute.xlu0 %1219
      %vm1222 = vcmask 335168
      %1223 = vst.msk [vmem:[#allocation3] sm:$0xff] %vm1222, %v1220
      %vm1224 = vcmask 441696
      %1225 = vst.msk [vmem:[#allocation3] sm:$0xff] %vm1224, %v1220
      %vm1226 = vcmask 359768
      %1227 = vst.msk [vmem:[#allocation3] sm:$0xff] %vm1226, %v1210
      %1228 = vrot.lane.b32.xlu0 %v1189, 34
      %v1229 = vpop.permute.xlu0 %1228
      %vm1231 = vcmask 449968
      %1232 = vst.msk [vmem:[#allocation3] sm:$0xff] %vm1231, %v1229
      %vm1233 = vcmask 556496
      %1234 = vst.msk [vmem:[#allocation3] sm:$0xff] %vm1233, %v1229
      %vm1235 = vcmask 474568
      %1236 = vst.msk [vmem:[#allocation3] sm:$0xff] %vm1235, %v1220
      %1237 = vrot.lane.b32.xlu0 %v1189, 36
      %v1238 = vpop.permute.xlu0 %1237
      %vm1240 = vcmask 564768
      %1241 = vst.msk [vmem:[#allocation3] sm:$0xff] %vm1240, %v1238
      %vm1242 = vcmask 671296
      %1243 = vst.msk [vmem:[#allocation3] sm:$0xff] %vm1242, %v1238
      %vm1244 = vcmask 589368
      %1245 = vst.msk [vmem:[#allocation3] sm:$0xff] %vm1244, %v1229
      %1246 = vrot.lane.b32.xlu0 %v1189, 38
      %v1247 = vpop.permute.xlu0 %1246
      %vm1249 = vcmask 679568
      %1250 = vst.msk [vmem:[#allocation3] sm:$0xff] %vm1249, %v1247
      %vm1251 = vcmask 786096
      %1252 = vst.msk [vmem:[#allocation3] sm:$0xff] %vm1251, %v1247
      %vm1253 = vcmask 704168
      %1254 = vst.msk [vmem:[#allocation3] sm:$0xff] %vm1253, %v1238
      %1255 = vrot.lane.b32.xlu0 %v1189, 40
      %v1256 = vpop.permute.xlu0 %1255
      %vm1258 = vcmask 794368
      %1259 = vst.msk [vmem:[#allocation3] sm:$0xff] %vm1258, %v1256
      %vm1260 = vcmask 900896
      %1261 = vst.msk [vmem:[#allocation3] sm:$0xff] %vm1260, %v1256
      %vm1262 = vcmask 818968
      %1263 = vst.msk [vmem:[#allocation3] sm:$0xff] %vm1262, %v1247
      %1264 = vrot.lane.b32.xlu0 %v1189, 42
      %v1265 = vpop.permute.xlu0 %1264
      %vm1267 = vcmask 909168
      %1268 = vst.msk [vmem:[#allocation3] sm:$0xff] %vm1267, %v1265
      %vm1269 = vcmask 1015696
      %1270 = vst.msk [vmem:[#allocation3] sm:$0xff] %vm1269, %v1265
      %vm1271 = vcmask 933768
      %1272 = vst.msk [vmem:[#allocation3] sm:$0xff] %vm1271, %v1256
      %1273 = vrot.lane.b32.xlu0 %v1189, 44
      %v1274 = vpop.permute.xlu0 %1273
      %vm1276 = vcmask 1023968
      %1277 = vst.msk [vmem:[#allocation3] sm:$0xff] %vm1276, %v1274
      %vm1278 = vcmask 80896
      %1279 = vst.msk [vmem:[#allocation3 + $0x8] sm:$0xff] %vm1278, %v1274
      %vm1280 = vcmask 1048568
      %1281 = vst.msk [vmem:[#allocation3] sm:$0xff] %vm1280, %v1265
      %1282 = vrot.lane.b32.xlu0 %v1189, 46
      %v1283 = vpop.permute.xlu0 %1282
      %vm1285 = vcmask 89168
      %1286 = vst.msk [vmem:[#allocation3 + $0x8] sm:$0xff] %vm1285, %v1283
      %vm1287 = vcmask 195696
      %1288 = vst.msk [vmem:[#allocation3 + $0x8] sm:$0xff] %vm1287, %v1283
      %vm1289 = vcmask 113768
      %1290 = vst.msk [vmem:[#allocation3 + $0x8] sm:$0xff] %vm1289, %v1274
      %1291 = vrot.lane.b32.xlu0 %v1189, 48
      %v1292 = vpop.permute.xlu0 %1291
      %vm1294 = vcmask 203968
      %1295 = vst.msk [vmem:[#allocation3 + $0x8] sm:$0xff] %vm1294, %v1292
      %vm1296 = vcmask 310496
      %1297 = vst.msk [vmem:[#allocation3 + $0x8] sm:$0xff] %vm1296, %v1292
      %vm1298 = vcmask 228568
      %1299 = vst.msk [vmem:[#allocation3 + $0x8] sm:$0xff] %vm1298, %v1283
      %1300 = vrot.lane.b32.xlu0 %v1189, 50
      %v1301 = vpop.permute.xlu0 %1300
      %vm1303 = vcmask 318768
      %1304 = vst.msk [vmem:[#allocation3 + $0x8] sm:$0xff] %vm1303, %v1301
      %1305 = vrot.lane.b32.xlu0 %v1189, 74
      %v1306 = vpop.permute.xlu0 %1305
      %vm1308 = vcmask 425296
      %1309 = vst.msk [vmem:[#allocation3 + $0x8] sm:$0xff] %vm1308, %v1306
      %1310 = vrot.lane.b32.xlu0 %v1189, 72
      %v1311 = vpop.permute.xlu0 %1310
      %vm1313 = vcmask 343368
      %1314 = vst.msk [vmem:[#allocation3 + $0x8] sm:$0xff] %vm1313, %v1311
      %1315 = vrot.lane.b32.xlu0 %v1189, 76
      %v1316 = vpop.permute.xlu0 %1315
      %vm1318 = vcmask 433568
      %1319 = vst.msk [vmem:[#allocation3 + $0x8] sm:$0xff] %vm1318, %v1316
      %v1320 = vld [vmem:[#allocation3] sm:$0xff]
      %v1321 = vld [vmem:[#allocation3 + $0x8] sm:$0xff]
      %v1322 = vld [vmem:[%s2] sm:$0xff]
      %s1323 = scalar_lea.vmem %s2, 8
      %v1324 = vld [vmem:[%s1323] sm:$0xff]
      %1327 = vrot.lane.b32.xlu0 %v1320, 127
      %v1328 = vpop.permute.xlu0 %1327
      %1329 = vrot.lane.b32.xlu0 %v1321, 127
      %v1330 = vpop.permute.xlu0 %1329
      %vm1331 = vcmask 1039360
      %v1332 = vsel %vm1331, %v1328, %v1330
      %vm1335 = vcmask 64512
      %v1337 = vsel %vm1335, %v1324, 0
      %1339 = vmatprep.subr.mxu0 %v1330
      %1340 = vmatpush1.msra.mxu0 %v1332
      %1341 = vmatprep.subr.mxu0 0.0
      %1342 = vmatpush1.msra.mxu0 0.0
      %1343 = vmatprep.subr.mxu0 0.0
      %1344 = vmatpush1.msra.mxu0 0.0
      %1345 = vmatprep.subr.mxu0 0.0
      %1346 = vmatpush1.msra.mxu0 0.0
      %1347 = vmatprep.subr.mxu0 0.0
      %1348 = vmatpush1.msra.mxu0 0.0
      %1349 = vmatprep.subr.mxu0 0.0
      %1350 = vmatpush1.msra.mxu0 0.0
      %1351 = vmatprep.subr.mxu0 0.0
      %1352 = vmatpush1.msra.mxu0 0.0
      %1353 = vmatprep.subr.mxu0 0.0
      %1354 = vmatpush1.msra.mxu0 0.0
      %1355 = vmatprep.subr.mxu0 0.0
      %1356 = vmatpush1.msra.mxu0 0.0
      %1357 = vmatprep.subr.mxu0 0.0
      %1358 = vmatpush1.msra.mxu0 0.0
      %1359 = vmatprep.subr.mxu0 0.0
      %1360 = vmatpush1.msra.mxu0 0.0
      %1361 = vmatprep.subr.mxu0 0.0
      %1362 = vmatpush1.msra.mxu0 0.0
      %1363 = vmatprep.subr.mxu0 0.0
      %1364 = vmatpush1.msra.mxu0 0.0
      %1365 = vmatprep.subr.mxu0 0.0
      %1366 = vmatpush1.msra.mxu0 0.0
      %1367 = vmatprep.subr.mxu0 0.0
      %1368 = vmatpush1.msra.mxu0 0.0
      %1369 = vmatprep.subr.mxu0 0.0
      %1370 = vmatpush1.msra.mxu0 0.0
      %1371 = vmatprep.subr.mxu0 0.0
      %1372 = vmatpush1.msra.mxu0 0.0
      %1373 = vmatprep.subr.mxu0 0.0
      %1374 = vmatpush1.msra.mxu0 0.0
      %1375 = vmatprep.subr.mxu0 0.0
      %1376 = vmatpush1.msra.mxu0 0.0
      %1377 = vmatprep.subr.mxu0 0.0
      %1378 = vmatpush1.msra.mxu0 0.0
      %1379 = vmatprep.subr.mxu0 0.0
      %1380 = vmatpush1.msra.mxu0 0.0
      %1381 = vmatprep.subr.mxu0 0.0
      %1382 = vmatpush1.msra.mxu0 0.0
      %1383 = vmatprep.subr.mxu0 0.0
      %1384 = vmatpush1.msra.mxu0 0.0
      %1385 = vmatprep.subr.mxu0 0.0
      %1386 = vmatpush1.msra.mxu0 0.0
      %1387 = vmatprep.subr.mxu0 0.0
      %1388 = vmatpush1.msra.mxu0 0.0
      %1389 = vmatprep.subr.mxu0 0.0
      %1390 = vmatpush1.msra.mxu0 0.0
      %1391 = vmatprep.subr.mxu0 0.0
      %1392 = vmatpush1.msra.mxu0 0.0
      %1393 = vmatprep.subr.mxu0 0.0
      %1394 = vmatpush1.msra.mxu0 0.0
      %1395 = vmatprep.subr.mxu0 0.0
      %1396 = vmatpush1.msra.mxu0 0.0
      %1397 = vmatprep.subr.mxu0 0.0
      %1398 = vmatpush1.msra.mxu0 0.0
      %1399 = vmatprep.subr.mxu0 0.0
      %1400 = vmatpush1.msra.mxu0 0.0
      %1401 = vmatprep.subr.mxu0 0.0
      %1402 = vmatpush1.msra.mxu0 0.0
      %1403 = vmatprep.mubr.f32.mxu0 0.0
      %1404 = vmatmul.mubr.f32.gmra.mrb[0].mxu0 %v1337
      %v1405 = vpop.f32.mrb[0].mxu0
      %v1406 = vadd.f32 0.0, %v1405
      %v1407 = vpop.f32.mrb[0].mxu0
      %v1408 = vadd.f32 0.0, %v1407
      %1409 = vdwg.mxu0
      %v1411 = vsel %vm1335, %v1322, 0
      %1413 = vmatprep.subr.mxu0 %v1321
      %1414 = vmatpush1.msra.mxu0 %v1320
      %1415 = vmatprep.subr.mxu0 0.0
      %1416 = vmatpush1.msra.mxu0 0.0
      %1417 = vmatprep.subr.mxu0 0.0
      %1418 = vmatpush1.msra.mxu0 0.0
      %1419 = vmatprep.subr.mxu0 0.0
      %1420 = vmatpush1.msra.mxu0 0.0
      %1421 = vmatprep.subr.mxu0 0.0
      %1422 = vmatpush1.msra.mxu0 0.0
      %1423 = vmatprep.subr.mxu0 0.0
      %1424 = vmatpush1.msra.mxu0 0.0
      %1425 = vmatprep.subr.mxu0 0.0
      %1426 = vmatpush1.msra.mxu0 0.0
      %1427 = vmatprep.subr.mxu0 0.0
      %1428 = vmatpush1.msra.mxu0 0.0
      %1429 = vmatprep.subr.mxu0 0.0
      %1430 = vmatpush1.msra.mxu0 0.0
      %1431 = vmatprep.subr.mxu0 0.0
      %1432 = vmatpush1.msra.mxu0 0.0
      %1433 = vmatprep.subr.mxu0 0.0
      %1434 = vmatpush1.msra.mxu0 0.0
      %1435 = vmatprep.subr.mxu0 0.0
      %1436 = vmatpush1.msra.mxu0 0.0
      %1437 = vmatprep.subr.mxu0 0.0
      %1438 = vmatpush1.msra.mxu0 0.0
      %1439 = vmatprep.subr.mxu0 0.0
      %1440 = vmatpush1.msra.mxu0 0.0
      %1441 = vmatprep.subr.mxu0 0.0
      %1442 = vmatpush1.msra.mxu0 0.0
      %1443 = vmatprep.subr.mxu0 0.0
      %1444 = vmatpush1.msra.mxu0 0.0
      %1445 = vmatprep.subr.mxu0 0.0
      %1446 = vmatpush1.msra.mxu0 0.0
      %1447 = vmatprep.subr.mxu0 0.0
      %1448 = vmatpush1.msra.mxu0 0.0
      %1449 = vmatprep.subr.mxu0 0.0
      %1450 = vmatpush1.msra.mxu0 0.0
      %1451 = vmatprep.subr.mxu0 0.0
      %1452 = vmatpush1.msra.mxu0 0.0
      %1453 = vmatprep.subr.mxu0 0.0
      %1454 = vmatpush1.msra.mxu0 0.0
      %1455 = vmatprep.subr.mxu0 0.0
      %1456 = vmatpush1.msra.mxu0 0.0
      %1457 = vmatprep.subr.mxu0 0.0
      %1458 = vmatpush1.msra.mxu0 0.0
      %1459 = vmatprep.subr.mxu0 0.0
      %1460 = vmatpush1.msra.mxu0 0.0
      %1461 = vmatprep.subr.mxu0 0.0
      %1462 = vmatpush1.msra.mxu0 0.0
      %1463 = vmatprep.subr.mxu0 0.0
      %1464 = vmatpush1.msra.mxu0 0.0
      %1465 = vmatprep.subr.mxu0 0.0
      %1466 = vmatpush1.msra.mxu0 0.0
      %1467 = vmatprep.subr.mxu0 0.0
      %1468 = vmatpush1.msra.mxu0 0.0
      %1469 = vmatprep.subr.mxu0 0.0
      %1470 = vmatpush1.msra.mxu0 0.0
      %1471 = vmatprep.subr.mxu0 0.0
      %1472 = vmatpush1.msra.mxu0 0.0
      %1473 = vmatprep.subr.mxu0 0.0
      %1474 = vmatpush1.msra.mxu0 0.0
      %1475 = vmatprep.subr.mxu0 0.0
      %1476 = vmatpush1.msra.mxu0 0.0
      %1477 = vmatprep.mubr.f32.mxu0 0.0
      %1478 = vmatmul.mubr.f32.gmra.mrb[0].mxu0 %v1411
      %v1479 = vpop.f32.mrb[0].mxu0
      %v1480 = vadd.f32 %v1406, %v1479
      %v1481 = vpop.f32.mrb[0].mxu0
      %v1482 = vadd.f32 %v1408, %v1481
      %1483 = vdwg.mxu0
      %s1484 = scalar_lea.vmem %s2, 16
      %v1485 = vld [vmem:[%s1484] sm:$0xff]
      %1486 = vrot.lane.b32.xlu0 %v1320, 126
      %v1487 = vpop.permute.xlu0 %1486
      %1488 = vrot.lane.b32.xlu0 %v1321, 126
      %v1489 = vpop.permute.xlu0 %1488
      %vm1490 = vcmask 1031168
      %v1491 = vsel %vm1490, %v1487, %v1489
      %v1495 = vsel %vm1335, %v1485, 0
      %1497 = vmatprep.subr.mxu0 %v1489
      %1498 = vmatpush1.msra.mxu0 %v1491
      %1499 = vmatprep.subr.mxu0 0.0
      %1500 = vmatpush1.msra.mxu0 0.0
      %1501 = vmatprep.subr.mxu0 0.0
      %1502 = vmatpush1.msra.mxu0 0.0
      %1503 = vmatprep.subr.mxu0 0.0
      %1504 = vmatpush1.msra.mxu0 0.0
      %1505 = vmatprep.subr.mxu0 0.0
      %1506 = vmatpush1.msra.mxu0 0.0
      %1507 = vmatprep.subr.mxu0 0.0
      %1508 = vmatpush1.msra.mxu0 0.0
      %1509 = vmatprep.subr.mxu0 0.0
      %1510 = vmatpush1.msra.mxu0 0.0
      %1511 = vmatprep.subr.mxu0 0.0
      %1512 = vmatpush1.msra.mxu0 0.0
      %1513 = vmatprep.subr.mxu0 0.0
      %1514 = vmatpush1.msra.mxu0 0.0
      %1515 = vmatprep.subr.mxu0 0.0
      %1516 = vmatpush1.msra.mxu0 0.0
      %1517 = vmatprep.subr.mxu0 0.0
      %1518 = vmatpush1.msra.mxu0 0.0
      %1519 = vmatprep.subr.mxu0 0.0
      %1520 = vmatpush1.msra.mxu0 0.0
      %1521 = vmatprep.subr.mxu0 0.0
      %1522 = vmatpush1.msra.mxu0 0.0
      %1523 = vmatprep.subr.mxu0 0.0
      %1524 = vmatpush1.msra.mxu0 0.0
      %1525 = vmatprep.subr.mxu0 0.0
      %1526 = vmatpush1.msra.mxu0 0.0
      %1527 = vmatprep.subr.mxu0 0.0
      %1528 = vmatpush1.msra.mxu0 0.0
      %1529 = vmatprep.subr.mxu0 0.0
      %1530 = vmatpush1.msra.mxu0 0.0
      %1531 = vmatprep.subr.mxu0 0.0
      %1532 = vmatpush1.msra.mxu0 0.0
      %1533 = vmatprep.subr.mxu0 0.0
      %1534 = vmatpush1.msra.mxu0 0.0
      %1535 = vmatprep.subr.mxu0 0.0
      %1536 = vmatpush1.msra.mxu0 0.0
      %1537 = vmatprep.subr.mxu0 0.0
      %1538 = vmatpush1.msra.mxu0 0.0
      %1539 = vmatprep.subr.mxu0 0.0
      %1540 = vmatpush1.msra.mxu0 0.0
      %1541 = vmatprep.subr.mxu0 0.0
      %1542 = vmatpush1.msra.mxu0 0.0
      %1543 = vmatprep.subr.mxu0 0.0
      %1544 = vmatpush1.msra.mxu0 0.0
      %1545 = vmatprep.subr.mxu0 0.0
      %1546 = vmatpush1.msra.mxu0 0.0
      %1547 = vmatprep.subr.mxu0 0.0
      %1548 = vmatpush1.msra.mxu0 0.0
      %1549 = vmatprep.subr.mxu0 0.0
      %1550 = vmatpush1.msra.mxu0 0.0
      %1551 = vmatprep.subr.mxu0 0.0
      %1552 = vmatpush1.msra.mxu0 0.0
      %1553 = vmatprep.subr.mxu0 0.0
      %1554 = vmatpush1.msra.mxu0 0.0
      %1555 = vmatprep.subr.mxu0 0.0
      %1556 = vmatpush1.msra.mxu0 0.0
      %1557 = vmatprep.subr.mxu0 0.0
      %1558 = vmatpush1.msra.mxu0 0.0
      %1559 = vmatprep.subr.mxu0 0.0
      %1560 = vmatpush1.msra.mxu0 0.0
      %1561 = vmatprep.mubr.f32.mxu0 0.0
      %1562 = vmatmul.mubr.f32.gmra.mrb[0].mxu0 %v1495
      %v1563 = vpop.f32.mrb[0].mxu0
      %v1564 = vadd.f32 0.0, %v1563
      %v1565 = vpop.f32.mrb[0].mxu0
      %v1566 = vadd.f32 0.0, %v1565
      %1567 = vdwg.mxu0
      %v1568 = vadd.f32 %v1480, %v1564
      %v1569 = vadd.f32 %v1482, %v1566
      %s1570 = scalar_lea.vmem %s2, 24
      %v1571 = vld [vmem:[%s1570] sm:$0xff]
      %1572 = vrot.lane.b32.xlu0 %v1320, 114
      %v1573 = vpop.permute.xlu0 %1572
      %1574 = vrot.lane.b32.xlu0 %v1321, 114
      %v1575 = vpop.permute.xlu0 %1574
      %v1576 = vsel %vm824, %v1573, %v1575
      %v1580 = vsel %vm1335, %v1571, 0
      %1582 = vmatprep.subr.mxu0 %v1575
      %1583 = vmatpush1.msra.mxu0 %v1576
      %1584 = vmatprep.subr.mxu0 0.0
      %1585 = vmatpush1.msra.mxu0 0.0
      %1586 = vmatprep.subr.mxu0 0.0
      %1587 = vmatpush1.msra.mxu0 0.0
      %1588 = vmatprep.subr.mxu0 0.0
      %1589 = vmatpush1.msra.mxu0 0.0
      %1590 = vmatprep.subr.mxu0 0.0
      %1591 = vmatpush1.msra.mxu0 0.0
      %1592 = vmatprep.subr.mxu0 0.0
      %1593 = vmatpush1.msra.mxu0 0.0
      %1594 = vmatprep.subr.mxu0 0.0
      %1595 = vmatpush1.msra.mxu0 0.0
      %1596 = vmatprep.subr.mxu0 0.0
      %1597 = vmatpush1.msra.mxu0 0.0
      %1598 = vmatprep.subr.mxu0 0.0
      %1599 = vmatpush1.msra.mxu0 0.0
      %1600 = vmatprep.subr.mxu0 0.0
      %1601 = vmatpush1.msra.mxu0 0.0
      %1602 = vmatprep.subr.mxu0 0.0
      %1603 = vmatpush1.msra.mxu0 0.0
      %1604 = vmatprep.subr.mxu0 0.0
      %1605 = vmatpush1.msra.mxu0 0.0
      %1606 = vmatprep.subr.mxu0 0.0
      %1607 = vmatpush1.msra.mxu0 0.0
      %1608 = vmatprep.subr.mxu0 0.0
      %1609 = vmatpush1.msra.mxu0 0.0
      %1610 = vmatprep.subr.mxu0 0.0
      %1611 = vmatpush1.msra.mxu0 0.0
      %1612 = vmatprep.subr.mxu0 0.0
      %1613 = vmatpush1.msra.mxu0 0.0
      %1614 = vmatprep.subr.mxu0 0.0
      %1615 = vmatpush1.msra.mxu0 0.0
      %1616 = vmatprep.subr.mxu0 0.0
      %1617 = vmatpush1.msra.mxu0 0.0
      %1618 = vmatprep.subr.mxu0 0.0
      %1619 = vmatpush1.msra.mxu0 0.0
      %1620 = vmatprep.subr.mxu0 0.0
      %1621 = vmatpush1.msra.mxu0 0.0
      %1622 = vmatprep.subr.mxu0 0.0
      %1623 = vmatpush1.msra.mxu0 0.0
      %1624 = vmatprep.subr.mxu0 0.0
      %1625 = vmatpush1.msra.mxu0 0.0
      %1626 = vmatprep.subr.mxu0 0.0
      %1627 = vmatpush1.msra.mxu0 0.0
      %1628 = vmatprep.subr.mxu0 0.0
      %1629 = vmatpush1.msra.mxu0 0.0
      %1630 = vmatprep.subr.mxu0 0.0
      %1631 = vmatpush1.msra.mxu0 0.0
      %1632 = vmatprep.subr.mxu0 0.0
      %1633 = vmatpush1.msra.mxu0 0.0
      %1634 = vmatprep.subr.mxu0 0.0
      %1635 = vmatpush1.msra.mxu0 0.0
      %1636 = vmatprep.subr.mxu0 0.0
      %1637 = vmatpush1.msra.mxu0 0.0
      %1638 = vmatprep.subr.mxu0 0.0
      %1639 = vmatpush1.msra.mxu0 0.0
      %1640 = vmatprep.subr.mxu0 0.0
      %1641 = vmatpush1.msra.mxu0 0.0
      %1642 = vmatprep.subr.mxu0 0.0
      %1643 = vmatpush1.msra.mxu0 0.0
      %1644 = vmatprep.subr.mxu0 0.0
      %1645 = vmatpush1.msra.mxu0 0.0
      %1646 = vmatprep.mubr.f32.mxu0 0.0
      %1647 = vmatmul.mubr.f32.gmra.mrb[0].mxu0 %v1580
      %v1648 = vpop.f32.mrb[0].mxu0
      %v1649 = vadd.f32 0.0, %v1648
      %v1650 = vpop.f32.mrb[0].mxu0
      %v1651 = vadd.f32 0.0, %v1650
      %1652 = vdwg.mxu0
      %v1653 = vadd.f32 %v1568, %v1649
      %v1654 = vadd.f32 %v1569, %v1651
      %s1655 = scalar_lea.vmem %s2, 32
      %v1656 = vld [vmem:[%s1655] sm:$0xff]
      %1657 = vrot.lane.b32.xlu0 %v1320, 113
      %v1658 = vpop.permute.xlu0 %1657
      %1659 = vrot.lane.b32.xlu0 %v1321, 113
      %v1660 = vpop.permute.xlu0 %1659
      %vm1661 = vcmask 924672
      %v1662 = vsel %vm1661, %v1658, %v1660
      %v1666 = vsel %vm1335, %v1656, 0
      %1668 = vmatprep.subr.mxu0 %v1660
      %1669 = vmatpush1.msra.mxu0 %v1662
      %1670 = vmatprep.subr.mxu0 0.0
      %1671 = vmatpush1.msra.mxu0 0.0
      %1672 = vmatprep.subr.mxu0 0.0
      %1673 = vmatpush1.msra.mxu0 0.0
      %1674 = vmatprep.subr.mxu0 0.0
      %1675 = vmatpush1.msra.mxu0 0.0
      %1676 = vmatprep.subr.mxu0 0.0
      %1677 = vmatpush1.msra.mxu0 0.0
      %1678 = vmatprep.subr.mxu0 0.0
      %1679 = vmatpush1.msra.mxu0 0.0
      %1680 = vmatprep.subr.mxu0 0.0
      %1681 = vmatpush1.msra.mxu0 0.0
      %1682 = vmatprep.subr.mxu0 0.0
      %1683 = vmatpush1.msra.mxu0 0.0
      %1684 = vmatprep.subr.mxu0 0.0
      %1685 = vmatpush1.msra.mxu0 0.0
      %1686 = vmatprep.subr.mxu0 0.0
      %1687 = vmatpush1.msra.mxu0 0.0
      %1688 = vmatprep.subr.mxu0 0.0
      %1689 = vmatpush1.msra.mxu0 0.0
      %1690 = vmatprep.subr.mxu0 0.0
      %1691 = vmatpush1.msra.mxu0 0.0
      %1692 = vmatprep.subr.mxu0 0.0
      %1693 = vmatpush1.msra.mxu0 0.0
      %1694 = vmatprep.subr.mxu0 0.0
      %1695 = vmatpush1.msra.mxu0 0.0
      %1696 = vmatprep.subr.mxu0 0.0
      %1697 = vmatpush1.msra.mxu0 0.0
      %1698 = vmatprep.subr.mxu0 0.0
      %1699 = vmatpush1.msra.mxu0 0.0
      %1700 = vmatprep.subr.mxu0 0.0
      %1701 = vmatpush1.msra.mxu0 0.0
      %1702 = vmatprep.subr.mxu0 0.0
      %1703 = vmatpush1.msra.mxu0 0.0
      %1704 = vmatprep.subr.mxu0 0.0
      %1705 = vmatpush1.msra.mxu0 0.0
      %1706 = vmatprep.subr.mxu0 0.0
      %1707 = vmatpush1.msra.mxu0 0.0
      %1708 = vmatprep.subr.mxu0 0.0
      %1709 = vmatpush1.msra.mxu0 0.0
      %1710 = vmatprep.subr.mxu0 0.0
      %1711 = vmatpush1.msra.mxu0 0.0
      %1712 = vmatprep.subr.mxu0 0.0
      %1713 = vmatpush1.msra.mxu0 0.0
      %1714 = vmatprep.subr.mxu0 0.0
      %1715 = vmatpush1.msra.mxu0 0.0
      %1716 = vmatprep.subr.mxu0 0.0
      %1717 = vmatpush1.msra.mxu0 0.0
      %1718 = vmatprep.subr.mxu0 0.0
      %1719 = vmatpush1.msra.mxu0 0.0
      %1720 = vmatprep.subr.mxu0 0.0
      %1721 = vmatpush1.msra.mxu0 0.0
      %1722 = vmatprep.subr.mxu0 0.0
      %1723 = vmatpush1.msra.mxu0 0.0
      %1724 = vmatprep.subr.mxu0 0.0
      %1725 = vmatpush1.msra.mxu0 0.0
      %1726 = vmatprep.subr.mxu0 0.0
      %1727 = vmatpush1.msra.mxu0 0.0
      %1728 = vmatprep.subr.mxu0 0.0
      %1729 = vmatpush1.msra.mxu0 0.0
      %1730 = vmatprep.subr.mxu0 0.0
      %1731 = vmatpush1.msra.mxu0 0.0
      %1732 = vmatprep.mubr.f32.mxu0 0.0
      %1733 = vmatmul.mubr.f32.gmra.mrb[0].mxu0 %v1666
      %v1734 = vpop.f32.mrb[0].mxu0
      %v1735 = vadd.f32 0.0, %v1734
      %v1736 = vpop.f32.mrb[0].mxu0
      %v1737 = vadd.f32 0.0, %v1736
      %1738 = vdwg.mxu0
      %v1739 = vadd.f32 %v1653, %v1735
      %v1740 = vadd.f32 %v1654, %v1737
      %s1741 = scalar_lea.vmem %s2, 40
      %v1742 = vld [vmem:[%s1741] sm:$0xff]
      %1743 = vrot.lane.b32.xlu0 %v1320, 112
      %v1744 = vpop.permute.xlu0 %1743
      %1745 = vrot.lane.b32.xlu0 %v1321, 112
      %v1746 = vpop.permute.xlu0 %1745
      %vm1747 = vcmask 916480
      %v1748 = vsel %vm1747, %v1744, %v1746
      %v1752 = vsel %vm1335, %v1742, 0
      %1754 = vmatprep.subr.mxu0 %v1746
      %1755 = vmatpush1.msra.mxu0 %v1748
      %1756 = vmatprep.subr.mxu0 0.0
      %1757 = vmatpush1.msra.mxu0 0.0
      %1758 = vmatprep.subr.mxu0 0.0
      %1759 = vmatpush1.msra.mxu0 0.0
      %1760 = vmatprep.subr.mxu0 0.0
      %1761 = vmatpush1.msra.mxu0 0.0
      %1762 = vmatprep.subr.mxu0 0.0
      %1763 = vmatpush1.msra.mxu0 0.0
      %1764 = vmatprep.subr.mxu0 0.0
      %1765 = vmatpush1.msra.mxu0 0.0
      %1766 = vmatprep.subr.mxu0 0.0
      %1767 = vmatpush1.msra.mxu0 0.0
      %1768 = vmatprep.subr.mxu0 0.0
      %1769 = vmatpush1.msra.mxu0 0.0
      %1770 = vmatprep.subr.mxu0 0.0
      %1771 = vmatpush1.msra.mxu0 0.0
      %1772 = vmatprep.subr.mxu0 0.0
      %1773 = vmatpush1.msra.mxu0 0.0
      %1774 = vmatprep.subr.mxu0 0.0
      %1775 = vmatpush1.msra.mxu0 0.0
      %1776 = vmatprep.subr.mxu0 0.0
      %1777 = vmatpush1.msra.mxu0 0.0
      %1778 = vmatprep.subr.mxu0 0.0
      %1779 = vmatpush1.msra.mxu0 0.0
      %1780 = vmatprep.subr.mxu0 0.0
      %1781 = vmatpush1.msra.mxu0 0.0
      %1782 = vmatprep.subr.mxu0 0.0
      %1783 = vmatpush1.msra.mxu0 0.0
      %1784 = vmatprep.subr.mxu0 0.0
      %1785 = vmatpush1.msra.mxu0 0.0
      %1786 = vmatprep.subr.mxu0 0.0
      %1787 = vmatpush1.msra.mxu0 0.0
      %1788 = vmatprep.subr.mxu0 0.0
      %1789 = vmatpush1.msra.mxu0 0.0
      %1790 = vmatprep.subr.mxu0 0.0
      %1791 = vmatpush1.msra.mxu0 0.0
      %1792 = vmatprep.subr.mxu0 0.0
      %1793 = vmatpush1.msra.mxu0 0.0
      %1794 = vmatprep.subr.mxu0 0.0
      %1795 = vmatpush1.msra.mxu0 0.0
      %1796 = vmatprep.subr.mxu0 0.0
      %1797 = vmatpush1.msra.mxu0 0.0
      %1798 = vmatprep.subr.mxu0 0.0
      %1799 = vmatpush1.msra.mxu0 0.0
      %1800 = vmatprep.subr.mxu0 0.0
      %1801 = vmatpush1.msra.mxu0 0.0
      %1802 = vmatprep.subr.mxu0 0.0
      %1803 = vmatpush1.msra.mxu0 0.0
      %1804 = vmatprep.subr.mxu0 0.0
      %1805 = vmatpush1.msra.mxu0 0.0
      %1806 = vmatprep.subr.mxu0 0.0
      %1807 = vmatpush1.msra.mxu0 0.0
      %1808 = vmatprep.subr.mxu0 0.0
      %1809 = vmatpush1.msra.mxu0 0.0
      %1810 = vmatprep.subr.mxu0 0.0
      %1811 = vmatpush1.msra.mxu0 0.0
      %1812 = vmatprep.subr.mxu0 0.0
      %1813 = vmatpush1.msra.mxu0 0.0
      %1814 = vmatprep.subr.mxu0 0.0
      %1815 = vmatpush1.msra.mxu0 0.0
      %1816 = vmatprep.subr.mxu0 0.0
      %1817 = vmatpush1.msra.mxu0 0.0
      %1818 = vmatprep.mubr.f32.mxu0 0.0
      %1819 = vmatmul.mubr.f32.gmra.mrb[0].mxu0 %v1752
      %v1820 = vpop.f32.mrb[0].mxu0
      %v1821 = vadd.f32 0.0, %v1820
      %v1822 = vpop.f32.mrb[0].mxu0
      %v1823 = vadd.f32 0.0, %v1822
      %1824 = vdwg.mxu0
      %v1825 = vadd.f32 %v1739, %v1821
      %v1826 = vadd.f32 %v1740, %v1823
      %s1827 = scalar_lea.vmem %s2, 48
      %v1828 = vld [vmem:[%s1827] sm:$0xff]
      %1829 = vrot.lane.b32.xlu0 %v1320, 100
      %v1830 = vpop.permute.xlu0 %1829
      %1831 = vrot.lane.b32.xlu0 %v1321, 100
      %v1832 = vpop.permute.xlu0 %1831
      %vm1833 = vcmask 818176
      %v1834 = vsel %vm1833, %v1830, %v1832
      %v1838 = vsel %vm1335, %v1828, 0
      %1840 = vmatprep.subr.mxu0 %v1832
      %1841 = vmatpush1.msra.mxu0 %v1834
      %1842 = vmatprep.subr.mxu0 0.0
      %1843 = vmatpush1.msra.mxu0 0.0
      %1844 = vmatprep.subr.mxu0 0.0
      %1845 = vmatpush1.msra.mxu0 0.0
      %1846 = vmatprep.subr.mxu0 0.0
      %1847 = vmatpush1.msra.mxu0 0.0
      %1848 = vmatprep.subr.mxu0 0.0
      %1849 = vmatpush1.msra.mxu0 0.0
      %1850 = vmatprep.subr.mxu0 0.0
      %1851 = vmatpush1.msra.mxu0 0.0
      %1852 = vmatprep.subr.mxu0 0.0
      %1853 = vmatpush1.msra.mxu0 0.0
      %1854 = vmatprep.subr.mxu0 0.0
      %1855 = vmatpush1.msra.mxu0 0.0
      %1856 = vmatprep.subr.mxu0 0.0
      %1857 = vmatpush1.msra.mxu0 0.0
      %1858 = vmatprep.subr.mxu0 0.0
      %1859 = vmatpush1.msra.mxu0 0.0
      %1860 = vmatprep.subr.mxu0 0.0
      %1861 = vmatpush1.msra.mxu0 0.0
      %1862 = vmatprep.subr.mxu0 0.0
      %1863 = vmatpush1.msra.mxu0 0.0
      %1864 = vmatprep.subr.mxu0 0.0
      %1865 = vmatpush1.msra.mxu0 0.0
      %1866 = vmatprep.subr.mxu0 0.0
      %1867 = vmatpush1.msra.mxu0 0.0
      %1868 = vmatprep.subr.mxu0 0.0
      %1869 = vmatpush1.msra.mxu0 0.0
      %1870 = vmatprep.subr.mxu0 0.0
      %1871 = vmatpush1.msra.mxu0 0.0
      %1872 = vmatprep.subr.mxu0 0.0
      %1873 = vmatpush1.msra.mxu0 0.0
      %1874 = vmatprep.subr.mxu0 0.0
      %1875 = vmatpush1.msra.mxu0 0.0
      %1876 = vmatprep.subr.mxu0 0.0
      %1877 = vmatpush1.msra.mxu0 0.0
      %1878 = vmatprep.subr.mxu0 0.0
      %1879 = vmatpush1.msra.mxu0 0.0
      %1880 = vmatprep.subr.mxu0 0.0
      %1881 = vmatpush1.msra.mxu0 0.0
      %1882 = vmatprep.subr.mxu0 0.0
      %1883 = vmatpush1.msra.mxu0 0.0
      %1884 = vmatprep.subr.mxu0 0.0
      %1885 = vmatpush1.msra.mxu0 0.0
      %1886 = vmatprep.subr.mxu0 0.0
      %1887 = vmatpush1.msra.mxu0 0.0
      %1888 = vmatprep.subr.mxu0 0.0
      %1889 = vmatpush1.msra.mxu0 0.0
      %1890 = vmatprep.subr.mxu0 0.0
      %1891 = vmatpush1.msra.mxu0 0.0
      %1892 = vmatprep.subr.mxu0 0.0
      %1893 = vmatpush1.msra.mxu0 0.0
      %1894 = vmatprep.subr.mxu0 0.0
      %1895 = vmatpush1.msra.mxu0 0.0
      %1896 = vmatprep.subr.mxu0 0.0
      %1897 = vmatpush1.msra.mxu0 0.0
      %1898 = vmatprep.subr.mxu0 0.0
      %1899 = vmatpush1.msra.mxu0 0.0
      %1900 = vmatprep.subr.mxu0 0.0
      %1901 = vmatpush1.msra.mxu0 0.0
      %1902 = vmatprep.subr.mxu0 0.0
      %1903 = vmatpush1.msra.mxu0 0.0
      %1904 = vmatprep.mubr.f32.mxu0 0.0
      %1905 = vmatmul.mubr.f32.gmra.mrb[0].mxu0 %v1838
      %v1906 = vpop.f32.mrb[0].mxu0
      %v1907 = vadd.f32 0.0, %v1906
      %v1908 = vpop.f32.mrb[0].mxu0
      %v1909 = vadd.f32 0.0, %v1908
      %1910 = vdwg.mxu0
      %v1911 = vadd.f32 %v1825, %v1907
      %v1912 = vadd.f32 %v1826, %v1909
      %s1913 = scalar_lea.vmem %s2, 56
      %v1914 = vld [vmem:[%s1913] sm:$0xff]
      %1915 = vrot.lane.b32.xlu0 %v1320, 99
      %v1916 = vpop.permute.xlu0 %1915
      %1917 = vrot.lane.b32.xlu0 %v1321, 99
      %v1918 = vpop.permute.xlu0 %1917
      %vm1919 = vcmask 809984
      %v1920 = vsel %vm1919, %v1916, %v1918
      %v1924 = vsel %vm1335, %v1914, 0
      %1926 = vmatprep.subr.mxu0 %v1918
      %1927 = vmatpush1.msra.mxu0 %v1920
      %1928 = vmatprep.subr.mxu0 0.0
      %1929 = vmatpush1.msra.mxu0 0.0
      %1930 = vmatprep.subr.mxu0 0.0
      %1931 = vmatpush1.msra.mxu0 0.0
      %1932 = vmatprep.subr.mxu0 0.0
      %1933 = vmatpush1.msra.mxu0 0.0
      %1934 = vmatprep.subr.mxu0 0.0
      %1935 = vmatpush1.msra.mxu0 0.0
      %1936 = vmatprep.subr.mxu0 0.0
      %1937 = vmatpush1.msra.mxu0 0.0
      %1938 = vmatprep.subr.mxu0 0.0
      %1939 = vmatpush1.msra.mxu0 0.0
      %1940 = vmatprep.subr.mxu0 0.0
      %1941 = vmatpush1.msra.mxu0 0.0
      %1942 = vmatprep.subr.mxu0 0.0
      %1943 = vmatpush1.msra.mxu0 0.0
      %1944 = vmatprep.subr.mxu0 0.0
      %1945 = vmatpush1.msra.mxu0 0.0
      %1946 = vmatprep.subr.mxu0 0.0
      %1947 = vmatpush1.msra.mxu0 0.0
      %1948 = vmatprep.subr.mxu0 0.0
      %1949 = vmatpush1.msra.mxu0 0.0
      %1950 = vmatprep.subr.mxu0 0.0
      %1951 = vmatpush1.msra.mxu0 0.0
      %1952 = vmatprep.subr.mxu0 0.0
      %1953 = vmatpush1.msra.mxu0 0.0
      %1954 = vmatprep.subr.mxu0 0.0
      %1955 = vmatpush1.msra.mxu0 0.0
      %1956 = vmatprep.subr.mxu0 0.0
      %1957 = vmatpush1.msra.mxu0 0.0
      %1958 = vmatprep.subr.mxu0 0.0
      %1959 = vmatpush1.msra.mxu0 0.0
      %1960 = vmatprep.subr.mxu0 0.0
      %1961 = vmatpush1.msra.mxu0 0.0
      %1962 = vmatprep.subr.mxu0 0.0
      %1963 = vmatpush1.msra.mxu0 0.0
      %1964 = vmatprep.subr.mxu0 0.0
      %1965 = vmatpush1.msra.mxu0 0.0
      %1966 = vmatprep.subr.mxu0 0.0
      %1967 = vmatpush1.msra.mxu0 0.0
      %1968 = vmatprep.subr.mxu0 0.0
      %1969 = vmatpush1.msra.mxu0 0.0
      %1970 = vmatprep.subr.mxu0 0.0
      %1971 = vmatpush1.msra.mxu0 0.0
      %1972 = vmatprep.subr.mxu0 0.0
      %1973 = vmatpush1.msra.mxu0 0.0
      %1974 = vmatprep.subr.mxu0 0.0
      %1975 = vmatpush1.msra.mxu0 0.0
      %1976 = vmatprep.subr.mxu0 0.0
      %1977 = vmatpush1.msra.mxu0 0.0
      %1978 = vmatprep.subr.mxu0 0.0
      %1979 = vmatpush1.msra.mxu0 0.0
      %1980 = vmatprep.subr.mxu0 0.0
      %1981 = vmatpush1.msra.mxu0 0.0
      %1982 = vmatprep.subr.mxu0 0.0
      %1983 = vmatpush1.msra.mxu0 0.0
      %1984 = vmatprep.subr.mxu0 0.0
      %1985 = vmatpush1.msra.mxu0 0.0
      %1986 = vmatprep.subr.mxu0 0.0
      %1987 = vmatpush1.msra.mxu0 0.0
      %1988 = vmatprep.subr.mxu0 0.0
      %1989 = vmatpush1.msra.mxu0 0.0
      %1990 = vmatprep.mubr.f32.mxu0 0.0
      %1991 = vmatmul.mubr.f32.gmra.mrb[0].mxu0 %v1924
      %v1992 = vpop.f32.mrb[0].mxu0
      %v1993 = vadd.f32 0.0, %v1992
      %v1994 = vpop.f32.mrb[0].mxu0
      %v1995 = vadd.f32 0.0, %v1994
      %1996 = vdwg.mxu0
      %v1997 = vadd.f32 %v1911, %v1993
      %v1998 = vadd.f32 %v1912, %v1995
      %s1999 = scalar_lea.vmem %s2, 64
      %v2000 = vld [vmem:[%s1999] sm:$0xff]
      %2001 = vrot.lane.b32.xlu0 %v1320, 98
      %v2002 = vpop.permute.xlu0 %2001
      %2003 = vrot.lane.b32.xlu0 %v1321, 98
      %v2004 = vpop.permute.xlu0 %2003
      %vm2005 = vcmask 801792
      %v2006 = vsel %vm2005, %v2002, %v2004
      %v2010 = vsel %vm1335, %v2000, 0
      %2012 = vmatprep.subr.mxu0 %v2004
      %2013 = vmatpush1.msra.mxu0 %v2006
      %2014 = vmatprep.subr.mxu0 0.0
      %2015 = vmatpush1.msra.mxu0 0.0
      %2016 = vmatprep.subr.mxu0 0.0
      %2017 = vmatpush1.msra.mxu0 0.0
      %2018 = vmatprep.subr.mxu0 0.0
      %2019 = vmatpush1.msra.mxu0 0.0
      %2020 = vmatprep.subr.mxu0 0.0
      %2021 = vmatpush1.msra.mxu0 0.0
      %2022 = vmatprep.subr.mxu0 0.0
      %2023 = vmatpush1.msra.mxu0 0.0
      %2024 = vmatprep.subr.mxu0 0.0
      %2025 = vmatpush1.msra.mxu0 0.0
      %2026 = vmatprep.subr.mxu0 0.0
      %2027 = vmatpush1.msra.mxu0 0.0
      %2028 = vmatprep.subr.mxu0 0.0
      %2029 = vmatpush1.msra.mxu0 0.0
      %2030 = vmatprep.subr.mxu0 0.0
      %2031 = vmatpush1.msra.mxu0 0.0
      %2032 = vmatprep.subr.mxu0 0.0
      %2033 = vmatpush1.msra.mxu0 0.0
      %2034 = vmatprep.subr.mxu0 0.0
      %2035 = vmatpush1.msra.mxu0 0.0
      %2036 = vmatprep.subr.mxu0 0.0
      %2037 = vmatpush1.msra.mxu0 0.0
      %2038 = vmatprep.subr.mxu0 0.0
      %2039 = vmatpush1.msra.mxu0 0.0
      %2040 = vmatprep.subr.mxu0 0.0
      %2041 = vmatpush1.msra.mxu0 0.0
      %2042 = vmatprep.subr.mxu0 0.0
      %2043 = vmatpush1.msra.mxu0 0.0
      %2044 = vmatprep.subr.mxu0 0.0
      %2045 = vmatpush1.msra.mxu0 0.0
      %2046 = vmatprep.subr.mxu0 0.0
      %2047 = vmatpush1.msra.mxu0 0.0
      %2048 = vmatprep.subr.mxu0 0.0
      %2049 = vmatpush1.msra.mxu0 0.0
      %2050 = vmatprep.subr.mxu0 0.0
      %2051 = vmatpush1.msra.mxu0 0.0
      %2052 = vmatprep.subr.mxu0 0.0
      %2053 = vmatpush1.msra.mxu0 0.0
      %2054 = vmatprep.subr.mxu0 0.0
      %2055 = vmatpush1.msra.mxu0 0.0
      %2056 = vmatprep.subr.mxu0 0.0
      %2057 = vmatpush1.msra.mxu0 0.0
      %2058 = vmatprep.subr.mxu0 0.0
      %2059 = vmatpush1.msra.mxu0 0.0
      %2060 = vmatprep.subr.mxu0 0.0
      %2061 = vmatpush1.msra.mxu0 0.0
      %2062 = vmatprep.subr.mxu0 0.0
      %2063 = vmatpush1.msra.mxu0 0.0
      %2064 = vmatprep.subr.mxu0 0.0
      %2065 = vmatpush1.msra.mxu0 0.0
      %2066 = vmatprep.subr.mxu0 0.0
      %2067 = vmatpush1.msra.mxu0 0.0
      %2068 = vmatprep.subr.mxu0 0.0
      %2069 = vmatpush1.msra.mxu0 0.0
      %2070 = vmatprep.subr.mxu0 0.0
      %2071 = vmatpush1.msra.mxu0 0.0
      %2072 = vmatprep.subr.mxu0 0.0
      %2073 = vmatpush1.msra.mxu0 0.0
      %2074 = vmatprep.subr.mxu0 0.0
      %2075 = vmatpush1.msra.mxu0 0.0
      %2076 = vmatprep.mubr.f32.mxu0 0.0
      %2077 = vmatmul.mubr.f32.gmra.mrb[0].mxu0 %v2010
      %v2078 = vpop.f32.mrb[0].mxu0
      %v2079 = vadd.f32 0.0, %v2078
      %v2080 = vpop.f32.mrb[0].mxu0
      %v2081 = vadd.f32 0.0, %v2080
      %2082 = vdwg.mxu0
      %v2083 = vadd.f32 %v1997, %v2079
      %v2084 = vadd.f32 %v1998, %v2081
      %v2085 = vld [vmem:[%s4] sm:$0x3]
      %v2087 = vlaneseq
      %v2088 = vshrl.u32 %v2087, 7
      %v2089 = vsub.s32 0, %v2088
      %v2090 = vrot.slane %v2085, %v2089
      %v2091 = vlaneseq
      %v2092 = vshrl.u32 %v2091, 7
      %v2093 = vsub.s32 1, %v2092
      %v2094 = vrot.slane %v2085, %v2093
      %v2097 = vmul.f32 %v2083, %v2090
      %v2098 = vmul.f32 %v2084, %v2094
      %vm2099 = vcmask 310272
      %v2100 = vsel %vm2099, %v2098, 0.0
      %v2101 = vadd.f32 %v2097, %v2100
      %2102 = vadd.xlane.f32.xlu0 %v2101
      %v2103 = vpop.xlane.xlu0 %2102
      %v2104 = vmul.f32 %v2103, 0.0069444445
      %v2105 = vmul.f32 %v2083, %v2083
      %v2106 = vmul.f32 %v2084, %v2084
      %v2107 = vmul.f32 %v2105, %v2090
      %v2108 = vmul.f32 %v2106, %v2094
      %v2109 = vsel %vm2099, %v2108, 0.0
      %v2110 = vadd.f32 %v2107, %v2109
      %2111 = vadd.xlane.f32.xlu0 %v2110
      %v2112 = vpop.xlane.xlu0 %2111
      %v2113 = vmul.f32 %v2112, 0.0069444445
      %v2114 = vmul.f32 %v2104, %v2104
      %v2115 = vsub.f32 %v2113, %v2114
      %v2116 = vmax.f32 %v2115, 0.0
      %v2117 = vsub.f32 %v2083, %v2104
      %v2118 = vsub.f32 %v2084, %v2104
      %v2119 = vadd.f32 %v2116, 1e-05
      %v2120 = vrsqrt.pop %v2119
      %v2121 = vmul.f32 %v2117, %v2120
      %v2122 = vmul.f32 %v2118, %v2120
      %v2123 = vmax.f32 %v2121, 0.0
      %v2124 = vmax.f32 %v2122, 0.0
      %2125 = vst [vmem:[%s221] sm:$0xff] %v2123
      %2126 = vst.msk [vmem:[%s221 + $0x8] sm:$0xff] %vm2099, %v2124
      %vm2127 = vcmask 326960
      %2128 = vst.msk [vmem:[%s221 + $0x8] sm:$0xff] %vm2127, 0.0
      %p2129 = scmp.lt.s32.totalorder %s16, 1
      %s2130 = scalar_select %p2129, %s16, 1
      %s2131 = smul.addr %s2130, 2
      %s2132 = smul.addr %s2131, 8
      %s2133 = scalar_lea.vmem %s5, %s2132
      // Predicated region
      $region41: #{down_conv_forward.1} parent=39 // pred_check
        %p2134 = pneg %p144
      $region42: #{down_conv_forward.1} parent=39 // pred_check_branch
        %2136 = sbr.rel (%p2134) target = $region44
      $region43: #{down_conv_forward.1} parent=39 // pred_region
        _
      $region44: #{down_conv_forward.1} parent=39 // pred_fallthru
        _
    $region40: #{down_conv_forward.1} parent=5 // pred_fallthru
      _
    %p2137 = scmp.le.s32.totalorder 2, %s11
    // Predicated region
    $region45: #{down_conv_forward.1} parent=5 // pred_check
      %p2138 = pneg %p2137
    $region46: #{down_conv_forward.1} parent=5 // pred_check_branch
      %2140 = sbr.rel (%p2138) target = $region48
    $region47: #{down_conv_forward.1} parent=5 // pred_region
      %s2141 = ssub.s32 %s11, 2
      // Predicated region
      $region49: #{down_conv_forward.1} parent=47 // pred_check
        %p2142 = pneg %p150
      $region50: #{down_conv_forward.1} parent=47 // pred_check_branch
        %2144 = sbr.rel (%p2142) target = $region52
      $region51: #{down_conv_forward.1} parent=47 // pred_region
        %p2145 = scmp.lt.s32.totalorder %s17, 1
        %s2146 = scalar_select %p2145, %s17, 1
        %s2147 = smul.addr %s2146, 2
        %s2148 = smul.addr %s2147, 8
        %s2149 = scalar_lea.vmem %s5, %s2148
      $region52: #{down_conv_forward.1} parent=47 // pred_fallthru
        _
    $region48: #{down_conv_forward.1} parent=5 // pred_fallthru
      _
  $region6: #{down_conv_forward.1} parent=0 // loop_footer
    %s15 = sadd.s32 1, %s11
  $region7: #{down_conv_forward.1} parent=0 // loop_footer_branch
    %10 = sbr.rel target = $region3
  $region8: #{down_conv_forward.1} parent=0 // loop_exit
    _

</llo_original>
